<compile_context>
chip_gen: v7x
topology: tpu7x:2x2x1
jax: 0.10.0
libtpu: 0.0.40
codegen_flags: <defaults>
</compile_context>

<pallas_src>
import functools

import jax
import jax.numpy as jnp
from jax import lax
from jax.experimental import pallas as pl
from jax.experimental.pallas import tpu as pltpu


# ---------------------------------------------------------------------------
# Fused Pallas kernel (one batch element per grid step)
# ---------------------------------------------------------------------------
def _fused_unet_kernel(x_ref, w1_ref, b1_ref, w2_ref, b2_ref,
                       wdu_ref, wds_ref, bd_ref, wh_ref, bh_ref,
                       s_ref, u_ref, o_ref, *, H, W):
    f32 = jnp.float32
    bf16 = jnp.bfloat16
    H2, W2 = H // 2, W // 2

    def conv3x3_acc(x, w9_ref, h, w):
        """3x3 'same' conv accumulation in (channels, h*w) layout.

        x:      (Cin, h*w) bf16 activation, spatial row-major on the lane axis.
        w9_ref: (9, Cout, Cin) bf16 weights, tap-major (dy, dx).
        Returns the f32 (Cout, h*w) accumulator (no bias / activation).
        """
        cin = x.shape[0]
        hw = h * w
        cout = w9_ref.shape[1]
        # Zero-extend the flat rows by (w + 1) on both sides: row-out-of-bounds
        # taps then read zeros automatically; column wrap-around is masked.
        zpad = jnp.zeros((cin, w + 1), x.dtype)
        xp = jnp.concatenate([zpad, x, zpad], axis=1)         # (Cin, hw + 2w + 2)
        col = lax.broadcasted_iota(jnp.int32, (1, hw), 1) % w  # output column id

        acc = jnp.zeros((cout, hw), f32)
        k = 0
        for dy in (-1, 0, 1):
            for dx in (-1, 0, 1):
                off = (w + 1) + dy * w + dx                   # static lane shift
                t = xp[:, off:off + hw]
                if dx == -1:                                   # left edge wraps
                    t = jnp.where(col >= 1, t, jnp.zeros_like(t))
                elif dx == 1:                                  # right edge wraps
                    t = jnp.where(col < w - 1, t, jnp.zeros_like(t))
                acc = acc + jnp.dot(w9_ref[k], t, preferred_element_type=f32)
                k += 1
        return acc

    x = x_ref[0]                                               # (Cin, H*W) bf16

    # --- enc1: conv3x3 + ReLU --------------------------------------------
    e1 = jnp.maximum(conv3x3_acc(x, w1_ref, H, W) + b1_ref[...], 0.0).astype(bf16)

    # --- 2x2 max pool, stride 2 -------------------------------------------
    c1 = e1.shape[0]
    right = jnp.concatenate([e1[:, 1:], jnp.zeros((c1, 1), bf16)], axis=1)
    m1 = jnp.maximum(e1, right)                                # max with right nbr
    down = jnp.concatenate([m1[:, W:], jnp.zeros((c1, W), bf16)], axis=1)
    m2 = jnp.maximum(m1, down)                                 # 2x2 window max
    # select even (row, col) positions via 0/1 matmul S: (H*W, H2*W2)
    p1 = jnp.dot(m2, s_ref[...], preferred_element_type=f32).astype(bf16)

    # --- enc2: conv3x3 + ReLU on pooled map --------------------------------
    e2 = jnp.maximum(conv3x3_acc(p1, w2_ref, H2, W2) + b2_ref[...], 0.0).astype(bf16)

    # --- nearest 2x upsample via 0/1 matmul U: (H2*W2, H*W) ----------------
    up = jnp.dot(e2, u_ref[...], preferred_element_type=f32).astype(bf16)

    # --- decoder conv over concat([up, e1]) without materializing concat ---
    accd = (conv3x3_acc(up, wdu_ref, H, W)
            + conv3x3_acc(e1, wds_ref, H, W)
            + bd_ref[...])
    d = jnp.maximum(accd, 0.0).astype(bf16)                    # (h, H*W)

    # --- 1x1 classification head fused as epilogue -------------------------
    out = jnp.dot(wh_ref[...], d, preferred_element_type=f32) + bh_ref[...]
    o_ref[0] = out.astype(o_ref.dtype)                         # (classes, H*W)


# ---------------------------------------------------------------------------
# Wrapper: weight layout prep + pallas_call plumbing
# ---------------------------------------------------------------------------
@jax.jit
def custom_model_forward(x_nchw, params):
    N, Cin, H, W = x_nchw.shape
    assert H % 2 == 0 and W % 2 == 0
    HW, H2, W2 = H * W, H // 2, W // 2
    HW2 = H2 * W2
    h = params["enc1_b"].shape[0]
    classes = params["head_b"].shape[0]
    bf16, f32 = jnp.bfloat16, jnp.float32

    def tap_major(w):  # (3, 3, ci, co) -> (9, co, ci), tap-major, bf16 MXU operand
        kh, kw, ci, co = w.shape
        return jnp.transpose(w, (0, 1, 3, 2)).reshape(kh * kw, co, ci).astype(bf16)

    w1 = tap_major(params["enc1_w"])                       # (9, h,  Cin)
    w2 = tap_major(params["enc2_w"])                       # (9, 2h, h)
    wdu = tap_major(params["dec_w"][:, :, :2 * h, :])      # up-path half
    wds = tap_major(params["dec_w"][:, :, 2 * h:, :])      # skip-path half
    wh = jnp.transpose(params["head_w"]).astype(bf16)      # (classes, h)

    b1 = params["enc1_b"].reshape(h, 1).astype(f32)
    b2 = params["enc2_b"].reshape(2 * h, 1).astype(f32)
    bd = params["dec_b"].reshape(h, 1).astype(f32)
    bh = params["head_b"].reshape(classes, 1).astype(f32)

    # 0/1 matrices: S selects the top-left of every 2x2 block (pool output
    # positions); U replicates each coarse pixel into its 2x2 block (upsample).
    l = jnp.arange(HW)
    m = (l // W // 2) * W2 + (l % W) // 2
    U = jnp.zeros((HW2, HW), f32).at[m, l].set(1.0).astype(bf16)
    sel = (jnp.arange(HW2) // W2) * 2 * W + (jnp.arange(HW2) % W2) * 2
    S = jnp.zeros((HW, HW2), f32).at[sel, jnp.arange(HW2)].set(1.0).astype(bf16)

    # NCHW -> (N, C, H*W): spatial on the lane axis; no transpose needed.
    x_flat = x_nchw.reshape(N, Cin, HW).astype(bf16)

    kernel = functools.partial(_fused_unet_kernel, H=H, W=W)
    out_flat = pl.pallas_call(
        kernel,
        out_shape=jax.ShapeDtypeStruct((N, classes, HW), f32),
        grid=(N,),
        in_specs=[
            pl.BlockSpec((1, Cin, HW), lambda n: (n, 0, 0)),        # x
            pl.BlockSpec((9, h, Cin), lambda n: (0, 0, 0)),         # enc1 w
            pl.BlockSpec((h, 1), lambda n: (0, 0)),                 # enc1 b
            pl.BlockSpec((9, 2 * h, h), lambda n: (0, 0, 0)),       # enc2 w
            pl.BlockSpec((2 * h, 1), lambda n: (0, 0)),             # enc2 b
            pl.BlockSpec((9, h, 2 * h), lambda n: (0, 0, 0)),       # dec w (up)
            pl.BlockSpec((9, h, h), lambda n: (0, 0, 0)),           # dec w (skip)
            pl.BlockSpec((h, 1), lambda n: (0, 0)),                 # dec b
            pl.BlockSpec((classes, h), lambda n: (0, 0)),           # head w
            pl.BlockSpec((classes, 1), lambda n: (0, 0)),           # head b
            pl.BlockSpec((HW, HW2), lambda n: (0, 0)),              # pool select
            pl.BlockSpec((HW2, HW), lambda n: (0, 0)),              # upsample
        ],
        out_specs=pl.BlockSpec((1, classes, HW), lambda n: (n, 0, 0)),
        compiler_params=pltpu.CompilerParams(
            dimension_semantics=("parallel",)),
    )(x_flat, w1, b1, w2, b2, wdu, wds, bd, wh, bh, S, U)

    # (N, classes, H*W) -> NCHW (matches the PyTorch module's output layout).
    return out_flat.reshape(N, classes, H, W)


# ---------------------------------------------------------------------------
# Pure-JAX reference (same bf16 quantization points, for validation)
# ---------------------------------------------------------------------------
@jax.jit
def reference_forward(x_nchw, params):
    bf16, f32 = jnp.bfloat16, jnp.float32

    def conv3x3_ref(x, w, b, relu=True):
        y = lax.conv_general_dilated(
            x.astype(bf16), w.astype(bf16), window_strides=(1, 1),
            padding="SAME", dimension_numbers=("NCHW", "HWIO", "NCHW"),
            preferred_element_type=f32)
        y = y + b[None, :, None, None]
        return jnp.maximum(y, 0.0) if relu else y

    x = x_nchw.astype(bf16)
    e1 = conv3x3_ref(x, params["enc1_w"], params["enc1_b"]).astype(bf16)
    N, h, H, W = e1.shape
    p1 = e1.reshape(N, h, H // 2, 2, W // 2, 2).max(axis=(3, 5))
    e2 = conv3x3_ref(p1, params["enc2_w"], params["enc2_b"]).astype(bf16)
    up = jnp.repeat(jnp.repeat(e2, 2, axis=2), 2, axis=3)
    cat = jnp.concatenate([up, e1], axis=1)
    d = conv3x3_ref(cat, params["dec_w"], params["dec_b"]).astype(bf16)
    out = jnp.einsum("co,nchw->nohw", params["head_w"].astype(bf16), d,
                     preferred_element_type=f32)
    return (out + params["head_b"][None, :, None, None]).astype(f32)


# ---------------------------------------------------------------------------
# Deterministic synthetic parameters
# ---------------------------------------------------------------------------
def init_params(key, in_channels, hidden, classes):
    ks = jax.random.split(key, 8)

    def conv_w(k, kh, kw, cin, cout):
        fan_in = kh * kw * cin
        return jax.random.normal(k, (kh, kw, cin, cout), jnp.float32) * (
            (2.0 / fan_in) ** 0.5)

    return {
        "enc1_w": conv_w(ks[0], 3, 3, in_channels, hidden),
        "enc1_b": 0.1 * jax.random.normal(ks[4], (hidden,), jnp.float32),
        "enc2_w": conv_w(ks[1], 3, 3, hidden, 2 * hidden),
        "enc2_b": 0.1 * jax.random.normal(ks[5], (2 * hidden,), jnp.float32),
        "dec_w": conv_w(ks[2], 3, 3, 3 * hidden, hidden),
        "dec_b": 0.1 * jax.random.normal(ks[6], (hidden,), jnp.float32),
        "head_w": (jax.random.normal(ks[3], (hidden, classes), jnp.float32)
                   * (2.0 / hidden) ** 0.5),
        "head_b": 0.1 * jax.random.normal(ks[7], (classes,), jnp.float32),
    }


if __name__ == "__main__":
    key = jax.random.PRNGKey(0)
    k_x, k_p = jax.random.split(key)

    N, C_IN, H, W = 2, 4, 16, 16      # params.in_channels = 4
    HIDDEN, CLASSES = 8, 3            # params.classes = 3

    x = jax.random.normal(k_x, (N, C_IN, H, W), jnp.float32)   # NCHW input
    params = init_params(k_p, C_IN, HIDDEN, CLASSES)

    y = jax.block_until_ready(custom_model_forward(x, params))
    y_ref = jax.block_until_ready(reference_forward(x, params))

    assert y.shape == (N, CLASSES, H, W), y.shape
    assert bool(jnp.all(jnp.isfinite(y)))
    max_err = float(jnp.max(jnp.abs(y - y_ref)))
    assert max_err < 1e-1, f"kernel vs reference mismatch: {max_err}"
    print("KERNEL_OK")
</pallas_src>

<mosaic_0001>
module attributes {stable_mosaic.version = 11 : i64} {
  func.func @_fused_unet_kernel(%arg0: i32, %arg1: memref<1x4x256xbf16, #tpu.memory_space<vmem>>, %arg2: memref<9x8x4xbf16, #tpu.memory_space<vmem>>, %arg3: memref<8x1xf32, #tpu.memory_space<vmem>>, %arg4: memref<9x16x8xbf16, #tpu.memory_space<vmem>>, %arg5: memref<16x1xf32, #tpu.memory_space<vmem>>, %arg6: memref<9x8x16xbf16, #tpu.memory_space<vmem>>, %arg7: memref<9x8x8xbf16, #tpu.memory_space<vmem>>, %arg8: memref<8x1xf32, #tpu.memory_space<vmem>>, %arg9: memref<3x8xbf16, #tpu.memory_space<vmem>>, %arg10: memref<3x1xf32, #tpu.memory_space<vmem>>, %arg11: memref<256x64xbf16, #tpu.memory_space<vmem>>, %arg12: memref<64x256xbf16, #tpu.memory_space<vmem>>, %arg13: memref<1x3x256xf32, #tpu.memory_space<vmem>>) attributes {dimension_semantics = [#tpu.dimension_semantics<parallel>], iteration_bounds = array<i64: 2>, scalar_prefetch = 0 : i64, scratch_operands = 0 : i64, tpu.core_type = #tpu.core_type<tc>, window_params = [{transform_indices = @transform_0, window_bounds = array<i64: 1, 4, 256>}, {pipeline_mode = #tpu.pipeline_mode<synchronous>, transform_indices = @transform_1, window_bounds = array<i64: 9, 8, 4>}, {pipeline_mode = #tpu.pipeline_mode<synchronous>, transform_indices = @transform_2, window_bounds = array<i64: 8, 1>}, {pipeline_mode = #tpu.pipeline_mode<synchronous>, transform_indices = @transform_3, window_bounds = array<i64: 9, 16, 8>}, {pipeline_mode = #tpu.pipeline_mode<synchronous>, transform_indices = @transform_4, window_bounds = array<i64: 16, 1>}, {pipeline_mode = #tpu.pipeline_mode<synchronous>, transform_indices = @transform_5, window_bounds = array<i64: 9, 8, 16>}, {pipeline_mode = #tpu.pipeline_mode<synchronous>, transform_indices = @transform_6, window_bounds = array<i64: 9, 8, 8>}, {pipeline_mode = #tpu.pipeline_mode<synchronous>, transform_indices = @transform_7, window_bounds = array<i64: 8, 1>}, {pipeline_mode = #tpu.pipeline_mode<synchronous>, transform_indices = @transform_8, window_bounds = array<i64: 3, 8>}, {pipeline_mode = #tpu.pipeline_mode<synchronous>, transform_indices = @transform_9, window_bounds = array<i64: 3, 1>}, {pipeline_mode = #tpu.pipeline_mode<synchronous>, transform_indices = @transform_10, window_bounds = array<i64: 256, 64>}, {pipeline_mode = #tpu.pipeline_mode<synchronous>, transform_indices = @transform_11, window_bounds = array<i64: 64, 256>}, {transform_indices = @transform_12, window_bounds = array<i64: 1, 3, 256>}]} {
    %c0 = arith.constant 0 : index
    %c0_0 = arith.constant 0 : index
    %c0_1 = arith.constant 0 : index
    %0 = vector.load %arg1[%c0, %c0_0, %c0_1] : memref<1x4x256xbf16, #tpu.memory_space<vmem>>, vector<1x4x256xbf16>
    %1 = vector.shape_cast %0 : vector<1x4x256xbf16> to vector<4x256xbf16>
    %cst = arith.constant 0.000000e+00 : bf16
    %2 = vector.broadcast %cst : bf16 to vector<4x17xbf16>
    %3 = tpu.concatenate %2, %1, %2 in 1 : vector<4x17xbf16>, vector<4x256xbf16>, vector<4x17xbf16> -> vector<4x290xbf16>
    %4 = tpu.iota {dimensions = array<i32: 1>} : vector<1x256xi32>
    %c16_i32 = arith.constant 16 : i32
    %c0_i32 = arith.constant 0 : i32
    %5 = arith.cmpi eq, %c16_i32, %c0_i32 : i32
    %c1_i32 = arith.constant 1 : i32
    %6 = arith.select %5, %c1_i32, %c16_i32 : i32
    %7 = vector.broadcast %6 : i32 to vector<1x256xi32>
    %8 = arith.remsi %4, %7 : vector<1x256xi32>
    %c0_i32_2 = arith.constant 0 : i32
    %9 = vector.broadcast %c0_i32_2 : i32 to vector<1x256xi32>
    %10 = arith.cmpi ne, %8, %9 : vector<1x256xi32>
    %c0_i32_3 = arith.constant 0 : i32
    %11 = vector.broadcast %c0_i32_3 : i32 to vector<1x256xi32>
    %12 = arith.cmpi slt, %8, %11 : vector<1x256xi32>
    %c0_i32_4 = arith.constant 0 : i32
    %13 = arith.cmpi slt, %6, %c0_i32_4 : i32
    %14 = vector.broadcast %13 : i1 to vector<1x256xi1>
    %15 = vector.broadcast %14 : vector<1x256xi1> to vector<1x256xi1>
    %16 = arith.xori %12, %15 : vector<1x256xi1>
    %17 = arith.andi %16, %10 : vector<1x256xi1>
    %18 = vector.broadcast %6 : i32 to vector<1x256xi32>
    %19 = arith.addi %8, %18 : vector<1x256xi32>
    %20 = arith.select %17, %19, %8 : vector<1x256xi1>, vector<1x256xi32>
    %cst_5 = arith.constant 0.000000e+00 : f32
    %21 = vector.broadcast %cst_5 : f32 to vector<8x256xf32>
    %22 = vector.extract_strided_slice %3 {offsets = [0, 0], sizes = [4, 256], strides = [1, 1]} : vector<4x290xbf16> to vector<4x256xbf16>
    %c1_i32_6 = arith.constant 1 : i32
    %23 = vector.broadcast %c1_i32_6 : i32 to vector<1x256xi32>
    %24 = arith.cmpi sge, %20, %23 : vector<1x256xi32>
    %cst_7 = arith.constant 0.000000e+00 : bf16
    %25 = vector.broadcast %cst_7 : bf16 to vector<4x256xbf16>
    %26 = vector.shape_cast %24 : vector<1x256xi1> to vector<1x256xi1>
    %27 = vector.broadcast %26 : vector<1x256xi1> to vector<4x256xi1>
    %28 = arith.select %27, %22, %25 : vector<4x256xi1>, vector<4x256xbf16>
    %c0_8 = arith.constant 0 : index
    %c0_9 = arith.constant 0 : index
    %c0_10 = arith.constant 0 : index
    %29 = vector.load %arg2[%c0_8, %c0_9, %c0_10] : memref<9x8x4xbf16, #tpu.memory_space<vmem>>, vector<1x8x4xbf16>
    %30 = vector.shape_cast %29 : vector<1x8x4xbf16> to vector<8x4xbf16>
    %cst_11 = arith.constant dense<0.000000e+00> : vector<8x256xf32>
    %31 = tpu.matmul %30, %28, %cst_11 {dimension_numbers = #tpu.dot_dimension_numbers<[1], [0], [0], [1], [0, 0, 1, 1], [], []>} : vector<8x4xbf16>, vector<4x256xbf16>, vector<8x256xf32> -> vector<8x256xf32>
    %32 = arith.addf %21, %31 : vector<8x256xf32>
    %33 = vector.extract_strided_slice %3 {offsets = [0, 1], sizes = [4, 256], strides = [1, 1]} : vector<4x290xbf16> to vector<4x256xbf16>
    %c1 = arith.constant 1 : index
    %c0_12 = arith.constant 0 : index
    %c0_13 = arith.constant 0 : index
    %34 = vector.load %arg2[%c1, %c0_12, %c0_13] : memref<9x8x4xbf16, #tpu.memory_space<vmem>>, vector<1x8x4xbf16>
    %35 = vector.shape_cast %34 : vector<1x8x4xbf16> to vector<8x4xbf16>
    %cst_14 = arith.constant dense<0.000000e+00> : vector<8x256xf32>
    %36 = tpu.matmul %35, %33, %cst_14 {dimension_numbers = #tpu.dot_dimension_numbers<[1], [0], [0], [1], [0, 0, 1, 1], [], []>} : vector<8x4xbf16>, vector<4x256xbf16>, vector<8x256xf32> -> vector<8x256xf32>
    %37 = arith.addf %32, %36 : vector<8x256xf32>
    %38 = vector.extract_strided_slice %3 {offsets = [0, 2], sizes = [4, 256], strides = [1, 1]} : vector<4x290xbf16> to vector<4x256xbf16>
    %c15_i32 = arith.constant 15 : i32
    %39 = vector.broadcast %c15_i32 : i32 to vector<1x256xi32>
    %40 = arith.cmpi slt, %20, %39 : vector<1x256xi32>
    %cst_15 = arith.constant 0.000000e+00 : bf16
    %41 = vector.broadcast %cst_15 : bf16 to vector<4x256xbf16>
    %42 = vector.shape_cast %40 : vector<1x256xi1> to vector<1x256xi1>
    %43 = vector.broadcast %42 : vector<1x256xi1> to vector<4x256xi1>
    %44 = arith.select %43, %38, %41 : vector<4x256xi1>, vector<4x256xbf16>
    %c2 = arith.constant 2 : index
    %c0_16 = arith.constant 0 : index
    %c0_17 = arith.constant 0 : index
    %45 = vector.load %arg2[%c2, %c0_16, %c0_17] : memref<9x8x4xbf16, #tpu.memory_space<vmem>>, vector<1x8x4xbf16>
    %46 = vector.shape_cast %45 : vector<1x8x4xbf16> to vector<8x4xbf16>
    %cst_18 = arith.constant dense<0.000000e+00> : vector<8x256xf32>
    %47 = tpu.matmul %46, %44, %cst_18 {dimension_numbers = #tpu.dot_dimension_numbers<[1], [0], [0], [1], [0, 0, 1, 1], [], []>} : vector<8x4xbf16>, vector<4x256xbf16>, vector<8x256xf32> -> vector<8x256xf32>
    %48 = arith.addf %37, %47 : vector<8x256xf32>
    %49 = vector.extract_strided_slice %3 {offsets = [0, 16], sizes = [4, 256], strides = [1, 1]} : vector<4x290xbf16> to vector<4x256xbf16>
    %c1_i32_19 = arith.constant 1 : i32
    %50 = vector.broadcast %c1_i32_19 : i32 to vector<1x256xi32>
    %51 = arith.cmpi sge, %20, %50 : vector<1x256xi32>
    %cst_20 = arith.constant 0.000000e+00 : bf16
    %52 = vector.broadcast %cst_20 : bf16 to vector<4x256xbf16>
    %53 = vector.shape_cast %51 : vector<1x256xi1> to vector<1x256xi1>
    %54 = vector.broadcast %53 : vector<1x256xi1> to vector<4x256xi1>
    %55 = arith.select %54, %49, %52 : vector<4x256xi1>, vector<4x256xbf16>
    %c3 = arith.constant 3 : index
    %c0_21 = arith.constant 0 : index
    %c0_22 = arith.constant 0 : index
    %56 = vector.load %arg2[%c3, %c0_21, %c0_22] : memref<9x8x4xbf16, #tpu.memory_space<vmem>>, vector<1x8x4xbf16>
    %57 = vector.shape_cast %56 : vector<1x8x4xbf16> to vector<8x4xbf16>
    %cst_23 = arith.constant dense<0.000000e+00> : vector<8x256xf32>
    %58 = tpu.matmul %57, %55, %cst_23 {dimension_numbers = #tpu.dot_dimension_numbers<[1], [0], [0], [1], [0, 0, 1, 1], [], []>} : vector<8x4xbf16>, vector<4x256xbf16>, vector<8x256xf32> -> vector<8x256xf32>
    %59 = arith.addf %48, %58 : vector<8x256xf32>
    %60 = vector.extract_strided_slice %3 {offsets = [0, 17], sizes = [4, 256], strides = [1, 1]} : vector<4x290xbf16> to vector<4x256xbf16>
    %c4 = arith.constant 4 : index
    %c0_24 = arith.constant 0 : index
    %c0_25 = arith.constant 0 : index
    %61 = vector.load %arg2[%c4, %c0_24, %c0_25] : memref<9x8x4xbf16, #tpu.memory_space<vmem>>, vector<1x8x4xbf16>
    %62 = vector.shape_cast %61 : vector<1x8x4xbf16> to vector<8x4xbf16>
    %cst_26 = arith.constant dense<0.000000e+00> : vector<8x256xf32>
    %63 = tpu.matmul %62, %60, %cst_26 {dimension_numbers = #tpu.dot_dimension_numbers<[1], [0], [0], [1], [0, 0, 1, 1], [], []>} : vector<8x4xbf16>, vector<4x256xbf16>, vector<8x256xf32> -> vector<8x256xf32>
    %64 = arith.addf %59, %63 : vector<8x256xf32>
    %65 = vector.extract_strided_slice %3 {offsets = [0, 18], sizes = [4, 256], strides = [1, 1]} : vector<4x290xbf16> to vector<4x256xbf16>
    %c15_i32_27 = arith.constant 15 : i32
    %66 = vector.broadcast %c15_i32_27 : i32 to vector<1x256xi32>
    %67 = arith.cmpi slt, %20, %66 : vector<1x256xi32>
    %cst_28 = arith.constant 0.000000e+00 : bf16
    %68 = vector.broadcast %cst_28 : bf16 to vector<4x256xbf16>
    %69 = vector.shape_cast %67 : vector<1x256xi1> to vector<1x256xi1>
    %70 = vector.broadcast %69 : vector<1x256xi1> to vector<4x256xi1>
    %71 = arith.select %70, %65, %68 : vector<4x256xi1>, vector<4x256xbf16>
    %c5 = arith.constant 5 : index
    %c0_29 = arith.constant 0 : index
    %c0_30 = arith.constant 0 : index
    %72 = vector.load %arg2[%c5, %c0_29, %c0_30] : memref<9x8x4xbf16, #tpu.memory_space<vmem>>, vector<1x8x4xbf16>
    %73 = vector.shape_cast %72 : vector<1x8x4xbf16> to vector<8x4xbf16>
    %cst_31 = arith.constant dense<0.000000e+00> : vector<8x256xf32>
    %74 = tpu.matmul %73, %71, %cst_31 {dimension_numbers = #tpu.dot_dimension_numbers<[1], [0], [0], [1], [0, 0, 1, 1], [], []>} : vector<8x4xbf16>, vector<4x256xbf16>, vector<8x256xf32> -> vector<8x256xf32>
    %75 = arith.addf %64, %74 : vector<8x256xf32>
    %76 = vector.extract_strided_slice %3 {offsets = [0, 32], sizes = [4, 256], strides = [1, 1]} : vector<4x290xbf16> to vector<4x256xbf16>
    %c1_i32_32 = arith.constant 1 : i32
    %77 = vector.broadcast %c1_i32_32 : i32 to vector<1x256xi32>
    %78 = arith.cmpi sge, %20, %77 : vector<1x256xi32>
    %cst_33 = arith.constant 0.000000e+00 : bf16
    %79 = vector.broadcast %cst_33 : bf16 to vector<4x256xbf16>
    %80 = vector.shape_cast %78 : vector<1x256xi1> to vector<1x256xi1>
    %81 = vector.broadcast %80 : vector<1x256xi1> to vector<4x256xi1>
    %82 = arith.select %81, %76, %79 : vector<4x256xi1>, vector<4x256xbf16>
    %c6 = arith.constant 6 : index
    %c0_34 = arith.constant 0 : index
    %c0_35 = arith.constant 0 : index
    %83 = vector.load %arg2[%c6, %c0_34, %c0_35] : memref<9x8x4xbf16, #tpu.memory_space<vmem>>, vector<1x8x4xbf16>
    %84 = vector.shape_cast %83 : vector<1x8x4xbf16> to vector<8x4xbf16>
    %cst_36 = arith.constant dense<0.000000e+00> : vector<8x256xf32>
    %85 = tpu.matmul %84, %82, %cst_36 {dimension_numbers = #tpu.dot_dimension_numbers<[1], [0], [0], [1], [0, 0, 1, 1], [], []>} : vector<8x4xbf16>, vector<4x256xbf16>, vector<8x256xf32> -> vector<8x256xf32>
    %86 = arith.addf %75, %85 : vector<8x256xf32>
    %87 = vector.extract_strided_slice %3 {offsets = [0, 33], sizes = [4, 256], strides = [1, 1]} : vector<4x290xbf16> to vector<4x256xbf16>
    %c7 = arith.constant 7 : index
    %c0_37 = arith.constant 0 : index
    %c0_38 = arith.constant 0 : index
    %88 = vector.load %arg2[%c7, %c0_37, %c0_38] : memref<9x8x4xbf16, #tpu.memory_space<vmem>>, vector<1x8x4xbf16>
    %89 = vector.shape_cast %88 : vector<1x8x4xbf16> to vector<8x4xbf16>
    %cst_39 = arith.constant dense<0.000000e+00> : vector<8x256xf32>
    %90 = tpu.matmul %89, %87, %cst_39 {dimension_numbers = #tpu.dot_dimension_numbers<[1], [0], [0], [1], [0, 0, 1, 1], [], []>} : vector<8x4xbf16>, vector<4x256xbf16>, vector<8x256xf32> -> vector<8x256xf32>
    %91 = arith.addf %86, %90 : vector<8x256xf32>
    %92 = vector.extract_strided_slice %3 {offsets = [0, 34], sizes = [4, 256], strides = [1, 1]} : vector<4x290xbf16> to vector<4x256xbf16>
    %c15_i32_40 = arith.constant 15 : i32
    %93 = vector.broadcast %c15_i32_40 : i32 to vector<1x256xi32>
    %94 = arith.cmpi slt, %20, %93 : vector<1x256xi32>
    %cst_41 = arith.constant 0.000000e+00 : bf16
    %95 = vector.broadcast %cst_41 : bf16 to vector<4x256xbf16>
    %96 = vector.shape_cast %94 : vector<1x256xi1> to vector<1x256xi1>
    %97 = vector.broadcast %96 : vector<1x256xi1> to vector<4x256xi1>
    %98 = arith.select %97, %92, %95 : vector<4x256xi1>, vector<4x256xbf16>
    %c8 = arith.constant 8 : index
    %c0_42 = arith.constant 0 : index
    %c0_43 = arith.constant 0 : index
    %99 = vector.load %arg2[%c8, %c0_42, %c0_43] : memref<9x8x4xbf16, #tpu.memory_space<vmem>>, vector<1x8x4xbf16>
    %100 = vector.shape_cast %99 : vector<1x8x4xbf16> to vector<8x4xbf16>
    %cst_44 = arith.constant dense<0.000000e+00> : vector<8x256xf32>
    %101 = tpu.matmul %100, %98, %cst_44 {dimension_numbers = #tpu.dot_dimension_numbers<[1], [0], [0], [1], [0, 0, 1, 1], [], []>} : vector<8x4xbf16>, vector<4x256xbf16>, vector<8x256xf32> -> vector<8x256xf32>
    %102 = arith.addf %91, %101 : vector<8x256xf32>
    %c0_45 = arith.constant 0 : index
    %c0_46 = arith.constant 0 : index
    %103 = vector.load %arg3[%c0_45, %c0_46] : memref<8x1xf32, #tpu.memory_space<vmem>>, vector<8x1xf32>
    %104 = vector.broadcast %103 : vector<8x1xf32> to vector<8x256xf32>
    %105 = arith.addf %102, %104 : vector<8x256xf32>
    %cst_47 = arith.constant 0.000000e+00 : f32
    %106 = vector.broadcast %cst_47 : f32 to vector<8x256xf32>
    %107 = arith.maximumf %105, %106 : vector<8x256xf32>
    %108 = arith.truncf %107 : vector<8x256xf32> to vector<8x256xbf16>
    %109 = vector.extract_strided_slice %108 {offsets = [0, 1], sizes = [8, 255], strides = [1, 1]} : vector<8x256xbf16> to vector<8x255xbf16>
    %cst_48 = arith.constant 0.000000e+00 : bf16
    %110 = vector.broadcast %cst_48 : bf16 to vector<8x1xbf16>
    %111 = tpu.concatenate %109, %110 in 1 : vector<8x255xbf16>, vector<8x1xbf16> -> vector<8x256xbf16>
    %112 = arith.maximumf %108, %111 : vector<8x256xbf16>
    %113 = vector.extract_strided_slice %112 {offsets = [0, 16], sizes = [8, 240], strides = [1, 1]} : vector<8x256xbf16> to vector<8x240xbf16>
    %cst_49 = arith.constant 0.000000e+00 : bf16
    %114 = vector.broadcast %cst_49 : bf16 to vector<8x16xbf16>
    %115 = tpu.concatenate %113, %114 in 1 : vector<8x240xbf16>, vector<8x16xbf16> -> vector<8x256xbf16>
    %116 = arith.maximumf %112, %115 : vector<8x256xbf16>
    %c0_50 = arith.constant 0 : index
    %c0_51 = arith.constant 0 : index
    %117 = vector.load %arg11[%c0_50, %c0_51] : memref<256x64xbf16, #tpu.memory_space<vmem>>, vector<256x64xbf16>
    %cst_52 = arith.constant dense<0.000000e+00> : vector<8x64xf32>
    %118 = tpu.matmul %116, %117, %cst_52 {dimension_numbers = #tpu.dot_dimension_numbers<[1], [0], [0], [1], [0, 0, 1, 1], [], []>} : vector<8x256xbf16>, vector<256x64xbf16>, vector<8x64xf32> -> vector<8x64xf32>
    %119 = arith.truncf %118 : vector<8x64xf32> to vector<8x64xbf16>
    %cst_53 = arith.constant 0.000000e+00 : bf16
    %120 = vector.broadcast %cst_53 : bf16 to vector<8x9xbf16>
    %121 = tpu.concatenate %120, %119, %120 in 1 : vector<8x9xbf16>, vector<8x64xbf16>, vector<8x9xbf16> -> vector<8x82xbf16>
    %122 = tpu.iota {dimensions = array<i32: 1>} : vector<1x64xi32>
    %c8_i32 = arith.constant 8 : i32
    %c0_i32_54 = arith.constant 0 : i32
    %123 = arith.cmpi eq, %c8_i32, %c0_i32_54 : i32
    %c1_i32_55 = arith.constant 1 : i32
    %124 = arith.select %123, %c1_i32_55, %c8_i32 : i32
    %125 = vector.broadcast %124 : i32 to vector<1x64xi32>
    %126 = arith.remsi %122, %125 : vector<1x64xi32>
    %c0_i32_56 = arith.constant 0 : i32
    %127 = vector.broadcast %c0_i32_56 : i32 to vector<1x64xi32>
    %128 = arith.cmpi ne, %126, %127 : vector<1x64xi32>
    %c0_i32_57 = arith.constant 0 : i32
    %129 = vector.broadcast %c0_i32_57 : i32 to vector<1x64xi32>
    %130 = arith.cmpi slt, %126, %129 : vector<1x64xi32>
    %c0_i32_58 = arith.constant 0 : i32
    %131 = arith.cmpi slt, %124, %c0_i32_58 : i32
    %132 = vector.broadcast %131 : i1 to vector<1x64xi1>
    %133 = vector.broadcast %132 : vector<1x64xi1> to vector<1x64xi1>
    %134 = arith.xori %130, %133 : vector<1x64xi1>
    %135 = arith.andi %134, %128 : vector<1x64xi1>
    %136 = vector.broadcast %124 : i32 to vector<1x64xi32>
    %137 = arith.addi %126, %136 : vector<1x64xi32>
    %138 = arith.select %135, %137, %126 : vector<1x64xi1>, vector<1x64xi32>
    %cst_59 = arith.constant 0.000000e+00 : f32
    %139 = vector.broadcast %cst_59 : f32 to vector<16x64xf32>
    %140 = vector.extract_strided_slice %121 {offsets = [0, 0], sizes = [8, 64], strides = [1, 1]} : vector<8x82xbf16> to vector<8x64xbf16>
    %c1_i32_60 = arith.constant 1 : i32
    %141 = vector.broadcast %c1_i32_60 : i32 to vector<1x64xi32>
    %142 = arith.cmpi sge, %138, %141 : vector<1x64xi32>
    %cst_61 = arith.constant 0.000000e+00 : bf16
    %143 = vector.broadcast %cst_61 : bf16 to vector<8x64xbf16>
    %144 = vector.shape_cast %142 : vector<1x64xi1> to vector<1x64xi1>
    %145 = vector.broadcast %144 : vector<1x64xi1> to vector<8x64xi1>
    %146 = arith.select %145, %140, %143 : vector<8x64xi1>, vector<8x64xbf16>
    %c0_62 = arith.constant 0 : index
    %c0_63 = arith.constant 0 : index
    %c0_64 = arith.constant 0 : index
    %147 = vector.load %arg4[%c0_62, %c0_63, %c0_64] : memref<9x16x8xbf16, #tpu.memory_space<vmem>>, vector<1x16x8xbf16>
    %148 = vector.shape_cast %147 : vector<1x16x8xbf16> to vector<16x8xbf16>
    %cst_65 = arith.constant dense<0.000000e+00> : vector<16x64xf32>
    %149 = tpu.matmul %148, %146, %cst_65 {dimension_numbers = #tpu.dot_dimension_numbers<[1], [0], [0], [1], [0, 0, 1, 1], [], []>} : vector<16x8xbf16>, vector<8x64xbf16>, vector<16x64xf32> -> vector<16x64xf32>
    %150 = arith.addf %139, %149 : vector<16x64xf32>
    %151 = vector.extract_strided_slice %121 {offsets = [0, 1], sizes = [8, 64], strides = [1, 1]} : vector<8x82xbf16> to vector<8x64xbf16>
    %c1_66 = arith.constant 1 : index
    %c0_67 = arith.constant 0 : index
    %c0_68 = arith.constant 0 : index
    %152 = vector.load %arg4[%c1_66, %c0_67, %c0_68] : memref<9x16x8xbf16, #tpu.memory_space<vmem>>, vector<1x16x8xbf16>
    %153 = vector.shape_cast %152 : vector<1x16x8xbf16> to vector<16x8xbf16>
    %cst_69 = arith.constant dense<0.000000e+00> : vector<16x64xf32>
    %154 = tpu.matmul %153, %151, %cst_69 {dimension_numbers = #tpu.dot_dimension_numbers<[1], [0], [0], [1], [0, 0, 1, 1], [], []>} : vector<16x8xbf16>, vector<8x64xbf16>, vector<16x64xf32> -> vector<16x64xf32>
    %155 = arith.addf %150, %154 : vector<16x64xf32>
    %156 = vector.extract_strided_slice %121 {offsets = [0, 2], sizes = [8, 64], strides = [1, 1]} : vector<8x82xbf16> to vector<8x64xbf16>
    %c7_i32 = arith.constant 7 : i32
    %157 = vector.broadcast %c7_i32 : i32 to vector<1x64xi32>
    %158 = arith.cmpi slt, %138, %157 : vector<1x64xi32>
    %cst_70 = arith.constant 0.000000e+00 : bf16
    %159 = vector.broadcast %cst_70 : bf16 to vector<8x64xbf16>
    %160 = vector.shape_cast %158 : vector<1x64xi1> to vector<1x64xi1>
    %161 = vector.broadcast %160 : vector<1x64xi1> to vector<8x64xi1>
    %162 = arith.select %161, %156, %159 : vector<8x64xi1>, vector<8x64xbf16>
    %c2_71 = arith.constant 2 : index
    %c0_72 = arith.constant 0 : index
    %c0_73 = arith.constant 0 : index
    %163 = vector.load %arg4[%c2_71, %c0_72, %c0_73] : memref<9x16x8xbf16, #tpu.memory_space<vmem>>, vector<1x16x8xbf16>
    %164 = vector.shape_cast %163 : vector<1x16x8xbf16> to vector<16x8xbf16>
    %cst_74 = arith.constant dense<0.000000e+00> : vector<16x64xf32>
    %165 = tpu.matmul %164, %162, %cst_74 {dimension_numbers = #tpu.dot_dimension_numbers<[1], [0], [0], [1], [0, 0, 1, 1], [], []>} : vector<16x8xbf16>, vector<8x64xbf16>, vector<16x64xf32> -> vector<16x64xf32>
    %166 = arith.addf %155, %165 : vector<16x64xf32>
    %167 = vector.extract_strided_slice %121 {offsets = [0, 8], sizes = [8, 64], strides = [1, 1]} : vector<8x82xbf16> to vector<8x64xbf16>
    %c1_i32_75 = arith.constant 1 : i32
    %168 = vector.broadcast %c1_i32_75 : i32 to vector<1x64xi32>
    %169 = arith.cmpi sge, %138, %168 : vector<1x64xi32>
    %cst_76 = arith.constant 0.000000e+00 : bf16
    %170 = vector.broadcast %cst_76 : bf16 to vector<8x64xbf16>
    %171 = vector.shape_cast %169 : vector<1x64xi1> to vector<1x64xi1>
    %172 = vector.broadcast %171 : vector<1x64xi1> to vector<8x64xi1>
    %173 = arith.select %172, %167, %170 : vector<8x64xi1>, vector<8x64xbf16>
    %c3_77 = arith.constant 3 : index
    %c0_78 = arith.constant 0 : index
    %c0_79 = arith.constant 0 : index
    %174 = vector.load %arg4[%c3_77, %c0_78, %c0_79] : memref<9x16x8xbf16, #tpu.memory_space<vmem>>, vector<1x16x8xbf16>
    %175 = vector.shape_cast %174 : vector<1x16x8xbf16> to vector<16x8xbf16>
    %cst_80 = arith.constant dense<0.000000e+00> : vector<16x64xf32>
    %176 = tpu.matmul %175, %173, %cst_80 {dimension_numbers = #tpu.dot_dimension_numbers<[1], [0], [0], [1], [0, 0, 1, 1], [], []>} : vector<16x8xbf16>, vector<8x64xbf16>, vector<16x64xf32> -> vector<16x64xf32>
    %177 = arith.addf %166, %176 : vector<16x64xf32>
    %178 = vector.extract_strided_slice %121 {offsets = [0, 9], sizes = [8, 64], strides = [1, 1]} : vector<8x82xbf16> to vector<8x64xbf16>
    %c4_81 = arith.constant 4 : index
    %c0_82 = arith.constant 0 : index
    %c0_83 = arith.constant 0 : index
    %179 = vector.load %arg4[%c4_81, %c0_82, %c0_83] : memref<9x16x8xbf16, #tpu.memory_space<vmem>>, vector<1x16x8xbf16>
    %180 = vector.shape_cast %179 : vector<1x16x8xbf16> to vector<16x8xbf16>
    %cst_84 = arith.constant dense<0.000000e+00> : vector<16x64xf32>
    %181 = tpu.matmul %180, %178, %cst_84 {dimension_numbers = #tpu.dot_dimension_numbers<[1], [0], [0], [1], [0, 0, 1, 1], [], []>} : vector<16x8xbf16>, vector<8x64xbf16>, vector<16x64xf32> -> vector<16x64xf32>
    %182 = arith.addf %177, %181 : vector<16x64xf32>
    %183 = vector.extract_strided_slice %121 {offsets = [0, 10], sizes = [8, 64], strides = [1, 1]} : vector<8x82xbf16> to vector<8x64xbf16>
    %c7_i32_85 = arith.constant 7 : i32
    %184 = vector.broadcast %c7_i32_85 : i32 to vector<1x64xi32>
    %185 = arith.cmpi slt, %138, %184 : vector<1x64xi32>
    %cst_86 = arith.constant 0.000000e+00 : bf16
    %186 = vector.broadcast %cst_86 : bf16 to vector<8x64xbf16>
    %187 = vector.shape_cast %185 : vector<1x64xi1> to vector<1x64xi1>
    %188 = vector.broadcast %187 : vector<1x64xi1> to vector<8x64xi1>
    %189 = arith.select %188, %183, %186 : vector<8x64xi1>, vector<8x64xbf16>
    %c5_87 = arith.constant 5 : index
    %c0_88 = arith.constant 0 : index
    %c0_89 = arith.constant 0 : index
    %190 = vector.load %arg4[%c5_87, %c0_88, %c0_89] : memref<9x16x8xbf16, #tpu.memory_space<vmem>>, vector<1x16x8xbf16>
    %191 = vector.shape_cast %190 : vector<1x16x8xbf16> to vector<16x8xbf16>
    %cst_90 = arith.constant dense<0.000000e+00> : vector<16x64xf32>
    %192 = tpu.matmul %191, %189, %cst_90 {dimension_numbers = #tpu.dot_dimension_numbers<[1], [0], [0], [1], [0, 0, 1, 1], [], []>} : vector<16x8xbf16>, vector<8x64xbf16>, vector<16x64xf32> -> vector<16x64xf32>
    %193 = arith.addf %182, %192 : vector<16x64xf32>
    %194 = vector.extract_strided_slice %121 {offsets = [0, 16], sizes = [8, 64], strides = [1, 1]} : vector<8x82xbf16> to vector<8x64xbf16>
    %c1_i32_91 = arith.constant 1 : i32
    %195 = vector.broadcast %c1_i32_91 : i32 to vector<1x64xi32>
    %196 = arith.cmpi sge, %138, %195 : vector<1x64xi32>
    %cst_92 = arith.constant 0.000000e+00 : bf16
    %197 = vector.broadcast %cst_92 : bf16 to vector<8x64xbf16>
    %198 = vector.shape_cast %196 : vector<1x64xi1> to vector<1x64xi1>
    %199 = vector.broadcast %198 : vector<1x64xi1> to vector<8x64xi1>
    %200 = arith.select %199, %194, %197 : vector<8x64xi1>, vector<8x64xbf16>
    %c6_93 = arith.constant 6 : index
    %c0_94 = arith.constant 0 : index
    %c0_95 = arith.constant 0 : index
    %201 = vector.load %arg4[%c6_93, %c0_94, %c0_95] : memref<9x16x8xbf16, #tpu.memory_space<vmem>>, vector<1x16x8xbf16>
    %202 = vector.shape_cast %201 : vector<1x16x8xbf16> to vector<16x8xbf16>
    %cst_96 = arith.constant dense<0.000000e+00> : vector<16x64xf32>
    %203 = tpu.matmul %202, %200, %cst_96 {dimension_numbers = #tpu.dot_dimension_numbers<[1], [0], [0], [1], [0, 0, 1, 1], [], []>} : vector<16x8xbf16>, vector<8x64xbf16>, vector<16x64xf32> -> vector<16x64xf32>
    %204 = arith.addf %193, %203 : vector<16x64xf32>
    %205 = vector.extract_strided_slice %121 {offsets = [0, 17], sizes = [8, 64], strides = [1, 1]} : vector<8x82xbf16> to vector<8x64xbf16>
    %c7_97 = arith.constant 7 : index
    %c0_98 = arith.constant 0 : index
    %c0_99 = arith.constant 0 : index
    %206 = vector.load %arg4[%c7_97, %c0_98, %c0_99] : memref<9x16x8xbf16, #tpu.memory_space<vmem>>, vector<1x16x8xbf16>
    %207 = vector.shape_cast %206 : vector<1x16x8xbf16> to vector<16x8xbf16>
    %cst_100 = arith.constant dense<0.000000e+00> : vector<16x64xf32>
    %208 = tpu.matmul %207, %205, %cst_100 {dimension_numbers = #tpu.dot_dimension_numbers<[1], [0], [0], [1], [0, 0, 1, 1], [], []>} : vector<16x8xbf16>, vector<8x64xbf16>, vector<16x64xf32> -> vector<16x64xf32>
    %209 = arith.addf %204, %208 : vector<16x64xf32>
    %210 = vector.extract_strided_slice %121 {offsets = [0, 18], sizes = [8, 64], strides = [1, 1]} : vector<8x82xbf16> to vector<8x64xbf16>
    %c7_i32_101 = arith.constant 7 : i32
    %211 = vector.broadcast %c7_i32_101 : i32 to vector<1x64xi32>
    %212 = arith.cmpi slt, %138, %211 : vector<1x64xi32>
    %cst_102 = arith.constant 0.000000e+00 : bf16
    %213 = vector.broadcast %cst_102 : bf16 to vector<8x64xbf16>
    %214 = vector.shape_cast %212 : vector<1x64xi1> to vector<1x64xi1>
    %215 = vector.broadcast %214 : vector<1x64xi1> to vector<8x64xi1>
    %216 = arith.select %215, %210, %213 : vector<8x64xi1>, vector<8x64xbf16>
    %c8_103 = arith.constant 8 : index
    %c0_104 = arith.constant 0 : index
    %c0_105 = arith.constant 0 : index
    %217 = vector.load %arg4[%c8_103, %c0_104, %c0_105] : memref<9x16x8xbf16, #tpu.memory_space<vmem>>, vector<1x16x8xbf16>
    %218 = vector.shape_cast %217 : vector<1x16x8xbf16> to vector<16x8xbf16>
    %cst_106 = arith.constant dense<0.000000e+00> : vector<16x64xf32>
    %219 = tpu.matmul %218, %216, %cst_106 {dimension_numbers = #tpu.dot_dimension_numbers<[1], [0], [0], [1], [0, 0, 1, 1], [], []>} : vector<16x8xbf16>, vector<8x64xbf16>, vector<16x64xf32> -> vector<16x64xf32>
    %220 = arith.addf %209, %219 : vector<16x64xf32>
    %c0_107 = arith.constant 0 : index
    %c0_108 = arith.constant 0 : index
    %221 = vector.load %arg5[%c0_107, %c0_108] : memref<16x1xf32, #tpu.memory_space<vmem>>, vector<16x1xf32>
    %222 = vector.broadcast %221 : vector<16x1xf32> to vector<16x64xf32>
    %223 = arith.addf %220, %222 : vector<16x64xf32>
    %cst_109 = arith.constant 0.000000e+00 : f32
    %224 = vector.broadcast %cst_109 : f32 to vector<16x64xf32>
    %225 = arith.maximumf %223, %224 : vector<16x64xf32>
    %226 = arith.truncf %225 : vector<16x64xf32> to vector<16x64xbf16>
    %c0_110 = arith.constant 0 : index
    %c0_111 = arith.constant 0 : index
    %227 = vector.load %arg12[%c0_110, %c0_111] : memref<64x256xbf16, #tpu.memory_space<vmem>>, vector<64x256xbf16>
    %cst_112 = arith.constant dense<0.000000e+00> : vector<16x256xf32>
    %228 = tpu.matmul %226, %227, %cst_112 {dimension_numbers = #tpu.dot_dimension_numbers<[1], [0], [0], [1], [0, 0, 1, 1], [], []>} : vector<16x64xbf16>, vector<64x256xbf16>, vector<16x256xf32> -> vector<16x256xf32>
    %229 = arith.truncf %228 : vector<16x256xf32> to vector<16x256xbf16>
    %cst_113 = arith.constant 0.000000e+00 : bf16
    %230 = vector.broadcast %cst_113 : bf16 to vector<16x17xbf16>
    %231 = tpu.concatenate %230, %229, %230 in 1 : vector<16x17xbf16>, vector<16x256xbf16>, vector<16x17xbf16> -> vector<16x290xbf16>
    %232 = tpu.iota {dimensions = array<i32: 1>} : vector<1x256xi32>
    %c16_i32_114 = arith.constant 16 : i32
    %c0_i32_115 = arith.constant 0 : i32
    %233 = arith.cmpi eq, %c16_i32_114, %c0_i32_115 : i32
    %c1_i32_116 = arith.constant 1 : i32
    %234 = arith.select %233, %c1_i32_116, %c16_i32_114 : i32
    %235 = vector.broadcast %234 : i32 to vector<1x256xi32>
    %236 = arith.remsi %232, %235 : vector<1x256xi32>
    %c0_i32_117 = arith.constant 0 : i32
    %237 = vector.broadcast %c0_i32_117 : i32 to vector<1x256xi32>
    %238 = arith.cmpi ne, %236, %237 : vector<1x256xi32>
    %c0_i32_118 = arith.constant 0 : i32
    %239 = vector.broadcast %c0_i32_118 : i32 to vector<1x256xi32>
    %240 = arith.cmpi slt, %236, %239 : vector<1x256xi32>
    %c0_i32_119 = arith.constant 0 : i32
    %241 = arith.cmpi slt, %234, %c0_i32_119 : i32
    %242 = vector.broadcast %241 : i1 to vector<1x256xi1>
    %243 = vector.broadcast %242 : vector<1x256xi1> to vector<1x256xi1>
    %244 = arith.xori %240, %243 : vector<1x256xi1>
    %245 = arith.andi %244, %238 : vector<1x256xi1>
    %246 = vector.broadcast %234 : i32 to vector<1x256xi32>
    %247 = arith.addi %236, %246 : vector<1x256xi32>
    %248 = arith.select %245, %247, %236 : vector<1x256xi1>, vector<1x256xi32>
    %cst_120 = arith.constant 0.000000e+00 : f32
    %249 = vector.broadcast %cst_120 : f32 to vector<8x256xf32>
    %250 = vector.extract_strided_slice %231 {offsets = [0, 0], sizes = [16, 256], strides = [1, 1]} : vector<16x290xbf16> to vector<16x256xbf16>
    %c1_i32_121 = arith.constant 1 : i32
    %251 = vector.broadcast %c1_i32_121 : i32 to vector<1x256xi32>
    %252 = arith.cmpi sge, %248, %251 : vector<1x256xi32>
    %cst_122 = arith.constant 0.000000e+00 : bf16
    %253 = vector.broadcast %cst_122 : bf16 to vector<16x256xbf16>
    %254 = vector.shape_cast %252 : vector<1x256xi1> to vector<1x256xi1>
    %255 = vector.broadcast %254 : vector<1x256xi1> to vector<16x256xi1>
    %256 = arith.select %255, %250, %253 : vector<16x256xi1>, vector<16x256xbf16>
    %c0_123 = arith.constant 0 : index
    %c0_124 = arith.constant 0 : index
    %c0_125 = arith.constant 0 : index
    %257 = vector.load %arg6[%c0_123, %c0_124, %c0_125] : memref<9x8x16xbf16, #tpu.memory_space<vmem>>, vector<1x8x16xbf16>
    %258 = vector.shape_cast %257 : vector<1x8x16xbf16> to vector<8x16xbf16>
    %cst_126 = arith.constant dense<0.000000e+00> : vector<8x256xf32>
    %259 = tpu.matmul %258, %256, %cst_126 {dimension_numbers = #tpu.dot_dimension_numbers<[1], [0], [0], [1], [0, 0, 1, 1], [], []>} : vector<8x16xbf16>, vector<16x256xbf16>, vector<8x256xf32> -> vector<8x256xf32>
    %260 = arith.addf %249, %259 : vector<8x256xf32>
    %261 = vector.extract_strided_slice %231 {offsets = [0, 1], sizes = [16, 256], strides = [1, 1]} : vector<16x290xbf16> to vector<16x256xbf16>
    %c1_127 = arith.constant 1 : index
    %c0_128 = arith.constant 0 : index
    %c0_129 = arith.constant 0 : index
    %262 = vector.load %arg6[%c1_127, %c0_128, %c0_129] : memref<9x8x16xbf16, #tpu.memory_space<vmem>>, vector<1x8x16xbf16>
    %263 = vector.shape_cast %262 : vector<1x8x16xbf16> to vector<8x16xbf16>
    %cst_130 = arith.constant dense<0.000000e+00> : vector<8x256xf32>
    %264 = tpu.matmul %263, %261, %cst_130 {dimension_numbers = #tpu.dot_dimension_numbers<[1], [0], [0], [1], [0, 0, 1, 1], [], []>} : vector<8x16xbf16>, vector<16x256xbf16>, vector<8x256xf32> -> vector<8x256xf32>
    %265 = arith.addf %260, %264 : vector<8x256xf32>
    %266 = vector.extract_strided_slice %231 {offsets = [0, 2], sizes = [16, 256], strides = [1, 1]} : vector<16x290xbf16> to vector<16x256xbf16>
    %c15_i32_131 = arith.constant 15 : i32
    %267 = vector.broadcast %c15_i32_131 : i32 to vector<1x256xi32>
    %268 = arith.cmpi slt, %248, %267 : vector<1x256xi32>
    %cst_132 = arith.constant 0.000000e+00 : bf16
    %269 = vector.broadcast %cst_132 : bf16 to vector<16x256xbf16>
    %270 = vector.shape_cast %268 : vector<1x256xi1> to vector<1x256xi1>
    %271 = vector.broadcast %270 : vector<1x256xi1> to vector<16x256xi1>
    %272 = arith.select %271, %266, %269 : vector<16x256xi1>, vector<16x256xbf16>
    %c2_133 = arith.constant 2 : index
    %c0_134 = arith.constant 0 : index
    %c0_135 = arith.constant 0 : index
    %273 = vector.load %arg6[%c2_133, %c0_134, %c0_135] : memref<9x8x16xbf16, #tpu.memory_space<vmem>>, vector<1x8x16xbf16>
    %274 = vector.shape_cast %273 : vector<1x8x16xbf16> to vector<8x16xbf16>
    %cst_136 = arith.constant dense<0.000000e+00> : vector<8x256xf32>
    %275 = tpu.matmul %274, %272, %cst_136 {dimension_numbers = #tpu.dot_dimension_numbers<[1], [0], [0], [1], [0, 0, 1, 1], [], []>} : vector<8x16xbf16>, vector<16x256xbf16>, vector<8x256xf32> -> vector<8x256xf32>
    %276 = arith.addf %265, %275 : vector<8x256xf32>
    %277 = vector.extract_strided_slice %231 {offsets = [0, 16], sizes = [16, 256], strides = [1, 1]} : vector<16x290xbf16> to vector<16x256xbf16>
    %c1_i32_137 = arith.constant 1 : i32
    %278 = vector.broadcast %c1_i32_137 : i32 to vector<1x256xi32>
    %279 = arith.cmpi sge, %248, %278 : vector<1x256xi32>
    %cst_138 = arith.constant 0.000000e+00 : bf16
    %280 = vector.broadcast %cst_138 : bf16 to vector<16x256xbf16>
    %281 = vector.shape_cast %279 : vector<1x256xi1> to vector<1x256xi1>
    %282 = vector.broadcast %281 : vector<1x256xi1> to vector<16x256xi1>
    %283 = arith.select %282, %277, %280 : vector<16x256xi1>, vector<16x256xbf16>
    %c3_139 = arith.constant 3 : index
    %c0_140 = arith.constant 0 : index
    %c0_141 = arith.constant 0 : index
    %284 = vector.load %arg6[%c3_139, %c0_140, %c0_141] : memref<9x8x16xbf16, #tpu.memory_space<vmem>>, vector<1x8x16xbf16>
    %285 = vector.shape_cast %284 : vector<1x8x16xbf16> to vector<8x16xbf16>
    %cst_142 = arith.constant dense<0.000000e+00> : vector<8x256xf32>
    %286 = tpu.matmul %285, %283, %cst_142 {dimension_numbers = #tpu.dot_dimension_numbers<[1], [0], [0], [1], [0, 0, 1, 1], [], []>} : vector<8x16xbf16>, vector<16x256xbf16>, vector<8x256xf32> -> vector<8x256xf32>
    %287 = arith.addf %276, %286 : vector<8x256xf32>
    %288 = vector.extract_strided_slice %231 {offsets = [0, 17], sizes = [16, 256], strides = [1, 1]} : vector<16x290xbf16> to vector<16x256xbf16>
    %c4_143 = arith.constant 4 : index
    %c0_144 = arith.constant 0 : index
    %c0_145 = arith.constant 0 : index
    %289 = vector.load %arg6[%c4_143, %c0_144, %c0_145] : memref<9x8x16xbf16, #tpu.memory_space<vmem>>, vector<1x8x16xbf16>
    %290 = vector.shape_cast %289 : vector<1x8x16xbf16> to vector<8x16xbf16>
    %cst_146 = arith.constant dense<0.000000e+00> : vector<8x256xf32>
    %291 = tpu.matmul %290, %288, %cst_146 {dimension_numbers = #tpu.dot_dimension_numbers<[1], [0], [0], [1], [0, 0, 1, 1], [], []>} : vector<8x16xbf16>, vector<16x256xbf16>, vector<8x256xf32> -> vector<8x256xf32>
    %292 = arith.addf %287, %291 : vector<8x256xf32>
    %293 = vector.extract_strided_slice %231 {offsets = [0, 18], sizes = [16, 256], strides = [1, 1]} : vector<16x290xbf16> to vector<16x256xbf16>
    %c15_i32_147 = arith.constant 15 : i32
    %294 = vector.broadcast %c15_i32_147 : i32 to vector<1x256xi32>
    %295 = arith.cmpi slt, %248, %294 : vector<1x256xi32>
    %cst_148 = arith.constant 0.000000e+00 : bf16
    %296 = vector.broadcast %cst_148 : bf16 to vector<16x256xbf16>
    %297 = vector.shape_cast %295 : vector<1x256xi1> to vector<1x256xi1>
    %298 = vector.broadcast %297 : vector<1x256xi1> to vector<16x256xi1>
    %299 = arith.select %298, %293, %296 : vector<16x256xi1>, vector<16x256xbf16>
    %c5_149 = arith.constant 5 : index
    %c0_150 = arith.constant 0 : index
    %c0_151 = arith.constant 0 : index
    %300 = vector.load %arg6[%c5_149, %c0_150, %c0_151] : memref<9x8x16xbf16, #tpu.memory_space<vmem>>, vector<1x8x16xbf16>
    %301 = vector.shape_cast %300 : vector<1x8x16xbf16> to vector<8x16xbf16>
    %cst_152 = arith.constant dense<0.000000e+00> : vector<8x256xf32>
    %302 = tpu.matmul %301, %299, %cst_152 {dimension_numbers = #tpu.dot_dimension_numbers<[1], [0], [0], [1], [0, 0, 1, 1], [], []>} : vector<8x16xbf16>, vector<16x256xbf16>, vector<8x256xf32> -> vector<8x256xf32>
    %303 = arith.addf %292, %302 : vector<8x256xf32>
    %304 = vector.extract_strided_slice %231 {offsets = [0, 32], sizes = [16, 256], strides = [1, 1]} : vector<16x290xbf16> to vector<16x256xbf16>
    %c1_i32_153 = arith.constant 1 : i32
    %305 = vector.broadcast %c1_i32_153 : i32 to vector<1x256xi32>
    %306 = arith.cmpi sge, %248, %305 : vector<1x256xi32>
    %cst_154 = arith.constant 0.000000e+00 : bf16
    %307 = vector.broadcast %cst_154 : bf16 to vector<16x256xbf16>
    %308 = vector.shape_cast %306 : vector<1x256xi1> to vector<1x256xi1>
    %309 = vector.broadcast %308 : vector<1x256xi1> to vector<16x256xi1>
    %310 = arith.select %309, %304, %307 : vector<16x256xi1>, vector<16x256xbf16>
    %c6_155 = arith.constant 6 : index
    %c0_156 = arith.constant 0 : index
    %c0_157 = arith.constant 0 : index
    %311 = vector.load %arg6[%c6_155, %c0_156, %c0_157] : memref<9x8x16xbf16, #tpu.memory_space<vmem>>, vector<1x8x16xbf16>
    %312 = vector.shape_cast %311 : vector<1x8x16xbf16> to vector<8x16xbf16>
    %cst_158 = arith.constant dense<0.000000e+00> : vector<8x256xf32>
    %313 = tpu.matmul %312, %310, %cst_158 {dimension_numbers = #tpu.dot_dimension_numbers<[1], [0], [0], [1], [0, 0, 1, 1], [], []>} : vector<8x16xbf16>, vector<16x256xbf16>, vector<8x256xf32> -> vector<8x256xf32>
    %314 = arith.addf %303, %313 : vector<8x256xf32>
    %315 = vector.extract_strided_slice %231 {offsets = [0, 33], sizes = [16, 256], strides = [1, 1]} : vector<16x290xbf16> to vector<16x256xbf16>
    %c7_159 = arith.constant 7 : index
    %c0_160 = arith.constant 0 : index
    %c0_161 = arith.constant 0 : index
    %316 = vector.load %arg6[%c7_159, %c0_160, %c0_161] : memref<9x8x16xbf16, #tpu.memory_space<vmem>>, vector<1x8x16xbf16>
    %317 = vector.shape_cast %316 : vector<1x8x16xbf16> to vector<8x16xbf16>
    %cst_162 = arith.constant dense<0.000000e+00> : vector<8x256xf32>
    %318 = tpu.matmul %317, %315, %cst_162 {dimension_numbers = #tpu.dot_dimension_numbers<[1], [0], [0], [1], [0, 0, 1, 1], [], []>} : vector<8x16xbf16>, vector<16x256xbf16>, vector<8x256xf32> -> vector<8x256xf32>
    %319 = arith.addf %314, %318 : vector<8x256xf32>
    %320 = vector.extract_strided_slice %231 {offsets = [0, 34], sizes = [16, 256], strides = [1, 1]} : vector<16x290xbf16> to vector<16x256xbf16>
    %c15_i32_163 = arith.constant 15 : i32
    %321 = vector.broadcast %c15_i32_163 : i32 to vector<1x256xi32>
    %322 = arith.cmpi slt, %248, %321 : vector<1x256xi32>
    %cst_164 = arith.constant 0.000000e+00 : bf16
    %323 = vector.broadcast %cst_164 : bf16 to vector<16x256xbf16>
    %324 = vector.shape_cast %322 : vector<1x256xi1> to vector<1x256xi1>
    %325 = vector.broadcast %324 : vector<1x256xi1> to vector<16x256xi1>
    %326 = arith.select %325, %320, %323 : vector<16x256xi1>, vector<16x256xbf16>
    %c8_165 = arith.constant 8 : index
    %c0_166 = arith.constant 0 : index
    %c0_167 = arith.constant 0 : index
    %327 = vector.load %arg6[%c8_165, %c0_166, %c0_167] : memref<9x8x16xbf16, #tpu.memory_space<vmem>>, vector<1x8x16xbf16>
    %328 = vector.shape_cast %327 : vector<1x8x16xbf16> to vector<8x16xbf16>
    %cst_168 = arith.constant dense<0.000000e+00> : vector<8x256xf32>
    %329 = tpu.matmul %328, %326, %cst_168 {dimension_numbers = #tpu.dot_dimension_numbers<[1], [0], [0], [1], [0, 0, 1, 1], [], []>} : vector<8x16xbf16>, vector<16x256xbf16>, vector<8x256xf32> -> vector<8x256xf32>
    %330 = arith.addf %319, %329 : vector<8x256xf32>
    %cst_169 = arith.constant 0.000000e+00 : bf16
    %331 = vector.broadcast %cst_169 : bf16 to vector<8x17xbf16>
    %332 = tpu.concatenate %331, %108, %331 in 1 : vector<8x17xbf16>, vector<8x256xbf16>, vector<8x17xbf16> -> vector<8x290xbf16>
    %333 = tpu.iota {dimensions = array<i32: 1>} : vector<1x256xi32>
    %c16_i32_170 = arith.constant 16 : i32
    %c0_i32_171 = arith.constant 0 : i32
    %334 = arith.cmpi eq, %c16_i32_170, %c0_i32_171 : i32
    %c1_i32_172 = arith.constant 1 : i32
    %335 = arith.select %334, %c1_i32_172, %c16_i32_170 : i32
    %336 = vector.broadcast %335 : i32 to vector<1x256xi32>
    %337 = arith.remsi %333, %336 : vector<1x256xi32>
    %c0_i32_173 = arith.constant 0 : i32
    %338 = vector.broadcast %c0_i32_173 : i32 to vector<1x256xi32>
    %339 = arith.cmpi ne, %337, %338 : vector<1x256xi32>
    %c0_i32_174 = arith.constant 0 : i32
    %340 = vector.broadcast %c0_i32_174 : i32 to vector<1x256xi32>
    %341 = arith.cmpi slt, %337, %340 : vector<1x256xi32>
    %c0_i32_175 = arith.constant 0 : i32
    %342 = arith.cmpi slt, %335, %c0_i32_175 : i32
    %343 = vector.broadcast %342 : i1 to vector<1x256xi1>
    %344 = vector.broadcast %343 : vector<1x256xi1> to vector<1x256xi1>
    %345 = arith.xori %341, %344 : vector<1x256xi1>
    %346 = arith.andi %345, %339 : vector<1x256xi1>
    %347 = vector.broadcast %335 : i32 to vector<1x256xi32>
    %348 = arith.addi %337, %347 : vector<1x256xi32>
    %349 = arith.select %346, %348, %337 : vector<1x256xi1>, vector<1x256xi32>
    %cst_176 = arith.constant 0.000000e+00 : f32
    %350 = vector.broadcast %cst_176 : f32 to vector<8x256xf32>
    %351 = vector.extract_strided_slice %332 {offsets = [0, 0], sizes = [8, 256], strides = [1, 1]} : vector<8x290xbf16> to vector<8x256xbf16>
    %c1_i32_177 = arith.constant 1 : i32
    %352 = vector.broadcast %c1_i32_177 : i32 to vector<1x256xi32>
    %353 = arith.cmpi sge, %349, %352 : vector<1x256xi32>
    %cst_178 = arith.constant 0.000000e+00 : bf16
    %354 = vector.broadcast %cst_178 : bf16 to vector<8x256xbf16>
    %355 = vector.shape_cast %353 : vector<1x256xi1> to vector<1x256xi1>
    %356 = vector.broadcast %355 : vector<1x256xi1> to vector<8x256xi1>
    %357 = arith.select %356, %351, %354 : vector<8x256xi1>, vector<8x256xbf16>
    %c0_179 = arith.constant 0 : index
    %c0_180 = arith.constant 0 : index
    %c0_181 = arith.constant 0 : index
    %358 = vector.load %arg7[%c0_179, %c0_180, %c0_181] : memref<9x8x8xbf16, #tpu.memory_space<vmem>>, vector<1x8x8xbf16>
    %359 = vector.shape_cast %358 : vector<1x8x8xbf16> to vector<8x8xbf16>
    %cst_182 = arith.constant dense<0.000000e+00> : vector<8x256xf32>
    %360 = tpu.matmul %359, %357, %cst_182 {dimension_numbers = #tpu.dot_dimension_numbers<[1], [0], [0], [1], [0, 0, 1, 1], [], []>} : vector<8x8xbf16>, vector<8x256xbf16>, vector<8x256xf32> -> vector<8x256xf32>
    %361 = arith.addf %350, %360 : vector<8x256xf32>
    %362 = vector.extract_strided_slice %332 {offsets = [0, 1], sizes = [8, 256], strides = [1, 1]} : vector<8x290xbf16> to vector<8x256xbf16>
    %c1_183 = arith.constant 1 : index
    %c0_184 = arith.constant 0 : index
    %c0_185 = arith.constant 0 : index
    %363 = vector.load %arg7[%c1_183, %c0_184, %c0_185] : memref<9x8x8xbf16, #tpu.memory_space<vmem>>, vector<1x8x8xbf16>
    %364 = vector.shape_cast %363 : vector<1x8x8xbf16> to vector<8x8xbf16>
    %cst_186 = arith.constant dense<0.000000e+00> : vector<8x256xf32>
    %365 = tpu.matmul %364, %362, %cst_186 {dimension_numbers = #tpu.dot_dimension_numbers<[1], [0], [0], [1], [0, 0, 1, 1], [], []>} : vector<8x8xbf16>, vector<8x256xbf16>, vector<8x256xf32> -> vector<8x256xf32>
    %366 = arith.addf %361, %365 : vector<8x256xf32>
    %367 = vector.extract_strided_slice %332 {offsets = [0, 2], sizes = [8, 256], strides = [1, 1]} : vector<8x290xbf16> to vector<8x256xbf16>
    %c15_i32_187 = arith.constant 15 : i32
    %368 = vector.broadcast %c15_i32_187 : i32 to vector<1x256xi32>
    %369 = arith.cmpi slt, %349, %368 : vector<1x256xi32>
    %cst_188 = arith.constant 0.000000e+00 : bf16
    %370 = vector.broadcast %cst_188 : bf16 to vector<8x256xbf16>
    %371 = vector.shape_cast %369 : vector<1x256xi1> to vector<1x256xi1>
    %372 = vector.broadcast %371 : vector<1x256xi1> to vector<8x256xi1>
    %373 = arith.select %372, %367, %370 : vector<8x256xi1>, vector<8x256xbf16>
    %c2_189 = arith.constant 2 : index
    %c0_190 = arith.constant 0 : index
    %c0_191 = arith.constant 0 : index
    %374 = vector.load %arg7[%c2_189, %c0_190, %c0_191] : memref<9x8x8xbf16, #tpu.memory_space<vmem>>, vector<1x8x8xbf16>
    %375 = vector.shape_cast %374 : vector<1x8x8xbf16> to vector<8x8xbf16>
    %cst_192 = arith.constant dense<0.000000e+00> : vector<8x256xf32>
    %376 = tpu.matmul %375, %373, %cst_192 {dimension_numbers = #tpu.dot_dimension_numbers<[1], [0], [0], [1], [0, 0, 1, 1], [], []>} : vector<8x8xbf16>, vector<8x256xbf16>, vector<8x256xf32> -> vector<8x256xf32>
    %377 = arith.addf %366, %376 : vector<8x256xf32>
    %378 = vector.extract_strided_slice %332 {offsets = [0, 16], sizes = [8, 256], strides = [1, 1]} : vector<8x290xbf16> to vector<8x256xbf16>
    %c1_i32_193 = arith.constant 1 : i32
    %379 = vector.broadcast %c1_i32_193 : i32 to vector<1x256xi32>
    %380 = arith.cmpi sge, %349, %379 : vector<1x256xi32>
    %cst_194 = arith.constant 0.000000e+00 : bf16
    %381 = vector.broadcast %cst_194 : bf16 to vector<8x256xbf16>
    %382 = vector.shape_cast %380 : vector<1x256xi1> to vector<1x256xi1>
    %383 = vector.broadcast %382 : vector<1x256xi1> to vector<8x256xi1>
    %384 = arith.select %383, %378, %381 : vector<8x256xi1>, vector<8x256xbf16>
    %c3_195 = arith.constant 3 : index
    %c0_196 = arith.constant 0 : index
    %c0_197 = arith.constant 0 : index
    %385 = vector.load %arg7[%c3_195, %c0_196, %c0_197] : memref<9x8x8xbf16, #tpu.memory_space<vmem>>, vector<1x8x8xbf16>
    %386 = vector.shape_cast %385 : vector<1x8x8xbf16> to vector<8x8xbf16>
    %cst_198 = arith.constant dense<0.000000e+00> : vector<8x256xf32>
    %387 = tpu.matmul %386, %384, %cst_198 {dimension_numbers = #tpu.dot_dimension_numbers<[1], [0], [0], [1], [0, 0, 1, 1], [], []>} : vector<8x8xbf16>, vector<8x256xbf16>, vector<8x256xf32> -> vector<8x256xf32>
    %388 = arith.addf %377, %387 : vector<8x256xf32>
    %389 = vector.extract_strided_slice %332 {offsets = [0, 17], sizes = [8, 256], strides = [1, 1]} : vector<8x290xbf16> to vector<8x256xbf16>
    %c4_199 = arith.constant 4 : index
    %c0_200 = arith.constant 0 : index
    %c0_201 = arith.constant 0 : index
    %390 = vector.load %arg7[%c4_199, %c0_200, %c0_201] : memref<9x8x8xbf16, #tpu.memory_space<vmem>>, vector<1x8x8xbf16>
    %391 = vector.shape_cast %390 : vector<1x8x8xbf16> to vector<8x8xbf16>
    %cst_202 = arith.constant dense<0.000000e+00> : vector<8x256xf32>
    %392 = tpu.matmul %391, %389, %cst_202 {dimension_numbers = #tpu.dot_dimension_numbers<[1], [0], [0], [1], [0, 0, 1, 1], [], []>} : vector<8x8xbf16>, vector<8x256xbf16>, vector<8x256xf32> -> vector<8x256xf32>
    %393 = arith.addf %388, %392 : vector<8x256xf32>
    %394 = vector.extract_strided_slice %332 {offsets = [0, 18], sizes = [8, 256], strides = [1, 1]} : vector<8x290xbf16> to vector<8x256xbf16>
    %c15_i32_203 = arith.constant 15 : i32
    %395 = vector.broadcast %c15_i32_203 : i32 to vector<1x256xi32>
    %396 = arith.cmpi slt, %349, %395 : vector<1x256xi32>
    %cst_204 = arith.constant 0.000000e+00 : bf16
    %397 = vector.broadcast %cst_204 : bf16 to vector<8x256xbf16>
    %398 = vector.shape_cast %396 : vector<1x256xi1> to vector<1x256xi1>
    %399 = vector.broadcast %398 : vector<1x256xi1> to vector<8x256xi1>
    %400 = arith.select %399, %394, %397 : vector<8x256xi1>, vector<8x256xbf16>
    %c5_205 = arith.constant 5 : index
    %c0_206 = arith.constant 0 : index
    %c0_207 = arith.constant 0 : index
    %401 = vector.load %arg7[%c5_205, %c0_206, %c0_207] : memref<9x8x8xbf16, #tpu.memory_space<vmem>>, vector<1x8x8xbf16>
    %402 = vector.shape_cast %401 : vector<1x8x8xbf16> to vector<8x8xbf16>
    %cst_208 = arith.constant dense<0.000000e+00> : vector<8x256xf32>
    %403 = tpu.matmul %402, %400, %cst_208 {dimension_numbers = #tpu.dot_dimension_numbers<[1], [0], [0], [1], [0, 0, 1, 1], [], []>} : vector<8x8xbf16>, vector<8x256xbf16>, vector<8x256xf32> -> vector<8x256xf32>
    %404 = arith.addf %393, %403 : vector<8x256xf32>
    %405 = vector.extract_strided_slice %332 {offsets = [0, 32], sizes = [8, 256], strides = [1, 1]} : vector<8x290xbf16> to vector<8x256xbf16>
    %c1_i32_209 = arith.constant 1 : i32
    %406 = vector.broadcast %c1_i32_209 : i32 to vector<1x256xi32>
    %407 = arith.cmpi sge, %349, %406 : vector<1x256xi32>
    %cst_210 = arith.constant 0.000000e+00 : bf16
    %408 = vector.broadcast %cst_210 : bf16 to vector<8x256xbf16>
    %409 = vector.shape_cast %407 : vector<1x256xi1> to vector<1x256xi1>
    %410 = vector.broadcast %409 : vector<1x256xi1> to vector<8x256xi1>
    %411 = arith.select %410, %405, %408 : vector<8x256xi1>, vector<8x256xbf16>
    %c6_211 = arith.constant 6 : index
    %c0_212 = arith.constant 0 : index
    %c0_213 = arith.constant 0 : index
    %412 = vector.load %arg7[%c6_211, %c0_212, %c0_213] : memref<9x8x8xbf16, #tpu.memory_space<vmem>>, vector<1x8x8xbf16>
    %413 = vector.shape_cast %412 : vector<1x8x8xbf16> to vector<8x8xbf16>
    %cst_214 = arith.constant dense<0.000000e+00> : vector<8x256xf32>
    %414 = tpu.matmul %413, %411, %cst_214 {dimension_numbers = #tpu.dot_dimension_numbers<[1], [0], [0], [1], [0, 0, 1, 1], [], []>} : vector<8x8xbf16>, vector<8x256xbf16>, vector<8x256xf32> -> vector<8x256xf32>
    %415 = arith.addf %404, %414 : vector<8x256xf32>
    %416 = vector.extract_strided_slice %332 {offsets = [0, 33], sizes = [8, 256], strides = [1, 1]} : vector<8x290xbf16> to vector<8x256xbf16>
    %c7_215 = arith.constant 7 : index
    %c0_216 = arith.constant 0 : index
    %c0_217 = arith.constant 0 : index
    %417 = vector.load %arg7[%c7_215, %c0_216, %c0_217] : memref<9x8x8xbf16, #tpu.memory_space<vmem>>, vector<1x8x8xbf16>
    %418 = vector.shape_cast %417 : vector<1x8x8xbf16> to vector<8x8xbf16>
    %cst_218 = arith.constant dense<0.000000e+00> : vector<8x256xf32>
    %419 = tpu.matmul %418, %416, %cst_218 {dimension_numbers = #tpu.dot_dimension_numbers<[1], [0], [0], [1], [0, 0, 1, 1], [], []>} : vector<8x8xbf16>, vector<8x256xbf16>, vector<8x256xf32> -> vector<8x256xf32>
    %420 = arith.addf %415, %419 : vector<8x256xf32>
    %421 = vector.extract_strided_slice %332 {offsets = [0, 34], sizes = [8, 256], strides = [1, 1]} : vector<8x290xbf16> to vector<8x256xbf16>
    %c15_i32_219 = arith.constant 15 : i32
    %422 = vector.broadcast %c15_i32_219 : i32 to vector<1x256xi32>
    %423 = arith.cmpi slt, %349, %422 : vector<1x256xi32>
    %cst_220 = arith.constant 0.000000e+00 : bf16
    %424 = vector.broadcast %cst_220 : bf16 to vector<8x256xbf16>
    %425 = vector.shape_cast %423 : vector<1x256xi1> to vector<1x256xi1>
    %426 = vector.broadcast %425 : vector<1x256xi1> to vector<8x256xi1>
    %427 = arith.select %426, %421, %424 : vector<8x256xi1>, vector<8x256xbf16>
    %c8_221 = arith.constant 8 : index
    %c0_222 = arith.constant 0 : index
    %c0_223 = arith.constant 0 : index
    %428 = vector.load %arg7[%c8_221, %c0_222, %c0_223] : memref<9x8x8xbf16, #tpu.memory_space<vmem>>, vector<1x8x8xbf16>
    %429 = vector.shape_cast %428 : vector<1x8x8xbf16> to vector<8x8xbf16>
    %cst_224 = arith.constant dense<0.000000e+00> : vector<8x256xf32>
    %430 = tpu.matmul %429, %427, %cst_224 {dimension_numbers = #tpu.dot_dimension_numbers<[1], [0], [0], [1], [0, 0, 1, 1], [], []>} : vector<8x8xbf16>, vector<8x256xbf16>, vector<8x256xf32> -> vector<8x256xf32>
    %431 = arith.addf %420, %430 : vector<8x256xf32>
    %432 = arith.addf %330, %431 : vector<8x256xf32>
    %c0_225 = arith.constant 0 : index
    %c0_226 = arith.constant 0 : index
    %433 = vector.load %arg8[%c0_225, %c0_226] : memref<8x1xf32, #tpu.memory_space<vmem>>, vector<8x1xf32>
    %434 = vector.broadcast %433 : vector<8x1xf32> to vector<8x256xf32>
    %435 = arith.addf %432, %434 : vector<8x256xf32>
    %cst_227 = arith.constant 0.000000e+00 : f32
    %436 = vector.broadcast %cst_227 : f32 to vector<8x256xf32>
    %437 = arith.maximumf %435, %436 : vector<8x256xf32>
    %438 = arith.truncf %437 : vector<8x256xf32> to vector<8x256xbf16>
    %c0_228 = arith.constant 0 : index
    %c0_229 = arith.constant 0 : index
    %439 = vector.load %arg9[%c0_228, %c0_229] : memref<3x8xbf16, #tpu.memory_space<vmem>>, vector<3x8xbf16>
    %cst_230 = arith.constant dense<0.000000e+00> : vector<3x256xf32>
    %440 = tpu.matmul %439, %438, %cst_230 {dimension_numbers = #tpu.dot_dimension_numbers<[1], [0], [0], [1], [0, 0, 1, 1], [], []>} : vector<3x8xbf16>, vector<8x256xbf16>, vector<3x256xf32> -> vector<3x256xf32>
    %c0_231 = arith.constant 0 : index
    %c0_232 = arith.constant 0 : index
    %441 = vector.load %arg10[%c0_231, %c0_232] : memref<3x1xf32, #tpu.memory_space<vmem>>, vector<3x1xf32>
    %442 = vector.broadcast %441 : vector<3x1xf32> to vector<3x256xf32>
    %443 = arith.addf %440, %442 : vector<3x256xf32>
    %c0_233 = arith.constant 0 : index
    %c0_234 = arith.constant 0 : index
    %c0_235 = arith.constant 0 : index
    %444 = vector.load %arg13[%c0_233, %c0_234, %c0_235] : memref<1x3x256xf32, #tpu.memory_space<vmem>>, vector<1x3x256xf32>
    %445 = vector.shape_cast %444 : vector<1x3x256xf32> to vector<3x256xf32>
    %446 = vector.shape_cast %443 : vector<3x256xf32> to vector<1x3x256xf32>
    tpu.vector_store %arg13[%c0_233, %c0_234, %c0_235], %446 {strides = array<i32>} : memref<1x3x256xf32, #tpu.memory_space<vmem>>, vector<1x3x256xf32>,
    return
  }
  func.func @transform_0(%arg0: i32) -> (i32, i32, i32) {
    %c0_i32 = arith.constant 0 : i32
    %c0_i32_0 = arith.constant 0 : i32
    %c0_i32_1 = arith.constant 0 : i32
    return %arg0, %c0_i32, %c0_i32_0 : i32, i32, i32
  }
  func.func @transform_1(%arg0: i32) -> (i32, i32, i32) {
    %c0_i32 = arith.constant 0 : i32
    %c0_i32_0 = arith.constant 0 : i32
    %c0_i32_1 = arith.constant 0 : i32
    %c0_i32_2 = arith.constant 0 : i32
    return %c0_i32, %c0_i32_0, %c0_i32_1 : i32, i32, i32
  }
  func.func @transform_2(%arg0: i32) -> (i32, i32) {
    %c0_i32 = arith.constant 0 : i32
    %c0_i32_0 = arith.constant 0 : i32
    %c0_i32_1 = arith.constant 0 : i32
    return %c0_i32, %c0_i32_0 : i32, i32
  }
  func.func @transform_3(%arg0: i32) -> (i32, i32, i32) {
    %c0_i32 = arith.constant 0 : i32
    %c0_i32_0 = arith.constant 0 : i32
    %c0_i32_1 = arith.constant 0 : i32
    %c0_i32_2 = arith.constant 0 : i32
    return %c0_i32, %c0_i32_0, %c0_i32_1 : i32, i32, i32
  }
  func.func @transform_4(%arg0: i32) -> (i32, i32) {
    %c0_i32 = arith.constant 0 : i32
    %c0_i32_0 = arith.constant 0 : i32
    %c0_i32_1 = arith.constant 0 : i32
    return %c0_i32, %c0_i32_0 : i32, i32
  }
  func.func @transform_5(%arg0: i32) -> (i32, i32, i32) {
    %c0_i32 = arith.constant 0 : i32
    %c0_i32_0 = arith.constant 0 : i32
    %c0_i32_1 = arith.constant 0 : i32
    %c0_i32_2 = arith.constant 0 : i32
    return %c0_i32, %c0_i32_0, %c0_i32_1 : i32, i32, i32
  }
  func.func @transform_6(%arg0: i32) -> (i32, i32, i32) {
    %c0_i32 = arith.constant 0 : i32
    %c0_i32_0 = arith.constant 0 : i32
    %c0_i32_1 = arith.constant 0 : i32
    %c0_i32_2 = arith.constant 0 : i32
    return %c0_i32, %c0_i32_0, %c0_i32_1 : i32, i32, i32
  }
  func.func @transform_7(%arg0: i32) -> (i32, i32) {
    %c0_i32 = arith.constant 0 : i32
    %c0_i32_0 = arith.constant 0 : i32
    %c0_i32_1 = arith.constant 0 : i32
    return %c0_i32, %c0_i32_0 : i32, i32
  }
  func.func @transform_8(%arg0: i32) -> (i32, i32) {
    %c0_i32 = arith.constant 0 : i32
    %c0_i32_0 = arith.constant 0 : i32
    %c0_i32_1 = arith.constant 0 : i32
    return %c0_i32, %c0_i32_0 : i32, i32
  }
  func.func @transform_9(%arg0: i32) -> (i32, i32) {
    %c0_i32 = arith.constant 0 : i32
    %c0_i32_0 = arith.constant 0 : i32
    %c0_i32_1 = arith.constant 0 : i32
    return %c0_i32, %c0_i32_0 : i32, i32
  }
  func.func @transform_10(%arg0: i32) -> (i32, i32) {
    %c0_i32 = arith.constant 0 : i32
    %c0_i32_0 = arith.constant 0 : i32
    %c0_i32_1 = arith.constant 0 : i32
    return %c0_i32, %c0_i32_0 : i32, i32
  }
  func.func @transform_11(%arg0: i32) -> (i32, i32) {
    %c0_i32 = arith.constant 0 : i32
    %c0_i32_0 = arith.constant 0 : i32
    %c0_i32_1 = arith.constant 0 : i32
    return %c0_i32, %c0_i32_0 : i32, i32
  }
  func.func @transform_12(%arg0: i32) -> (i32, i32, i32) {
    %c0_i32 = arith.constant 0 : i32
    %c0_i32_0 = arith.constant 0 : i32
    %c0_i32_1 = arith.constant 0 : i32
    return %arg0, %c0_i32, %c0_i32_0 : i32, i32, i32
  }
}

</mosaic_0001>

<llo_original>
// kernel: custom_model_forward.1
$region0: #{custom_model_forward.1}
  #allocation0 [shape = 'u32[]', space=smem, size = 0x4, offset = 0x4, fixed_abs, tag = 'smem constant byte address 0x4 - core index']
  #allocation1 [shape = 'u32[144,128]{1,0:T(1,128)}', space=vmem, size = 0x12000, scoped, tag = 'internal scratch']
  %s0 = inlined_call_operand.vmem [shape: bf16[2,4,256], index: 0, kind: input, shape index: {}]
  %s1 = inlined_call_operand.vmem [shape: bf16[9,8,4], index: 1, kind: input, shape index: {}]
  %s2 = inlined_call_operand.vmem [shape: f32[8,1], index: 2, kind: input, shape index: {}]
  %s3 = inlined_call_operand.vmem [shape: bf16[9,16,8], index: 3, kind: input, shape index: {}]
  %s4 = inlined_call_operand.vmem [shape: f32[16,1], index: 4, kind: input, shape index: {}]
  %s5 = inlined_call_operand.vmem [shape: bf16[9,8,16], index: 5, kind: input, shape index: {}]
  %s6 = inlined_call_operand.vmem [shape: bf16[9,8,8], index: 6, kind: input, shape index: {}]
  %s7 = inlined_call_operand.vmem [shape: f32[8,1], index: 7, kind: input, shape index: {}]
  %s8 = inlined_call_operand.vmem [shape: bf16[3,8], index: 8, kind: input, shape index: {}]
  %s9 = inlined_call_operand.vmem [shape: f32[3,1], index: 9, kind: input, shape index: {}]
  %s10 = inlined_call_operand.vmem [shape: bf16[256,64], index: 10, kind: input, shape index: {}]
  %s11 = inlined_call_operand.vmem [shape: bf16[64,256], index: 11, kind: input, shape index: {}]
  %s12 = inlined_call_operand.vmem [shape: f32[2,3,256], index: 12, kind: output, shape index: {}]
  %s13 = sld [smem:[#allocation0]]
  $region81: #{custom_model_forward.1} parent=0
    _
  %s15 = ssub.s32 1, %s13
  %s16 = scalar_select 0, %s15, %s13
  loop: start=0, step=1, limit=4
  $region2: #{custom_model_forward.1} parent=0 // loop_pre_header
    _
  $region3: #{custom_model_forward.1} parent=0 // loop_header
    %s18 = sphi 0, %s22
    %p19 = scmp.ge.s32.totalorder %s18, 4
    %s28 = sphi 0, %s30
    %s31 = sphi 0, %s28
    %s32 = sphi 0, %s31
    %s48 = sphi 0, %s32
    %s52 = sphi 0, %s52
    %s54 = sphi 0, %s52
    %s55 = sphi 0, %s54
    %s69 = sphi 0, %s55
    %s73 = sphi 0, %s73
    %s75 = sphi 0, %s73
    %s76 = sphi 0, %s75
    %s90 = sphi 0, %s76
    %s94 = sphi 0, %s94
    %s96 = sphi 0, %s94
    %s97 = sphi 0, %s96
    %s111 = sphi 0, %s97
    %s115 = sphi 0, %s115
    %s117 = sphi 0, %s115
    %s118 = sphi 0, %s117
    %s132 = sphi 0, %s118
    %s136 = sphi 0, %s136
    %s138 = sphi 0, %s136
    %s139 = sphi 0, %s138
    %s153 = sphi 0, %s139
    %s157 = sphi 0, %s157
    %s159 = sphi 0, %s157
    %s160 = sphi 0, %s159
    %s174 = sphi 0, %s160
    %s178 = sphi 0, %s178
    %s180 = sphi 0, %s178
    %s181 = sphi 0, %s180
    %s195 = sphi 0, %s181
    %s199 = sphi 0, %s199
    %s201 = sphi 0, %s199
    %s202 = sphi 0, %s201
    %s216 = sphi 0, %s202
    %s220 = sphi 0, %s220
    %s222 = sphi 0, %s220
    %s223 = sphi 0, %s222
    %s237 = sphi 0, %s223
    %s241 = sphi 0, %s241
    %s243 = sphi 0, %s241
    %s244 = sphi 0, %s243
    %s258 = sphi 0, %s244
    %s262 = sphi 0, %s262
    %s264 = sphi 0, %s262
    %s265 = sphi 0, %s264
    %s279 = sphi 0, %s265
    %s285 = sphi 0, %s287
    %s288 = sphi 0, %s285
    %s289 = sphi 0, %s288
    %s305 = sphi 0, %s289
  $region4: #{custom_model_forward.1} parent=0 // loop_header_branch
    %21 = sbr.rel (%p19) target = $region8
  $region5: #{custom_model_forward.1} parent=0 // loop_body
    %s23 = ssub.s32 %s18, 1
    %s24 = ssub.s32 %s18, 2
    %s25 = sadd.s32 %s18, 1
    %s26 = ssub.s32 %s18, %s25
    %p27 = scmp.eq.s32.totalorder %s26, 0
    %s29 = sadd.s32 %s28, 1
    %s30 = scalar_select %p27, %s28, %s29
    %p33 = pneg %p27
    %p34 = scmp.eq.s32.totalorder %s18, 1
    %p35 = por %p33, %p34
    %p36 = scmp.ne.s32.totalorder %s28, %s31
    %p37 = scmp.eq.s32.totalorder %s18, 0
    %p38 = por %p36, %p37
    %p39 = scmp.ne.s32.totalorder %s28, %s31
    %p40 = scmp.eq.s32.totalorder %s23, 1
    %p41 = por %p39, %p40
    %p42 = scmp.ne.s32.totalorder %s31, %s32
    %p43 = scmp.eq.s32.totalorder %s23, 0
    %p44 = por %p42, %p43
    %p45 = scmp.ne.s32.totalorder %s31, %s32
    %p46 = scmp.eq.s32.totalorder %s24, 1
    %p47 = por %p45, %p46
    %p49 = scmp.ne.s32.totalorder %s32, %s48
    %p50 = scmp.eq.s32.totalorder %s24, 0
    %p51 = por %p49, %p50
    %s53 = sadd.s32 %s52, 1
    %p56 = scmp.eq.s32.totalorder %s18, 1
    %p57 = scmp.ne.s32.totalorder %s52, %s54
    %p58 = scmp.eq.s32.totalorder %s18, 0
    %p59 = por %p57, %p58
    %p60 = scmp.ne.s32.totalorder %s52, %s54
    %p61 = scmp.eq.s32.totalorder %s23, 1
    %p62 = por %p60, %p61
    %p63 = scmp.ne.s32.totalorder %s54, %s55
    %p64 = scmp.eq.s32.totalorder %s23, 0
    %p65 = por %p63, %p64
    %p66 = scmp.ne.s32.totalorder %s54, %s55
    %p67 = scmp.eq.s32.totalorder %s24, 1
    %p68 = por %p66, %p67
    %p70 = scmp.ne.s32.totalorder %s55, %s69
    %p71 = scmp.eq.s32.totalorder %s24, 0
    %p72 = por %p70, %p71
    %s74 = sadd.s32 %s73, 1
    %p77 = scmp.eq.s32.totalorder %s18, 1
    %p78 = scmp.ne.s32.totalorder %s73, %s75
    %p79 = scmp.eq.s32.totalorder %s18, 0
    %p80 = por %p78, %p79
    %p81 = scmp.ne.s32.totalorder %s73, %s75
    %p82 = scmp.eq.s32.totalorder %s23, 1
    %p83 = por %p81, %p82
    %p84 = scmp.ne.s32.totalorder %s75, %s76
    %p85 = scmp.eq.s32.totalorder %s23, 0
    %p86 = por %p84, %p85
    %p87 = scmp.ne.s32.totalorder %s75, %s76
    %p88 = scmp.eq.s32.totalorder %s24, 1
    %p89 = por %p87, %p88
    %p91 = scmp.ne.s32.totalorder %s76, %s90
    %p92 = scmp.eq.s32.totalorder %s24, 0
    %p93 = por %p91, %p92
    %s95 = sadd.s32 %s94, 1
    %p98 = scmp.eq.s32.totalorder %s18, 1
    %p99 = scmp.ne.s32.totalorder %s94, %s96
    %p100 = scmp.eq.s32.totalorder %s18, 0
    %p101 = por %p99, %p100
    %p102 = scmp.ne.s32.totalorder %s94, %s96
    %p103 = scmp.eq.s32.totalorder %s23, 1
    %p104 = por %p102, %p103
    %p105 = scmp.ne.s32.totalorder %s96, %s97
    %p106 = scmp.eq.s32.totalorder %s23, 0
    %p107 = por %p105, %p106
    %p108 = scmp.ne.s32.totalorder %s96, %s97
    %p109 = scmp.eq.s32.totalorder %s24, 1
    %p110 = por %p108, %p109
    %p112 = scmp.ne.s32.totalorder %s97, %s111
    %p113 = scmp.eq.s32.totalorder %s24, 0
    %p114 = por %p112, %p113
    %s116 = sadd.s32 %s115, 1
    %p119 = scmp.eq.s32.totalorder %s18, 1
    %p120 = scmp.ne.s32.totalorder %s115, %s117
    %p121 = scmp.eq.s32.totalorder %s18, 0
    %p122 = por %p120, %p121
    %p123 = scmp.ne.s32.totalorder %s115, %s117
    %p124 = scmp.eq.s32.totalorder %s23, 1
    %p125 = por %p123, %p124
    %p126 = scmp.ne.s32.totalorder %s117, %s118
    %p127 = scmp.eq.s32.totalorder %s23, 0
    %p128 = por %p126, %p127
    %p129 = scmp.ne.s32.totalorder %s117, %s118
    %p130 = scmp.eq.s32.totalorder %s24, 1
    %p131 = por %p129, %p130
    %p133 = scmp.ne.s32.totalorder %s118, %s132
    %p134 = scmp.eq.s32.totalorder %s24, 0
    %p135 = por %p133, %p134
    %s137 = sadd.s32 %s136, 1
    %p140 = scmp.eq.s32.totalorder %s18, 1
    %p141 = scmp.ne.s32.totalorder %s136, %s138
    %p142 = scmp.eq.s32.totalorder %s18, 0
    %p143 = por %p141, %p142
    %p144 = scmp.ne.s32.totalorder %s136, %s138
    %p145 = scmp.eq.s32.totalorder %s23, 1
    %p146 = por %p144, %p145
    %p147 = scmp.ne.s32.totalorder %s138, %s139
    %p148 = scmp.eq.s32.totalorder %s23, 0
    %p149 = por %p147, %p148
    %p150 = scmp.ne.s32.totalorder %s138, %s139
    %p151 = scmp.eq.s32.totalorder %s24, 1
    %p152 = por %p150, %p151
    %p154 = scmp.ne.s32.totalorder %s139, %s153
    %p155 = scmp.eq.s32.totalorder %s24, 0
    %p156 = por %p154, %p155
    %s158 = sadd.s32 %s157, 1
    %p161 = scmp.eq.s32.totalorder %s18, 1
    %p162 = scmp.ne.s32.totalorder %s157, %s159
    %p163 = scmp.eq.s32.totalorder %s18, 0
    %p164 = por %p162, %p163
    %p165 = scmp.ne.s32.totalorder %s157, %s159
    %p166 = scmp.eq.s32.totalorder %s23, 1
    %p167 = por %p165, %p166
    %p168 = scmp.ne.s32.totalorder %s159, %s160
    %p169 = scmp.eq.s32.totalorder %s23, 0
    %p170 = por %p168, %p169
    %p171 = scmp.ne.s32.totalorder %s159, %s160
    %p172 = scmp.eq.s32.totalorder %s24, 1
    %p173 = por %p171, %p172
    %p175 = scmp.ne.s32.totalorder %s160, %s174
    %p176 = scmp.eq.s32.totalorder %s24, 0
    %p177 = por %p175, %p176
    %s179 = sadd.s32 %s178, 1
    %p182 = scmp.eq.s32.totalorder %s18, 1
    %p183 = scmp.ne.s32.totalorder %s178, %s180
    %p184 = scmp.eq.s32.totalorder %s18, 0
    %p185 = por %p183, %p184
    %p186 = scmp.ne.s32.totalorder %s178, %s180
    %p187 = scmp.eq.s32.totalorder %s23, 1
    %p188 = por %p186, %p187
    %p189 = scmp.ne.s32.totalorder %s180, %s181
    %p190 = scmp.eq.s32.totalorder %s23, 0
    %p191 = por %p189, %p190
    %p192 = scmp.ne.s32.totalorder %s180, %s181
    %p193 = scmp.eq.s32.totalorder %s24, 1
    %p194 = por %p192, %p193
    %p196 = scmp.ne.s32.totalorder %s181, %s195
    %p197 = scmp.eq.s32.totalorder %s24, 0
    %p198 = por %p196, %p197
    %s200 = sadd.s32 %s199, 1
    %p203 = scmp.eq.s32.totalorder %s18, 1
    %p204 = scmp.ne.s32.totalorder %s199, %s201
    %p205 = scmp.eq.s32.totalorder %s18, 0
    %p206 = por %p204, %p205
    %p207 = scmp.ne.s32.totalorder %s199, %s201
    %p208 = scmp.eq.s32.totalorder %s23, 1
    %p209 = por %p207, %p208
    %p210 = scmp.ne.s32.totalorder %s201, %s202
    %p211 = scmp.eq.s32.totalorder %s23, 0
    %p212 = por %p210, %p211
    %p213 = scmp.ne.s32.totalorder %s201, %s202
    %p214 = scmp.eq.s32.totalorder %s24, 1
    %p215 = por %p213, %p214
    %p217 = scmp.ne.s32.totalorder %s202, %s216
    %p218 = scmp.eq.s32.totalorder %s24, 0
    %p219 = por %p217, %p218
    %s221 = sadd.s32 %s220, 1
    %p224 = scmp.eq.s32.totalorder %s18, 1
    %p225 = scmp.ne.s32.totalorder %s220, %s222
    %p226 = scmp.eq.s32.totalorder %s18, 0
    %p227 = por %p225, %p226
    %p228 = scmp.ne.s32.totalorder %s220, %s222
    %p229 = scmp.eq.s32.totalorder %s23, 1
    %p230 = por %p228, %p229
    %p231 = scmp.ne.s32.totalorder %s222, %s223
    %p232 = scmp.eq.s32.totalorder %s23, 0
    %p233 = por %p231, %p232
    %p234 = scmp.ne.s32.totalorder %s222, %s223
    %p235 = scmp.eq.s32.totalorder %s24, 1
    %p236 = por %p234, %p235
    %p238 = scmp.ne.s32.totalorder %s223, %s237
    %p239 = scmp.eq.s32.totalorder %s24, 0
    %p240 = por %p238, %p239
    %s242 = sadd.s32 %s241, 1
    %p245 = scmp.eq.s32.totalorder %s18, 1
    %p246 = scmp.ne.s32.totalorder %s241, %s243
    %p247 = scmp.eq.s32.totalorder %s18, 0
    %p248 = por %p246, %p247
    %p249 = scmp.ne.s32.totalorder %s241, %s243
    %p250 = scmp.eq.s32.totalorder %s23, 1
    %p251 = por %p249, %p250
    %p252 = scmp.ne.s32.totalorder %s243, %s244
    %p253 = scmp.eq.s32.totalorder %s23, 0
    %p254 = por %p252, %p253
    %p255 = scmp.ne.s32.totalorder %s243, %s244
    %p256 = scmp.eq.s32.totalorder %s24, 1
    %p257 = por %p255, %p256
    %p259 = scmp.ne.s32.totalorder %s244, %s258
    %p260 = scmp.eq.s32.totalorder %s24, 0
    %p261 = por %p259, %p260
    %s263 = sadd.s32 %s262, 1
    %p266 = scmp.eq.s32.totalorder %s18, 1
    %p267 = scmp.ne.s32.totalorder %s262, %s264
    %p268 = scmp.eq.s32.totalorder %s18, 0
    %p269 = por %p267, %p268
    %p270 = scmp.ne.s32.totalorder %s262, %s264
    %p271 = scmp.eq.s32.totalorder %s23, 1
    %p272 = por %p270, %p271
    %p273 = scmp.ne.s32.totalorder %s264, %s265
    %p274 = scmp.eq.s32.totalorder %s23, 0
    %p275 = por %p273, %p274
    %p276 = scmp.ne.s32.totalorder %s264, %s265
    %p277 = scmp.eq.s32.totalorder %s24, 1
    %p278 = por %p276, %p277
    %p280 = scmp.ne.s32.totalorder %s265, %s279
    %p281 = scmp.eq.s32.totalorder %s24, 0
    %p282 = por %p280, %p281
    %s283 = ssub.s32 %s18, %s25
    %p284 = scmp.eq.s32.totalorder %s283, 0
    %s286 = sadd.s32 %s285, 1
    %s287 = scalar_select %p284, %s285, %s286
    %p290 = pneg %p284
    %p291 = scmp.eq.s32.totalorder %s18, 1
    %p292 = por %p290, %p291
    %p293 = scmp.ne.s32.totalorder %s285, %s288
    %p294 = scmp.eq.s32.totalorder %s18, 0
    %p295 = por %p293, %p294
    %p296 = scmp.ne.s32.totalorder %s285, %s288
    %p297 = scmp.eq.s32.totalorder %s23, 1
    %p298 = por %p296, %p297
    %p299 = scmp.ne.s32.totalorder %s288, %s289
    %p300 = scmp.eq.s32.totalorder %s23, 0
    %p301 = por %p299, %p300
    %p302 = scmp.ne.s32.totalorder %s288, %s289
    %p303 = scmp.eq.s32.totalorder %s24, 1
    %p304 = por %p302, %p303
    %p306 = scmp.ne.s32.totalorder %s289, %s305
    %p307 = scmp.eq.s32.totalorder %s24, 0
    %p308 = por %p306, %p307
    %p309 = scmp.le.s32.totalorder 1, %s18
    %p310 = scmp.lt.s32.totalorder %s18, 3
    %p311 = pnand %p309, %p310
    %p312 = pneg %p311
    // Predicated region
    $region9: #{custom_model_forward.1} parent=5 // pred_check
      _
    $region10: #{custom_model_forward.1} parent=5 // pred_check_branch
      %314 = sbr.rel (%p311) target = $region12
    $region11: #{custom_model_forward.1} parent=5 // pred_region
      %s315 = ssub.s32 %s18, 1
      // Predicated region
      $region13: #{custom_model_forward.1} parent=11 // pred_check
        %p316 = pneg %p65
      $region14: #{custom_model_forward.1} parent=11 // pred_check_branch
        %318 = sbr.rel (%p316) target = $region16
      $region15: #{custom_model_forward.1} parent=11 // pred_region
        _
      $region16: #{custom_model_forward.1} parent=11 // pred_fallthru
        _
      // Predicated region
      $region17: #{custom_model_forward.1} parent=11 // pred_check
        %p319 = pneg %p86
      $region18: #{custom_model_forward.1} parent=11 // pred_check_branch
        %321 = sbr.rel (%p319) target = $region20
      $region19: #{custom_model_forward.1} parent=11 // pred_region
        _
      $region20: #{custom_model_forward.1} parent=11 // pred_fallthru
        _
      // Predicated region
      $region21: #{custom_model_forward.1} parent=11 // pred_check
        %p322 = pneg %p107
      $region22: #{custom_model_forward.1} parent=11 // pred_check_branch
        %324 = sbr.rel (%p322) target = $region24
      $region23: #{custom_model_forward.1} parent=11 // pred_region
        _
      $region24: #{custom_model_forward.1} parent=11 // pred_fallthru
        _
      // Predicated region
      $region25: #{custom_model_forward.1} parent=11 // pred_check
        %p325 = pneg %p128
      $region26: #{custom_model_forward.1} parent=11 // pred_check_branch
        %327 = sbr.rel (%p325) target = $region28
      $region27: #{custom_model_forward.1} parent=11 // pred_region
        _
      $region28: #{custom_model_forward.1} parent=11 // pred_fallthru
        _
      // Predicated region
      $region29: #{custom_model_forward.1} parent=11 // pred_check
        %p328 = pneg %p149
      $region30: #{custom_model_forward.1} parent=11 // pred_check_branch
        %330 = sbr.rel (%p328) target = $region32
      $region31: #{custom_model_forward.1} parent=11 // pred_region
        _
      $region32: #{custom_model_forward.1} parent=11 // pred_fallthru
        _
      // Predicated region
      $region33: #{custom_model_forward.1} parent=11 // pred_check
        %p331 = pneg %p170
      $region34: #{custom_model_forward.1} parent=11 // pred_check_branch
        %333 = sbr.rel (%p331) target = $region36
      $region35: #{custom_model_forward.1} parent=11 // pred_region
        _
      $region36: #{custom_model_forward.1} parent=11 // pred_fallthru
        _
      // Predicated region
      $region37: #{custom_model_forward.1} parent=11 // pred_check
        %p334 = pneg %p191
      $region38: #{custom_model_forward.1} parent=11 // pred_check_branch
        %336 = sbr.rel (%p334) target = $region40
      $region39: #{custom_model_forward.1} parent=11 // pred_region
        _
      $region40: #{custom_model_forward.1} parent=11 // pred_fallthru
        _
      // Predicated region
      $region41: #{custom_model_forward.1} parent=11 // pred_check
        %p337 = pneg %p212
      $region42: #{custom_model_forward.1} parent=11 // pred_check_branch
        %339 = sbr.rel (%p337) target = $region44
      $region43: #{custom_model_forward.1} parent=11 // pred_region
        _
      $region44: #{custom_model_forward.1} parent=11 // pred_fallthru
        _
      // Predicated region
      $region45: #{custom_model_forward.1} parent=11 // pred_check
        %p340 = pneg %p233
      $region46: #{custom_model_forward.1} parent=11 // pred_check_branch
        %342 = sbr.rel (%p340) target = $region48
      $region47: #{custom_model_forward.1} parent=11 // pred_region
        _
      $region48: #{custom_model_forward.1} parent=11 // pred_fallthru
        _
      // Predicated region
      $region49: #{custom_model_forward.1} parent=11 // pred_check
        %p343 = pneg %p254
      $region50: #{custom_model_forward.1} parent=11 // pred_check_branch
        %345 = sbr.rel (%p343) target = $region52
      $region51: #{custom_model_forward.1} parent=11 // pred_region
        _
      $region52: #{custom_model_forward.1} parent=11 // pred_fallthru
        _
      // Predicated region
      $region53: #{custom_model_forward.1} parent=11 // pred_check
        %p346 = pneg %p275
      $region54: #{custom_model_forward.1} parent=11 // pred_check_branch
        %348 = sbr.rel (%p346) target = $region56
      $region55: #{custom_model_forward.1} parent=11 // pred_region
        _
      $region56: #{custom_model_forward.1} parent=11 // pred_fallthru
        _
    $region12: #{custom_model_forward.1} parent=5 // pred_fallthru
      _
    %p349 = scmp.lt.s32.totalorder %s18, 2
    // Predicated region
    $region57: #{custom_model_forward.1} parent=5 // pred_check
      %p350 = pneg %p349
    $region58: #{custom_model_forward.1} parent=5 // pred_check_branch
      %352 = sbr.rel (%p350) target = $region60
    $region59: #{custom_model_forward.1} parent=5 // pred_region
      // Predicated region
      $region61: #{custom_model_forward.1} parent=59 // pred_check
        %p353 = pneg %p38
      $region62: #{custom_model_forward.1} parent=59 // pred_check_branch
        %355 = sbr.rel (%p353) target = $region64
      $region63: #{custom_model_forward.1} parent=59 // pred_region
        %p356 = scmp.lt.s32.totalorder %s18, 1
        %s357 = scalar_select %p356, %s18, 1
        %s358 = smul.addr %s357, 2
        %s359 = smul.addr %s358, 2
        %s360 = scalar_lea.vmem %s0, %s359
      $region64: #{custom_model_forward.1} parent=59 // pred_fallthru
        _
    $region60: #{custom_model_forward.1} parent=5 // pred_fallthru
      _
    %p361 = scmp.le.s32.totalorder 1, %s18
    %p362 = scmp.lt.s32.totalorder %s18, 3
    %p363 = pnand %p361, %p362
    %p364 = pneg %p363
    // Predicated region
    $region65: #{custom_model_forward.1} parent=5 // pred_check
      _
    $region66: #{custom_model_forward.1} parent=5 // pred_check_branch
      %366 = sbr.rel (%p363) target = $region68
    $region67: #{custom_model_forward.1} parent=5 // pred_region
      %s367 = ssub.s32 %s18, 1
      %p368 = scmp.lt.s32.totalorder %s23, 1
      %s369 = scalar_select %p368, %s23, 1
      %s370 = smul.addr %s369, 2
      %s371 = smul.addr %s370, 2
      %s372 = scalar_lea.vmem %s0, %s371
      %p373 = pneg %p44
      %p374 = pneg %p41
      %p375 = pneg %p65
      %p376 = pneg %p62
      %p377 = pneg %p86
      %p378 = pneg %p83
      %p379 = pneg %p107
      %p380 = pneg %p104
      %p381 = pneg %p128
      %p382 = pneg %p125
      %p383 = pneg %p149
      %p384 = pneg %p146
      %p385 = pneg %p170
      %p386 = pneg %p167
      %p387 = pneg %p191
      %p388 = pneg %p188
      %p389 = pneg %p212
      %p390 = pneg %p209
      %p391 = pneg %p233
      %p392 = pneg %p230
      %p393 = pneg %p254
      %p394 = pneg %p251
      %p395 = pneg %p275
      %p396 = pneg %p272
      %p397 = pneg %p301
      %p398 = pneg %p298
      %p399 = scmp.lt.s32.totalorder %s23, 1
      %s400 = scalar_select %p399, %s23, 1
      %s401 = smul.addr %s400, 2
      %s402 = smul.addr %s401, 4
      %s403 = scalar_lea.vmem %s12, %s402
      %p404 = scmp.lt.s32.totalorder %s23, 1
      %s405 = scalar_select %p404, %s23, 1
      %s406 = smul.addr %s405, 2
      %s407 = smul.addr %s406, 2
      %s408 = scalar_lea.vmem %s0, %s407
      %p409 = scmp.lt.s32.totalorder %s23, 1
      %s410 = scalar_select %p409, %s23, 1
      %s411 = smul.addr %s410, 2
      %s412 = smul.addr %s411, 4
      %s413 = scalar_lea.vmem %s12, %s412
      %v417 = vld [vmem:[%s408] sm:$0xf]
      %v420 = vunpack.c.l.s4 1983009808
      %v421 = vunpack.c.0.s8 %v420
      %v422 = vlaneseq
      %v423 = vshrl.u32 %v422, 7
      %v424 = vsub.s32 %v421, %v423
      %v425 = vrot.slane %v417, %v424
      %v426 = vcombine.high %v425, %v425
      %427 = vrot.lane.b32.xlu0 %v425, 17
      %v428 = vpop.permute.xlu0 %427
      %429 = vrot.lane.b32.xlu0 %v426, 17
      %v430 = vpop.permute.xlu0 %429
      %vm431 = vcmask 138240
      %v432 = vsel %vm431, %v428, %v430
      %vm434 = vcmask 138240
      %v437 = vsel %vm434, 0, %v428
      %v440 = vsel %vm434, %v430, 0
      %v442 = vlaneseq
      %v443 = vand.u32 %v442, 127
      %v444 = vadd.s32 %v443, 128
      %vm445 = vcmp.lt.s32.totalorder %v443, 0
      %v446 = vsub.s32 0, %v443
      %v447 = vsel %vm445, %v446, %v443
      %v448 = vshrl.u32 %v447, 4
      %v449 = vand.u32 %v447, 15
      %v450 = vsub.s32 0, %v449
      %v451 = vsel %vm445, %v450, %v449
      %vm452 = vcmp.lt.s32.totalorder %v444, 0
      %v453 = vsub.s32 0, %v444
      %v454 = vsel %vm452, %v453, %v444
      %v455 = vshrl.u32 %v454, 4
      %v456 = vand.u32 %v454, 15
      %v457 = vsub.s32 0, %v456
      %v458 = vsel %vm452, %v457, %v456
      %vm459 = vcmp.ne.s32.totalorder %v451, 0
      %vm460 = vcmp.ne.s32.totalorder %v458, 0
      %vm461 = vcmp.lt.s32.totalorder %v451, 0
      %vm462 = vcmp.lt.s32.totalorder %v458, 0
      %vm463 = vmand %vm461, %vm459
      %vm464 = vmand %vm462, %vm460
      %v465 = vadd.s32 %v451, 16
      %v466 = vadd.s32 %v458, 16
      %v467 = vsel %vm463, %v465, %v451
      %v468 = vsel %vm464, %v466, %v458
      %vm469 = vcmp.ge.s32.totalorder %v467, 1
      %vm470 = vcmp.ge.s32.totalorder %v468, 1
      %v471 = vsel %vm469, 1, 0
      %v472 = vsel %vm470, 1, 0
      %vm473 = vcmp.eq.s32.totalorder %v471, 1
      %vm474 = vcmp.eq.s32.totalorder %v472, 1
      %vm475 = vmpackc.low %vm474, %vm473
      %v476 = vsel %vm475, 65537, 0
      %v477 = vlaneseq
      %v478 = vshrl.u32 %v477, 7
      %v479 = vsub.s32 0, %v478
      %v480 = vrot.slane %v476, %v479
      %v481 = vlaneseq
      %v482 = vshrl.u32 %v481, 7
      %v483 = vsub.s32 4, %v482
      %v484 = vrot.slane %v476, %v483
      %vm485 = vcmp.ne.s16.totalorder %v480, 0
      %vm486 = vcmp.ne.s16.totalorder %v484, 0
      %v487 = vsel %vm485, %v437, 0
      %v488 = vsel %vm486, %v432, 0
      %v489 = vld [vmem:[%s1] sm:$0xf]
      %s490 = scalar_lea.vmem %s1, 4
      %v491 = vld [vmem:[%s490] sm:$0xf]
      %494 = vrot.lane.b32.xlu0 %v437, 127
      %v495 = vpop.permute.xlu0 %494
      %496 = vrot.lane.b32.xlu0 %v432, 127
      %v497 = vpop.permute.xlu0 %496
      %498 = vrot.lane.b32.xlu0 %v440, 127
      %v499 = vpop.permute.xlu0 %498
      %vm500 = vcmask 1039360
      %v501 = vsel %vm500, %v495, %v497
      %v502 = vsel %vm500, %v497, %v499
      %vm503 = vcmask 31744
      %v505 = vsel %vm503, %v491, 0
      %vm507 = vcmask 1041408
      %v509 = vsel %vm507, %v501, 0
      %v512 = vsel %vm507, %v502, 0
      %514 = vmatprep.subr.bf16.mxu0 %v512
      %515 = vmatpush1.bf16.msra.mxu0 %v509
      %516 = vmatprep.subr.bf16.mxu0 0
      %517 = vmatpush1.bf16.msra.mxu0 0
      %518 = vmatprep.subr.bf16.mxu0 0
      %519 = vmatpush1.bf16.msra.mxu0 0
      %520 = vmatprep.subr.bf16.mxu0 0
      %521 = vmatpush1.bf16.msra.mxu0 0
      %522 = vmatprep.subr.bf16.mxu0 0
      %523 = vmatpush1.bf16.msra.mxu0 0
      %524 = vmatprep.subr.bf16.mxu0 0
      %525 = vmatpush1.bf16.msra.mxu0 0
      %526 = vmatprep.subr.bf16.mxu0 0
      %527 = vmatpush1.bf16.msra.mxu0 0
      %528 = vmatprep.subr.bf16.mxu0 0
      %529 = vmatpush1.bf16.msra.mxu0 0
      %530 = vmatprep.subr.bf16.mxu0 0
      %531 = vmatpush1.bf16.msra.mxu0 0
      %532 = vmatprep.subr.bf16.mxu0 0
      %533 = vmatpush1.bf16.msra.mxu0 0
      %534 = vmatprep.subr.bf16.mxu0 0
      %535 = vmatpush1.bf16.msra.mxu0 0
      %536 = vmatprep.subr.bf16.mxu0 0
      %537 = vmatpush1.bf16.msra.mxu0 0
      %538 = vmatprep.subr.bf16.mxu0 0
      %539 = vmatpush1.bf16.msra.mxu0 0
      %540 = vmatprep.subr.bf16.mxu0 0
      %541 = vmatpush1.bf16.msra.mxu0 0
      %542 = vmatprep.subr.bf16.mxu0 0
      %543 = vmatpush1.bf16.msra.mxu0 0
      %544 = vmatprep.subr.bf16.mxu0 0
      %545 = vmatpush1.bf16.msra.mxu0 0
      %546 = vmatprep.mubr.bf16.mxu0 0
      %547 = vmatmul.mubr.bf16.gmra.mrb[0].mxu0 %v505
      %v548 = vpop.f32.mrb[0].mxu0
      %v549 = vadd.f32 0.0, %v548
      %v550 = vpop.f32.mrb[0].mxu0
      %v551 = vadd.f32 0.0, %v550
      %v552 = vpop.f32.mrb[0].mxu0
      %v553 = vpop.f32.mrb[0].mxu0
      %554 = vdwg.mxu0
      %v556 = vsel %vm503, %v489, 0
      %v559 = vsel %vm507, %v487, 0
      %v562 = vsel %vm507, %v488, 0
      %564 = vmatprep.subr.bf16.mxu0 %v562
      %565 = vmatpush1.bf16.msra.mxu0 %v559
      %566 = vmatprep.subr.bf16.mxu0 0
      %567 = vmatpush1.bf16.msra.mxu0 0
      %568 = vmatprep.subr.bf16.mxu0 0
      %569 = vmatpush1.bf16.msra.mxu0 0
      %570 = vmatprep.subr.bf16.mxu0 0
      %571 = vmatpush1.bf16.msra.mxu0 0
      %572 = vmatprep.subr.bf16.mxu0 0
      %573 = vmatpush1.bf16.msra.mxu0 0
      %574 = vmatprep.subr.bf16.mxu0 0
      %575 = vmatpush1.bf16.msra.mxu0 0
      %576 = vmatprep.subr.bf16.mxu0 0
      %577 = vmatpush1.bf16.msra.mxu0 0
      %578 = vmatprep.subr.bf16.mxu0 0
      %579 = vmatpush1.bf16.msra.mxu0 0
      %580 = vmatprep.subr.bf16.mxu0 0
      %581 = vmatpush1.bf16.msra.mxu0 0
      %582 = vmatprep.subr.bf16.mxu0 0
      %583 = vmatpush1.bf16.msra.mxu0 0
      %584 = vmatprep.subr.bf16.mxu0 0
      %585 = vmatpush1.bf16.msra.mxu0 0
      %586 = vmatprep.subr.bf16.mxu0 0
      %587 = vmatpush1.bf16.msra.mxu0 0
      %588 = vmatprep.subr.bf16.mxu0 0
      %589 = vmatpush1.bf16.msra.mxu0 0
      %590 = vmatprep.subr.bf16.mxu0 0
      %591 = vmatpush1.bf16.msra.mxu0 0
      %592 = vmatprep.subr.bf16.mxu0 0
      %593 = vmatpush1.bf16.msra.mxu0 0
      %594 = vmatprep.subr.bf16.mxu0 0
      %595 = vmatpush1.bf16.msra.mxu0 0
      %596 = vmatprep.mubr.bf16.mxu0 0
      %597 = vmatmul.mubr.bf16.gmra.mrb[0].mxu0 %v556
      %v598 = vpop.f32.mrb[0].mxu0
      %v599 = vadd.f32 %v549, %v598
      %v600 = vpop.f32.mrb[0].mxu0
      %v601 = vadd.f32 %v551, %v600
      %v602 = vpop.f32.mrb[0].mxu0
      %v603 = vpop.f32.mrb[0].mxu0
      %604 = vdwg.mxu0
      %vm605 = vcmp.lt.s32.totalorder %v467, 15
      %vm606 = vcmp.lt.s32.totalorder %v468, 15
      %v607 = vsel %vm605, 1, 0
      %v608 = vsel %vm606, 1, 0
      %vm609 = vcmp.eq.s32.totalorder %v607, 1
      %vm610 = vcmp.eq.s32.totalorder %v608, 1
      %vm611 = vmpackc.low %vm610, %vm609
      %v612 = vsel %vm611, 65537, 0
      %v613 = vlaneseq
      %v614 = vshrl.u32 %v613, 7
      %v615 = vsub.s32 0, %v614
      %v616 = vrot.slane %v612, %v615
      %v617 = vlaneseq
      %v618 = vshrl.u32 %v617, 7
      %v619 = vsub.s32 4, %v618
      %v620 = vrot.slane %v612, %v619
      %621 = vrot.lane.b32.xlu0 %v616, 2
      %v622 = vpop.permute.xlu0 %621
      %623 = vrot.lane.b32.xlu0 %v620, 2
      %v624 = vpop.permute.xlu0 %623
      %vm625 = vcmask 15360
      %v626 = vsel %vm625, %v622, %v624
      %vm627 = vcmp.ne.s16.totalorder %v622, 0
      %vm628 = vcmp.ne.s16.totalorder %v626, 0
      %vm629 = vcmp.ne.s16.totalorder %v624, 0
      %v630 = vsel %vm627, %v437, 0
      %v631 = vsel %vm628, %v432, 0
      %v632 = vsel %vm629, %v440, 0
      %s633 = scalar_lea.vmem %s1, 8
      %v634 = vld [vmem:[%s633] sm:$0xf]
      %638 = vrot.lane.b32.xlu0 %v630, 126
      %v639 = vpop.permute.xlu0 %638
      %640 = vrot.lane.b32.xlu0 %v631, 126
      %v641 = vpop.permute.xlu0 %640
      %642 = vrot.lane.b32.xlu0 %v632, 126
      %v643 = vpop.permute.xlu0 %642
      %vm644 = vcmask 1031168
      %v645 = vsel %vm644, %v639, %v641
      %v646 = vsel %vm644, %v641, %v643
      %v648 = vsel %vm503, %v634, 0
      %v651 = vsel %vm507, %v645, 0
      %v654 = vsel %vm507, %v646, 0
      %656 = vmatprep.subr.bf16.mxu0 %v654
      %657 = vmatpush1.bf16.msra.mxu0 %v651
      %658 = vmatprep.subr.bf16.mxu0 0
      %659 = vmatpush1.bf16.msra.mxu0 0
      %660 = vmatprep.subr.bf16.mxu0 0
      %661 = vmatpush1.bf16.msra.mxu0 0
      %662 = vmatprep.subr.bf16.mxu0 0
      %663 = vmatpush1.bf16.msra.mxu0 0
      %664 = vmatprep.subr.bf16.mxu0 0
      %665 = vmatpush1.bf16.msra.mxu0 0
      %666 = vmatprep.subr.bf16.mxu0 0
      %667 = vmatpush1.bf16.msra.mxu0 0
      %668 = vmatprep.subr.bf16.mxu0 0
      %669 = vmatpush1.bf16.msra.mxu0 0
      %670 = vmatprep.subr.bf16.mxu0 0
      %671 = vmatpush1.bf16.msra.mxu0 0
      %672 = vmatprep.subr.bf16.mxu0 0
      %673 = vmatpush1.bf16.msra.mxu0 0
      %674 = vmatprep.subr.bf16.mxu0 0
      %675 = vmatpush1.bf16.msra.mxu0 0
      %676 = vmatprep.subr.bf16.mxu0 0
      %677 = vmatpush1.bf16.msra.mxu0 0
      %678 = vmatprep.subr.bf16.mxu0 0
      %679 = vmatpush1.bf16.msra.mxu0 0
      %680 = vmatprep.subr.bf16.mxu0 0
      %681 = vmatpush1.bf16.msra.mxu0 0
      %682 = vmatprep.subr.bf16.mxu0 0
      %683 = vmatpush1.bf16.msra.mxu0 0
      %684 = vmatprep.subr.bf16.mxu0 0
      %685 = vmatpush1.bf16.msra.mxu0 0
      %686 = vmatprep.subr.bf16.mxu0 0
      %687 = vmatpush1.bf16.msra.mxu0 0
      %688 = vmatprep.mubr.bf16.mxu0 0
      %689 = vmatmul.mubr.bf16.gmra.mrb[0].mxu0 %v648
      %v690 = vpop.f32.mrb[0].mxu0
      %v691 = vadd.f32 0.0, %v690
      %v692 = vpop.f32.mrb[0].mxu0
      %v693 = vadd.f32 0.0, %v692
      %v694 = vpop.f32.mrb[0].mxu0
      %v695 = vpop.f32.mrb[0].mxu0
      %696 = vdwg.mxu0
      %v697 = vadd.f32 %v599, %v691
      %v698 = vadd.f32 %v601, %v693
      %699 = vrot.lane.b32.xlu0 %v480, 16
      %v700 = vpop.permute.xlu0 %699
      %701 = vrot.lane.b32.xlu0 %v484, 16
      %v702 = vpop.permute.xlu0 %701
      %vm703 = vcmask 130048
      %v704 = vsel %vm703, %v700, %v702
      %vm705 = vcmp.ne.s16.totalorder %v700, 0
      %vm706 = vcmp.ne.s16.totalorder %v704, 0
      %vm707 = vcmp.ne.s16.totalorder %v702, 0
      %v708 = vsel %vm705, %v437, 0
      %v709 = vsel %vm706, %v432, 0
      %v710 = vsel %vm707, %v440, 0
      %s711 = scalar_lea.vmem %s1, 12
      %v712 = vld [vmem:[%s711] sm:$0xf]
      %716 = vrot.lane.b32.xlu0 %v708, 112
      %v717 = vpop.permute.xlu0 %716
      %718 = vrot.lane.b32.xlu0 %v709, 112
      %v719 = vpop.permute.xlu0 %718
      %720 = vrot.lane.b32.xlu0 %v710, 112
      %v721 = vpop.permute.xlu0 %720
      %vm722 = vcmask 916480
      %v723 = vsel %vm722, %v717, %v719
      %v724 = vsel %vm722, %v719, %v721
      %v726 = vsel %vm503, %v712, 0
      %v729 = vsel %vm507, %v723, 0
      %v732 = vsel %vm507, %v724, 0
      %734 = vmatprep.subr.bf16.mxu0 %v732
      %735 = vmatpush1.bf16.msra.mxu0 %v729
      %736 = vmatprep.subr.bf16.mxu0 0
      %737 = vmatpush1.bf16.msra.mxu0 0
      %738 = vmatprep.subr.bf16.mxu0 0
      %739 = vmatpush1.bf16.msra.mxu0 0
      %740 = vmatprep.subr.bf16.mxu0 0
      %741 = vmatpush1.bf16.msra.mxu0 0
      %742 = vmatprep.subr.bf16.mxu0 0
      %743 = vmatpush1.bf16.msra.mxu0 0
      %744 = vmatprep.subr.bf16.mxu0 0
      %745 = vmatpush1.bf16.msra.mxu0 0
      %746 = vmatprep.subr.bf16.mxu0 0
      %747 = vmatpush1.bf16.msra.mxu0 0
      %748 = vmatprep.subr.bf16.mxu0 0
      %749 = vmatpush1.bf16.msra.mxu0 0
      %750 = vmatprep.subr.bf16.mxu0 0
      %751 = vmatpush1.bf16.msra.mxu0 0
      %752 = vmatprep.subr.bf16.mxu0 0
      %753 = vmatpush1.bf16.msra.mxu0 0
      %754 = vmatprep.subr.bf16.mxu0 0
      %755 = vmatpush1.bf16.msra.mxu0 0
      %756 = vmatprep.subr.bf16.mxu0 0
      %757 = vmatpush1.bf16.msra.mxu0 0
      %758 = vmatprep.subr.bf16.mxu0 0
      %759 = vmatpush1.bf16.msra.mxu0 0
      %760 = vmatprep.subr.bf16.mxu0 0
      %761 = vmatpush1.bf16.msra.mxu0 0
      %762 = vmatprep.subr.bf16.mxu0 0
      %763 = vmatpush1.bf16.msra.mxu0 0
      %764 = vmatprep.subr.bf16.mxu0 0
      %765 = vmatpush1.bf16.msra.mxu0 0
      %766 = vmatprep.mubr.bf16.mxu0 0
      %767 = vmatmul.mubr.bf16.gmra.mrb[0].mxu0 %v726
      %v768 = vpop.f32.mrb[0].mxu0
      %v769 = vadd.f32 0.0, %v768
      %v770 = vpop.f32.mrb[0].mxu0
      %v771 = vadd.f32 0.0, %v770
      %v772 = vpop.f32.mrb[0].mxu0
      %v773 = vpop.f32.mrb[0].mxu0
      %774 = vdwg.mxu0
      %v775 = vadd.f32 %v697, %v769
      %v776 = vadd.f32 %v698, %v771
      %s777 = scalar_lea.vmem %s1, 16
      %v778 = vld [vmem:[%s777] sm:$0xf]
      %779 = vrot.lane.b32.xlu0 %v437, 111
      %v780 = vpop.permute.xlu0 %779
      %781 = vrot.lane.b32.xlu0 %v432, 111
      %v782 = vpop.permute.xlu0 %781
      %783 = vrot.lane.b32.xlu0 %v440, 111
      %v784 = vpop.permute.xlu0 %783
      %vm785 = vcmask 908288
      %v786 = vsel %vm785, %v780, %v782
      %v787 = vsel %vm785, %v782, %v784
      %v789 = vsel %vm503, %v778, 0
      %v792 = vsel %vm507, %v786, 0
      %v795 = vsel %vm507, %v787, 0
      %797 = vmatprep.subr.bf16.mxu0 %v795
      %798 = vmatpush1.bf16.msra.mxu0 %v792
      %799 = vmatprep.subr.bf16.mxu0 0
      %800 = vmatpush1.bf16.msra.mxu0 0
      %801 = vmatprep.subr.bf16.mxu0 0
      %802 = vmatpush1.bf16.msra.mxu0 0
      %803 = vmatprep.subr.bf16.mxu0 0
      %804 = vmatpush1.bf16.msra.mxu0 0
      %805 = vmatprep.subr.bf16.mxu0 0
      %806 = vmatpush1.bf16.msra.mxu0 0
      %807 = vmatprep.subr.bf16.mxu0 0
      %808 = vmatpush1.bf16.msra.mxu0 0
      %809 = vmatprep.subr.bf16.mxu0 0
      %810 = vmatpush1.bf16.msra.mxu0 0
      %811 = vmatprep.subr.bf16.mxu0 0
      %812 = vmatpush1.bf16.msra.mxu0 0
      %813 = vmatprep.subr.bf16.mxu0 0
      %814 = vmatpush1.bf16.msra.mxu0 0
      %815 = vmatprep.subr.bf16.mxu0 0
      %816 = vmatpush1.bf16.msra.mxu0 0
      %817 = vmatprep.subr.bf16.mxu0 0
      %818 = vmatpush1.bf16.msra.mxu0 0
      %819 = vmatprep.subr.bf16.mxu0 0
      %820 = vmatpush1.bf16.msra.mxu0 0
      %821 = vmatprep.subr.bf16.mxu0 0
      %822 = vmatpush1.bf16.msra.mxu0 0
      %823 = vmatprep.subr.bf16.mxu0 0
      %824 = vmatpush1.bf16.msra.mxu0 0
      %825 = vmatprep.subr.bf16.mxu0 0
      %826 = vmatpush1.bf16.msra.mxu0 0
      %827 = vmatprep.subr.bf16.mxu0 0
      %828 = vmatpush1.bf16.msra.mxu0 0
      %829 = vmatprep.mubr.bf16.mxu0 0
      %830 = vmatmul.mubr.bf16.gmra.mrb[0].mxu0 %v789
      %v831 = vpop.f32.mrb[0].mxu0
      %v832 = vadd.f32 0.0, %v831
      %v833 = vpop.f32.mrb[0].mxu0
      %v834 = vadd.f32 0.0, %v833
      %v835 = vpop.f32.mrb[0].mxu0
      %v836 = vpop.f32.mrb[0].mxu0
      %837 = vdwg.mxu0
      %v838 = vadd.f32 %v775, %v832
      %v839 = vadd.f32 %v776, %v834
      %840 = vrot.lane.b32.xlu0 %v616, 18
      %v841 = vpop.permute.xlu0 %840
      %842 = vrot.lane.b32.xlu0 %v620, 18
      %v843 = vpop.permute.xlu0 %842
      %vm844 = vcmask 146432
      %v845 = vsel %vm844, %v841, %v843
      %vm846 = vcmp.ne.s16.totalorder %v841, 0
      %vm847 = vcmp.ne.s16.totalorder %v845, 0
      %vm848 = vcmp.ne.s16.totalorder %v843, 0
      %v849 = vsel %vm846, %v437, 0
      %v850 = vsel %vm847, %v432, 0
      %v851 = vsel %vm848, %v440, 0
      %s852 = scalar_lea.vmem %s1, 20
      %v853 = vld [vmem:[%s852] sm:$0xf]
      %857 = vrot.lane.b32.xlu0 %v849, 110
      %v858 = vpop.permute.xlu0 %857
      %859 = vrot.lane.b32.xlu0 %v850, 110
      %v860 = vpop.permute.xlu0 %859
      %861 = vrot.lane.b32.xlu0 %v851, 110
      %v862 = vpop.permute.xlu0 %861
      %vm863 = vcmask 900096
      %v864 = vsel %vm863, %v858, %v860
      %v865 = vsel %vm863, %v860, %v862
      %v867 = vsel %vm503, %v853, 0
      %v870 = vsel %vm507, %v864, 0
      %v873 = vsel %vm507, %v865, 0
      %875 = vmatprep.subr.bf16.mxu0 %v873
      %876 = vmatpush1.bf16.msra.mxu0 %v870
      %877 = vmatprep.subr.bf16.mxu0 0
      %878 = vmatpush1.bf16.msra.mxu0 0
      %879 = vmatprep.subr.bf16.mxu0 0
      %880 = vmatpush1.bf16.msra.mxu0 0
      %881 = vmatprep.subr.bf16.mxu0 0
      %882 = vmatpush1.bf16.msra.mxu0 0
      %883 = vmatprep.subr.bf16.mxu0 0
      %884 = vmatpush1.bf16.msra.mxu0 0
      %885 = vmatprep.subr.bf16.mxu0 0
      %886 = vmatpush1.bf16.msra.mxu0 0
      %887 = vmatprep.subr.bf16.mxu0 0
      %888 = vmatpush1.bf16.msra.mxu0 0
      %889 = vmatprep.subr.bf16.mxu0 0
      %890 = vmatpush1.bf16.msra.mxu0 0
      %891 = vmatprep.subr.bf16.mxu0 0
      %892 = vmatpush1.bf16.msra.mxu0 0
      %893 = vmatprep.subr.bf16.mxu0 0
      %894 = vmatpush1.bf16.msra.mxu0 0
      %895 = vmatprep.subr.bf16.mxu0 0
      %896 = vmatpush1.bf16.msra.mxu0 0
      %897 = vmatprep.subr.bf16.mxu0 0
      %898 = vmatpush1.bf16.msra.mxu0 0
      %899 = vmatprep.subr.bf16.mxu0 0
      %900 = vmatpush1.bf16.msra.mxu0 0
      %901 = vmatprep.subr.bf16.mxu0 0
      %902 = vmatpush1.bf16.msra.mxu0 0
      %903 = vmatprep.subr.bf16.mxu0 0
      %904 = vmatpush1.bf16.msra.mxu0 0
      %905 = vmatprep.subr.bf16.mxu0 0
      %906 = vmatpush1.bf16.msra.mxu0 0
      %907 = vmatprep.mubr.bf16.mxu0 0
      %908 = vmatmul.mubr.bf16.gmra.mrb[0].mxu0 %v867
      %v909 = vpop.f32.mrb[0].mxu0
      %v910 = vadd.f32 0.0, %v909
      %v911 = vpop.f32.mrb[0].mxu0
      %v912 = vadd.f32 0.0, %v911
      %v913 = vpop.f32.mrb[0].mxu0
      %v914 = vpop.f32.mrb[0].mxu0
      %915 = vdwg.mxu0
      %v916 = vadd.f32 %v838, %v910
      %v917 = vadd.f32 %v839, %v912
      %918 = vrot.lane.b32.xlu0 %v480, 32
      %v919 = vpop.permute.xlu0 %918
      %920 = vrot.lane.b32.xlu0 %v484, 32
      %v921 = vpop.permute.xlu0 %920
      %vm922 = vcmask 261120
      %v923 = vsel %vm922, %v919, %v921
      %vm924 = vcmp.ne.s16.totalorder %v919, 0
      %vm925 = vcmp.ne.s16.totalorder %v923, 0
      %vm926 = vcmp.ne.s16.totalorder %v921, 0
      %v927 = vsel %vm924, %v437, 0
      %v928 = vsel %vm925, %v432, 0
      %v929 = vsel %vm926, %v440, 0
      %s930 = scalar_lea.vmem %s1, 24
      %v931 = vld [vmem:[%s930] sm:$0xf]
      %935 = vrot.lane.b32.xlu0 %v927, 96
      %v936 = vpop.permute.xlu0 %935
      %937 = vrot.lane.b32.xlu0 %v928, 96
      %v938 = vpop.permute.xlu0 %937
      %939 = vrot.lane.b32.xlu0 %v929, 96
      %v940 = vpop.permute.xlu0 %939
      %vm941 = vcmask 785408
      %v942 = vsel %vm941, %v936, %v938
      %v943 = vsel %vm941, %v938, %v940
      %v945 = vsel %vm503, %v931, 0
      %v948 = vsel %vm507, %v942, 0
      %v951 = vsel %vm507, %v943, 0
      %953 = vmatprep.subr.bf16.mxu0 %v951
      %954 = vmatpush1.bf16.msra.mxu0 %v948
      %955 = vmatprep.subr.bf16.mxu0 0
      %956 = vmatpush1.bf16.msra.mxu0 0
      %957 = vmatprep.subr.bf16.mxu0 0
      %958 = vmatpush1.bf16.msra.mxu0 0
      %959 = vmatprep.subr.bf16.mxu0 0
      %960 = vmatpush1.bf16.msra.mxu0 0
      %961 = vmatprep.subr.bf16.mxu0 0
      %962 = vmatpush1.bf16.msra.mxu0 0
      %963 = vmatprep.subr.bf16.mxu0 0
      %964 = vmatpush1.bf16.msra.mxu0 0
      %965 = vmatprep.subr.bf16.mxu0 0
      %966 = vmatpush1.bf16.msra.mxu0 0
      %967 = vmatprep.subr.bf16.mxu0 0
      %968 = vmatpush1.bf16.msra.mxu0 0
      %969 = vmatprep.subr.bf16.mxu0 0
      %970 = vmatpush1.bf16.msra.mxu0 0
      %971 = vmatprep.subr.bf16.mxu0 0
      %972 = vmatpush1.bf16.msra.mxu0 0
      %973 = vmatprep.subr.bf16.mxu0 0
      %974 = vmatpush1.bf16.msra.mxu0 0
      %975 = vmatprep.subr.bf16.mxu0 0
      %976 = vmatpush1.bf16.msra.mxu0 0
      %977 = vmatprep.subr.bf16.mxu0 0
      %978 = vmatpush1.bf16.msra.mxu0 0
      %979 = vmatprep.subr.bf16.mxu0 0
      %980 = vmatpush1.bf16.msra.mxu0 0
      %981 = vmatprep.subr.bf16.mxu0 0
      %982 = vmatpush1.bf16.msra.mxu0 0
      %983 = vmatprep.subr.bf16.mxu0 0
      %984 = vmatpush1.bf16.msra.mxu0 0
      %985 = vmatprep.mubr.bf16.mxu0 0
      %986 = vmatmul.mubr.bf16.gmra.mrb[0].mxu0 %v945
      %v987 = vpop.f32.mrb[0].mxu0
      %v988 = vadd.f32 0.0, %v987
      %v989 = vpop.f32.mrb[0].mxu0
      %v990 = vadd.f32 0.0, %v989
      %v991 = vpop.f32.mrb[0].mxu0
      %v992 = vpop.f32.mrb[0].mxu0
      %993 = vdwg.mxu0
      %v994 = vadd.f32 %v916, %v988
      %v995 = vadd.f32 %v917, %v990
      %s996 = scalar_lea.vmem %s1, 28
      %v997 = vld [vmem:[%s996] sm:$0xf]
      %998 = vrot.lane.b32.xlu0 %v437, 95
      %v999 = vpop.permute.xlu0 %998
      %1000 = vrot.lane.b32.xlu0 %v432, 95
      %v1001 = vpop.permute.xlu0 %1000
      %1002 = vrot.lane.b32.xlu0 %v440, 95
      %v1003 = vpop.permute.xlu0 %1002
      %vm1004 = vcmask 777216
      %v1005 = vsel %vm1004, %v999, %v1001
      %v1006 = vsel %vm1004, %v1001, %v1003
      %v1008 = vsel %vm503, %v997, 0
      %v1011 = vsel %vm507, %v1005, 0
      %v1014 = vsel %vm507, %v1006, 0
      %1016 = vmatprep.subr.bf16.mxu0 %v1014
      %1017 = vmatpush1.bf16.msra.mxu0 %v1011
      %1018 = vmatprep.subr.bf16.mxu0 0
      %1019 = vmatpush1.bf16.msra.mxu0 0
      %1020 = vmatprep.subr.bf16.mxu0 0
      %1021 = vmatpush1.bf16.msra.mxu0 0
      %1022 = vmatprep.subr.bf16.mxu0 0
      %1023 = vmatpush1.bf16.msra.mxu0 0
      %1024 = vmatprep.subr.bf16.mxu0 0
      %1025 = vmatpush1.bf16.msra.mxu0 0
      %1026 = vmatprep.subr.bf16.mxu0 0
      %1027 = vmatpush1.bf16.msra.mxu0 0
      %1028 = vmatprep.subr.bf16.mxu0 0
      %1029 = vmatpush1.bf16.msra.mxu0 0
      %1030 = vmatprep.subr.bf16.mxu0 0
      %1031 = vmatpush1.bf16.msra.mxu0 0
      %1032 = vmatprep.subr.bf16.mxu0 0
      %1033 = vmatpush1.bf16.msra.mxu0 0
      %1034 = vmatprep.subr.bf16.mxu0 0
      %1035 = vmatpush1.bf16.msra.mxu0 0
      %1036 = vmatprep.subr.bf16.mxu0 0
      %1037 = vmatpush1.bf16.msra.mxu0 0
      %1038 = vmatprep.subr.bf16.mxu0 0
      %1039 = vmatpush1.bf16.msra.mxu0 0
      %1040 = vmatprep.subr.bf16.mxu0 0
      %1041 = vmatpush1.bf16.msra.mxu0 0
      %1042 = vmatprep.subr.bf16.mxu0 0
      %1043 = vmatpush1.bf16.msra.mxu0 0
      %1044 = vmatprep.subr.bf16.mxu0 0
      %1045 = vmatpush1.bf16.msra.mxu0 0
      %1046 = vmatprep.subr.bf16.mxu0 0
      %1047 = vmatpush1.bf16.msra.mxu0 0
      %1048 = vmatprep.mubr.bf16.mxu0 0
      %1049 = vmatmul.mubr.bf16.gmra.mrb[0].mxu0 %v1008
      %v1050 = vpop.f32.mrb[0].mxu0
      %v1051 = vadd.f32 0.0, %v1050
      %v1052 = vpop.f32.mrb[0].mxu0
      %v1053 = vadd.f32 0.0, %v1052
      %v1054 = vpop.f32.mrb[0].mxu0
      %v1055 = vpop.f32.mrb[0].mxu0
      %1056 = vdwg.mxu0
      %v1057 = vadd.f32 %v994, %v1051
      %v1058 = vadd.f32 %v995, %v1053
      %1059 = vrot.lane.b32.xlu0 %v616, 34
      %v1060 = vpop.permute.xlu0 %1059
      %1061 = vrot.lane.b32.xlu0 %v620, 34
      %v1062 = vpop.permute.xlu0 %1061
      %vm1063 = vcmask 277504
      %v1064 = vsel %vm1063, %v1060, %v1062
      %vm1065 = vcmp.ne.s16.totalorder %v1060, 0
      %vm1066 = vcmp.ne.s16.totalorder %v1064, 0
      %vm1067 = vcmp.ne.s16.totalorder %v1062, 0
      %v1068 = vsel %vm1065, %v437, 0
      %v1069 = vsel %vm1066, %v432, 0
      %v1070 = vsel %vm1067, %v440, 0
      %s1071 = scalar_lea.vmem %s1, 32
      %v1072 = vld [vmem:[%s1071] sm:$0xf]
      %1076 = vrot.lane.b32.xlu0 %v1068, 94
      %v1077 = vpop.permute.xlu0 %1076
      %1078 = vrot.lane.b32.xlu0 %v1069, 94
      %v1079 = vpop.permute.xlu0 %1078
      %1080 = vrot.lane.b32.xlu0 %v1070, 94
      %v1081 = vpop.permute.xlu0 %1080
      %vm1082 = vcmask 769024
      %v1083 = vsel %vm1082, %v1077, %v1079
      %v1084 = vsel %vm1082, %v1079, %v1081
      %v1086 = vsel %vm503, %v1072, 0
      %v1089 = vsel %vm507, %v1083, 0
      %v1092 = vsel %vm507, %v1084, 0
      %1094 = vmatprep.subr.bf16.mxu0 %v1092
      %1095 = vmatpush1.bf16.msra.mxu0 %v1089
      %1096 = vmatprep.subr.bf16.mxu0 0
      %1097 = vmatpush1.bf16.msra.mxu0 0
      %1098 = vmatprep.subr.bf16.mxu0 0
      %1099 = vmatpush1.bf16.msra.mxu0 0
      %1100 = vmatprep.subr.bf16.mxu0 0
      %1101 = vmatpush1.bf16.msra.mxu0 0
      %1102 = vmatprep.subr.bf16.mxu0 0
      %1103 = vmatpush1.bf16.msra.mxu0 0
      %1104 = vmatprep.subr.bf16.mxu0 0
      %1105 = vmatpush1.bf16.msra.mxu0 0
      %1106 = vmatprep.subr.bf16.mxu0 0
      %1107 = vmatpush1.bf16.msra.mxu0 0
      %1108 = vmatprep.subr.bf16.mxu0 0
      %1109 = vmatpush1.bf16.msra.mxu0 0
      %1110 = vmatprep.subr.bf16.mxu0 0
      %1111 = vmatpush1.bf16.msra.mxu0 0
      %1112 = vmatprep.subr.bf16.mxu0 0
      %1113 = vmatpush1.bf16.msra.mxu0 0
      %1114 = vmatprep.subr.bf16.mxu0 0
      %1115 = vmatpush1.bf16.msra.mxu0 0
      %1116 = vmatprep.subr.bf16.mxu0 0
      %1117 = vmatpush1.bf16.msra.mxu0 0
      %1118 = vmatprep.subr.bf16.mxu0 0
      %1119 = vmatpush1.bf16.msra.mxu0 0
      %1120 = vmatprep.subr.bf16.mxu0 0
      %1121 = vmatpush1.bf16.msra.mxu0 0
      %1122 = vmatprep.subr.bf16.mxu0 0
      %1123 = vmatpush1.bf16.msra.mxu0 0
      %1124 = vmatprep.subr.bf16.mxu0 0
      %1125 = vmatpush1.bf16.msra.mxu0 0
      %1126 = vmatprep.mubr.bf16.mxu0 0
      %1127 = vmatmul.mubr.bf16.gmra.mrb[0].mxu0 %v1086
      %v1128 = vpop.f32.mrb[0].mxu0
      %v1129 = vadd.f32 0.0, %v1128
      %v1130 = vpop.f32.mrb[0].mxu0
      %v1131 = vadd.f32 0.0, %v1130
      %v1132 = vpop.f32.mrb[0].mxu0
      %v1133 = vpop.f32.mrb[0].mxu0
      %1134 = vdwg.mxu0
      %v1135 = vadd.f32 %v1057, %v1129
      %v1136 = vadd.f32 %v1058, %v1131
      %v1137 = vld [vmem:[%s2] sm:$0xff]
      %1139 = vset.pattern.permute.xlu0 0
      %1140 = vperm.xlu0 %1139, %v1137
      %v1141 = vpop.permute.xlu0 %1140
      %v1143 = vadd.f32 %v1135, %v1141
      %v1144 = vadd.f32 %v1136, %v1141
      %v1145 = vmax.f32 %v1143, 0.0
      %v1146 = vmax.f32 %v1144, 0.0
      %v1147 = vpack.c.bf16 %v1145, %v1145
      %v1148 = vpack.c.bf16 %v1146, %v1146
      %1151 = vrot.lane.b32.xlu0 %v1147, 127
      %v1152 = vpop.permute.xlu0 %1151
      %1153 = vrot.lane.b32.xlu0 %v1148, 127
      %v1154 = vpop.permute.xlu0 %1153
      %v1155 = vsel %vm500, %v1152, %v1154
      %vm1157 = vcmask 1039360
      %v1159 = vsel %vm1157, %v1154, 0
      %v1161 = vmax.bf16 %v1147, %v1155
      %v1162 = vmax.bf16 %v1148, %v1159
      %1165 = vrot.lane.b32.xlu0 %v1161, 112
      %v1166 = vpop.permute.xlu0 %1165
      %1167 = vrot.lane.b32.xlu0 %v1162, 112
      %v1168 = vpop.permute.xlu0 %1167
      %v1169 = vsel %vm722, %v1166, %v1168
      %vm1171 = vcmask 916480
      %v1173 = vsel %vm1171, %v1168, 0
      %v1175 = vmax.bf16 %v1161, %v1169
      %v1176 = vmax.bf16 %v1162, %v1173
      %v1177 = vld [vmem:[%s10] sm:$0xf]
      %v1178 = vld [vmem:[%s10 + $0x4] sm:$0xf]
      %v1179 = vld [vmem:[%s10 + $0x8] sm:$0xf]
      %v1180 = vld [vmem:[%s10 + $0xc] sm:$0xf]
      %v1181 = vld [vmem:[%s10 + $0x10] sm:$0xf]
      %v1182 = vld [vmem:[%s10 + $0x14] sm:$0xf]
      %v1183 = vld [vmem:[%s10 + $0x18] sm:$0xf]
      %v1184 = vld [vmem:[%s10 + $0x1c] sm:$0xf]
      %v1185 = vld [vmem:[%s10 + $0x20] sm:$0xf]
      %v1186 = vld [vmem:[%s10 + $0x24] sm:$0xf]
      %v1187 = vld [vmem:[%s10 + $0x28] sm:$0xf]
      %v1188 = vld [vmem:[%s10 + $0x2c] sm:$0xf]
      %v1189 = vld [vmem:[%s10 + $0x30] sm:$0xf]
      %v1190 = vld [vmem:[%s10 + $0x34] sm:$0xf]
      %v1191 = vld [vmem:[%s10 + $0x38] sm:$0xf]
      %v1192 = vld [vmem:[%s10 + $0x3c] sm:$0xf]
      %v1193 = vld [vmem:[%s10 + $0x40] sm:$0xf]
      %v1194 = vld [vmem:[%s10 + $0x44] sm:$0xf]
      %v1195 = vld [vmem:[%s10 + $0x48] sm:$0xf]
      %v1196 = vld [vmem:[%s10 + $0x4c] sm:$0xf]
      %v1197 = vld [vmem:[%s10 + $0x50] sm:$0xf]
      %v1198 = vld [vmem:[%s10 + $0x54] sm:$0xf]
      %v1199 = vld [vmem:[%s10 + $0x58] sm:$0xf]
      %v1200 = vld [vmem:[%s10 + $0x5c] sm:$0xf]
      %v1201 = vld [vmem:[%s10 + $0x60] sm:$0xf]
      %v1202 = vld [vmem:[%s10 + $0x64] sm:$0xf]
      %v1203 = vld [vmem:[%s10 + $0x68] sm:$0xf]
      %v1204 = vld [vmem:[%s10 + $0x6c] sm:$0xf]
      %v1205 = vld [vmem:[%s10 + $0x70] sm:$0xf]
      %v1206 = vld [vmem:[%s10 + $0x74] sm:$0xf]
      %v1207 = vld [vmem:[%s10 + $0x78] sm:$0xf]
      %v1208 = vld [vmem:[%s10 + $0x7c] sm:$0xf]
      %v1241 = vunpack.c.l.b16 %v1177
      %v1242 = vunpack.c.l.b16 %v1178
      %v1243 = vunpack.c.l.b16 %v1179
      %v1244 = vunpack.c.l.b16 %v1180
      %v1245 = vunpack.c.l.b16 %v1181
      %v1246 = vunpack.c.l.b16 %v1182
      %v1247 = vunpack.c.l.b16 %v1183
      %v1248 = vunpack.c.l.b16 %v1184
      %v1249 = vunpack.c.l.b16 %v1185
      %v1250 = vunpack.c.l.b16 %v1186
      %v1251 = vunpack.c.l.b16 %v1187
      %v1252 = vunpack.c.l.b16 %v1188
      %v1253 = vunpack.c.l.b16 %v1189
      %v1254 = vunpack.c.l.b16 %v1190
      %v1255 = vunpack.c.l.b16 %v1191
      %v1256 = vunpack.c.l.b16 %v1192
      %v1257 = vunpack.c.l.b16 %v1193
      %v1258 = vunpack.c.l.b16 %v1194
      %v1259 = vunpack.c.l.b16 %v1195
      %v1260 = vunpack.c.l.b16 %v1196
      %v1261 = vunpack.c.l.b16 %v1197
      %v1262 = vunpack.c.l.b16 %v1198
      %v1263 = vunpack.c.l.b16 %v1199
      %v1264 = vunpack.c.l.b16 %v1200
      %v1265 = vunpack.c.l.b16 %v1201
      %v1266 = vunpack.c.l.b16 %v1202
      %v1267 = vunpack.c.l.b16 %v1203
      %v1268 = vunpack.c.l.b16 %v1204
      %v1269 = vunpack.c.l.b16 %v1205
      %v1270 = vunpack.c.l.b16 %v1206
      %v1271 = vunpack.c.l.b16 %v1207
      %v1272 = vunpack.c.l.b16 %v1208
      %v1273 = vpack.c.b16 %v1242, %v1241
      %v1274 = vpack.c.b16 %v1244, %v1243
      %v1275 = vpack.c.b16 %v1246, %v1245
      %v1276 = vpack.c.b16 %v1248, %v1247
      %v1277 = vpack.c.b16 %v1250, %v1249
      %v1278 = vpack.c.b16 %v1252, %v1251
      %v1279 = vpack.c.b16 %v1254, %v1253
      %v1280 = vpack.c.b16 %v1256, %v1255
      %v1281 = vpack.c.b16 %v1258, %v1257
      %v1282 = vpack.c.b16 %v1260, %v1259
      %v1283 = vpack.c.b16 %v1262, %v1261
      %v1284 = vpack.c.b16 %v1264, %v1263
      %v1285 = vpack.c.b16 %v1266, %v1265
      %v1286 = vpack.c.b16 %v1268, %v1267
      %v1287 = vpack.c.b16 %v1270, %v1269
      %v1288 = vpack.c.b16 %v1272, %v1271
      %1305 = vmatprep.subr.bf16.mxu0 0
      %1306 = vmatpush1.bf16.msra.mxu0 %v1273
      %1307 = vmatprep.subr.bf16.mxu0 0
      %1308 = vmatpush1.bf16.msra.mxu0 %v1274
      %1309 = vmatprep.subr.bf16.mxu0 0
      %1310 = vmatpush1.bf16.msra.mxu0 %v1275
      %1311 = vmatprep.subr.bf16.mxu0 0
      %1312 = vmatpush1.bf16.msra.mxu0 %v1276
      %1313 = vmatprep.subr.bf16.mxu0 0
      %1314 = vmatpush1.bf16.msra.mxu0 %v1277
      %1315 = vmatprep.subr.bf16.mxu0 0
      %1316 = vmatpush1.bf16.msra.mxu0 %v1278
      %1317 = vmatprep.subr.bf16.mxu0 0
      %1318 = vmatpush1.bf16.msra.mxu0 %v1279
      %1319 = vmatprep.subr.bf16.mxu0 0
      %1320 = vmatpush1.bf16.msra.mxu0 %v1280
      %1321 = vmatprep.subr.bf16.mxu0 0
      %1322 = vmatpush1.bf16.msra.mxu0 %v1281
      %1323 = vmatprep.subr.bf16.mxu0 0
      %1324 = vmatpush1.bf16.msra.mxu0 %v1282
      %1325 = vmatprep.subr.bf16.mxu0 0
      %1326 = vmatpush1.bf16.msra.mxu0 %v1283
      %1327 = vmatprep.subr.bf16.mxu0 0
      %1328 = vmatpush1.bf16.msra.mxu0 %v1284
      %1329 = vmatprep.subr.bf16.mxu0 0
      %1330 = vmatpush1.bf16.msra.mxu0 %v1285
      %1331 = vmatprep.subr.bf16.mxu0 0
      %1332 = vmatpush1.bf16.msra.mxu0 %v1286
      %1333 = vmatprep.subr.bf16.mxu0 0
      %1334 = vmatpush1.bf16.msra.mxu0 %v1287
      %1335 = vmatprep.subr.bf16.mxu0 0
      %1336 = vmatpush1.bf16.msra.mxu0 %v1288
      %1337 = vmatprep.mubr.bf16.mxu0 %v1176
      %1338 = vmatmul.mubr.bf16.gmra.mrb[0].mxu0 %v1175
      %v1339 = vpop.f32.mrb[0].mxu0
      %v1340 = vadd.f32 0.0, %v1339
      %v1341 = vpop.f32.mrb[0].mxu0
      %v1342 = vpop.f32.mrb[0].mxu0
      %v1343 = vpop.f32.mrb[0].mxu0
      %1344 = vdwg.mxu0
      %v1345 = vpack.c.bf16 %v1340, %v1340
      %1347 = vrot.lane.b32.xlu0 %v1345, 9
      %v1348 = vpop.permute.xlu0 %1347
      %vm1349 = vcmask 72704
      %v1351 = vsel %vm1349, 0, %v1348
      %vm1352 = vcmask 596992
      %v1353 = vsel %vm1352, %v1351, 0
      %vm1355 = vcmp.lt.s32.totalorder %v443, 0
      %v1356 = vsub.s32 0, %v443
      %v1357 = vsel %vm1355, %v1356, %v443
      %v1358 = vshrl.u32 %v1357, 3
      %v1359 = vand.u32 %v1357, 7
      %v1360 = vsub.s32 0, %v1359
      %v1361 = vsel %vm1355, %v1360, %v1359
      %vm1362 = vcmp.ne.s32.totalorder %v1361, 0
      %vm1363 = vcmp.lt.s32.totalorder %v1361, 0
      %vm1364 = vmand %vm1363, %vm1362
      %v1365 = vadd.s32 %v1361, 8
      %v1366 = vsel %vm1364, %v1365, %v1361
      %vm1367 = vcmp.ge.s32.totalorder %v1366, 1
      %v1368 = vsel %vm1367, 1, 0
      %vm1369 = vcmp.eq.s32.totalorder %v1368, 1
      %vm1370 = vmpackc.low %vm1369, %vm1369
      %v1371 = vsel %vm1370, %v1353, 0
      %v1372 = vld [vmem:[%s3] sm:$0xf]
      %v1373 = vld [vmem:[%s3 + $0x4] sm:$0xf]
      %s1374 = scalar_lea.vmem %s3, 8
      %v1375 = vld [vmem:[%s1374] sm:$0xf]
      %v1376 = vld [vmem:[%s1374 + $0x4] sm:$0xf]
      %v1379 = vunpack.c.l.b16 %v1375
      %v1380 = vunpack.c.l.b16 %v1376
      %v1381 = vpack.c.b16 %v1380, %v1379
      %1383 = vrot.lane.b32.xlu0 %v1353, 127
      %v1384 = vpop.permute.xlu0 %1383
      %vm1385 = vcmask 64512
      %v1387 = vsel %vm1385, %v1381, 0
      %vm1389 = vcmask 1043456
      %v1391 = vsel %vm1389, %v1384, 0
      %1393 = vmatprep.subr.bf16.mxu0 0
      %1394 = vmatpush1.bf16.msra.mxu0 %v1391
      %1395 = vmatprep.subr.bf16.mxu0 0
      %1396 = vmatpush1.bf16.msra.mxu0 0
      %1397 = vmatprep.subr.bf16.mxu0 0
      %1398 = vmatpush1.bf16.msra.mxu0 0
      %1399 = vmatprep.subr.bf16.mxu0 0
      %1400 = vmatpush1.bf16.msra.mxu0 0
      %1401 = vmatprep.subr.bf16.mxu0 0
      %1402 = vmatpush1.bf16.msra.mxu0 0
      %1403 = vmatprep.subr.bf16.mxu0 0
      %1404 = vmatpush1.bf16.msra.mxu0 0
      %1405 = vmatprep.subr.bf16.mxu0 0
      %1406 = vmatpush1.bf16.msra.mxu0 0
      %1407 = vmatprep.subr.bf16.mxu0 0
      %1408 = vmatpush1.bf16.msra.mxu0 0
      %1409 = vmatprep.subr.bf16.mxu0 0
      %1410 = vmatpush1.bf16.msra.mxu0 0
      %1411 = vmatprep.subr.bf16.mxu0 0
      %1412 = vmatpush1.bf16.msra.mxu0 0
      %1413 = vmatprep.subr.bf16.mxu0 0
      %1414 = vmatpush1.bf16.msra.mxu0 0
      %1415 = vmatprep.subr.bf16.mxu0 0
      %1416 = vmatpush1.bf16.msra.mxu0 0
      %1417 = vmatprep.subr.bf16.mxu0 0
      %1418 = vmatpush1.bf16.msra.mxu0 0
      %1419 = vmatprep.subr.bf16.mxu0 0
      %1420 = vmatpush1.bf16.msra.mxu0 0
      %1421 = vmatprep.subr.bf16.mxu0 0
      %1422 = vmatpush1.bf16.msra.mxu0 0
      %1423 = vmatprep.subr.bf16.mxu0 0
      %1424 = vmatpush1.bf16.msra.mxu0 0
      %1425 = vmatprep.mubr.bf16.mxu0 0
      %1426 = vmatmul.mubr.bf16.gmra.mrb[0].mxu0 %v1387
      %v1427 = vpop.f32.mrb[0].mxu0
      %v1428 = vadd.f32 0.0, %v1427
      %v1429 = vpop.f32.mrb[0].mxu0
      %v1430 = vpop.f32.mrb[0].mxu0
      %v1431 = vadd.f32 0.0, %v1430
      %v1432 = vpop.f32.mrb[0].mxu0
      %1433 = vdwg.mxu0
      %v1436 = vunpack.c.l.b16 %v1372
      %v1437 = vunpack.c.l.b16 %v1373
      %v1438 = vpack.c.b16 %v1437, %v1436
      %v1440 = vsel %vm1385, %v1438, 0
      %v1443 = vsel %vm1389, %v1371, 0
      %1445 = vmatprep.subr.bf16.mxu0 0
      %1446 = vmatpush1.bf16.msra.mxu0 %v1443
      %1447 = vmatprep.subr.bf16.mxu0 0
      %1448 = vmatpush1.bf16.msra.mxu0 0
      %1449 = vmatprep.subr.bf16.mxu0 0
      %1450 = vmatpush1.bf16.msra.mxu0 0
      %1451 = vmatprep.subr.bf16.mxu0 0
      %1452 = vmatpush1.bf16.msra.mxu0 0
      %1453 = vmatprep.subr.bf16.mxu0 0
      %1454 = vmatpush1.bf16.msra.mxu0 0
      %1455 = vmatprep.subr.bf16.mxu0 0
      %1456 = vmatpush1.bf16.msra.mxu0 0
      %1457 = vmatprep.subr.bf16.mxu0 0
      %1458 = vmatpush1.bf16.msra.mxu0 0
      %1459 = vmatprep.subr.bf16.mxu0 0
      %1460 = vmatpush1.bf16.msra.mxu0 0
      %1461 = vmatprep.subr.bf16.mxu0 0
      %1462 = vmatpush1.bf16.msra.mxu0 0
      %1463 = vmatprep.subr.bf16.mxu0 0
      %1464 = vmatpush1.bf16.msra.mxu0 0
      %1465 = vmatprep.subr.bf16.mxu0 0
      %1466 = vmatpush1.bf16.msra.mxu0 0
      %1467 = vmatprep.subr.bf16.mxu0 0
      %1468 = vmatpush1.bf16.msra.mxu0 0
      %1469 = vmatprep.subr.bf16.mxu0 0
      %1470 = vmatpush1.bf16.msra.mxu0 0
      %1471 = vmatprep.subr.bf16.mxu0 0
      %1472 = vmatpush1.bf16.msra.mxu0 0
      %1473 = vmatprep.subr.bf16.mxu0 0
      %1474 = vmatpush1.bf16.msra.mxu0 0
      %1475 = vmatprep.subr.bf16.mxu0 0
      %1476 = vmatpush1.bf16.msra.mxu0 0
      %1477 = vmatprep.mubr.bf16.mxu0 0
      %1478 = vmatmul.mubr.bf16.gmra.mrb[0].mxu0 %v1440
      %v1479 = vpop.f32.mrb[0].mxu0
      %v1480 = vadd.f32 %v1428, %v1479
      %v1481 = vpop.f32.mrb[0].mxu0
      %v1482 = vpop.f32.mrb[0].mxu0
      %v1483 = vadd.f32 %v1431, %v1482
      %v1484 = vpop.f32.mrb[0].mxu0
      %1485 = vdwg.mxu0
      %vm1486 = vcmp.lt.s32.totalorder %v1366, 7
      %v1487 = vsel %vm1486, 1, 0
      %vm1488 = vcmp.eq.s32.totalorder %v1487, 1
      %vm1489 = vmpackc.low %vm1488, %vm1488
      %v1490 = vsel %vm1489, 65537, 0
      %v1491 = vlaneseq
      %v1492 = vshrl.u32 %v1491, 7
      %v1493 = vsub.s32 0, %v1492
      %v1494 = vrot.slane %v1490, %v1493
      %1495 = vrot.lane.b32.xlu0 %v1494, 2
      %v1496 = vpop.permute.xlu0 %1495
      %vm1497 = vcmp.ne.s16.totalorder %v1496, 0
      %v1498 = vsel %vm1497, %v1353, 0
      %s1499 = scalar_lea.vmem %s3, 16
      %v1500 = vld [vmem:[%s1499] sm:$0xf]
      %v1501 = vld [vmem:[%s1499 + $0x4] sm:$0xf]
      %v1504 = vunpack.c.l.b16 %v1500
      %v1505 = vunpack.c.l.b16 %v1501
      %v1506 = vpack.c.b16 %v1505, %v1504
      %1508 = vrot.lane.b32.xlu0 %v1498, 126
      %v1509 = vpop.permute.xlu0 %1508
      %v1511 = vsel %vm1385, %v1506, 0
      %v1514 = vsel %vm1389, %v1509, 0
      %1516 = vmatprep.subr.bf16.mxu0 0
      %1517 = vmatpush1.bf16.msra.mxu0 %v1514
      %1518 = vmatprep.subr.bf16.mxu0 0
      %1519 = vmatpush1.bf16.msra.mxu0 0
      %1520 = vmatprep.subr.bf16.mxu0 0
      %1521 = vmatpush1.bf16.msra.mxu0 0
      %1522 = vmatprep.subr.bf16.mxu0 0
      %1523 = vmatpush1.bf16.msra.mxu0 0
      %1524 = vmatprep.subr.bf16.mxu0 0
      %1525 = vmatpush1.bf16.msra.mxu0 0
      %1526 = vmatprep.subr.bf16.mxu0 0
      %1527 = vmatpush1.bf16.msra.mxu0 0
      %1528 = vmatprep.subr.bf16.mxu0 0
      %1529 = vmatpush1.bf16.msra.mxu0 0
      %1530 = vmatprep.subr.bf16.mxu0 0
      %1531 = vmatpush1.bf16.msra.mxu0 0
      %1532 = vmatprep.subr.bf16.mxu0 0
      %1533 = vmatpush1.bf16.msra.mxu0 0
      %1534 = vmatprep.subr.bf16.mxu0 0
      %1535 = vmatpush1.bf16.msra.mxu0 0
      %1536 = vmatprep.subr.bf16.mxu0 0
      %1537 = vmatpush1.bf16.msra.mxu0 0
      %1538 = vmatprep.subr.bf16.mxu0 0
      %1539 = vmatpush1.bf16.msra.mxu0 0
      %1540 = vmatprep.subr.bf16.mxu0 0
      %1541 = vmatpush1.bf16.msra.mxu0 0
      %1542 = vmatprep.subr.bf16.mxu0 0
      %1543 = vmatpush1.bf16.msra.mxu0 0
      %1544 = vmatprep.subr.bf16.mxu0 0
      %1545 = vmatpush1.bf16.msra.mxu0 0
      %1546 = vmatprep.subr.bf16.mxu0 0
      %1547 = vmatpush1.bf16.msra.mxu0 0
      %1548 = vmatprep.mubr.bf16.mxu0 0
      %1549 = vmatmul.mubr.bf16.gmra.mrb[0].mxu0 %v1511
      %v1550 = vpop.f32.mrb[0].mxu0
      %v1551 = vadd.f32 0.0, %v1550
      %v1552 = vpop.f32.mrb[0].mxu0
      %v1553 = vpop.f32.mrb[0].mxu0
      %v1554 = vadd.f32 0.0, %v1553
      %v1555 = vpop.f32.mrb[0].mxu0
      %1556 = vdwg.mxu0
      %v1557 = vadd.f32 %v1480, %v1551
      %v1558 = vadd.f32 %v1483, %v1554
      %v1559 = vsel %vm1370, 65537, 0
      %v1560 = vlaneseq
      %v1561 = vshrl.u32 %v1560, 7
      %v1562 = vsub.s32 0, %v1561
      %v1563 = vrot.slane %v1559, %v1562
      %1564 = vrot.lane.b32.xlu0 %v1563, 8
      %v1565 = vpop.permute.xlu0 %1564
      %vm1566 = vcmp.ne.s16.totalorder %v1565, 0
      %v1567 = vsel %vm1566, %v1353, 0
      %s1568 = scalar_lea.vmem %s3, 24
      %v1569 = vld [vmem:[%s1568] sm:$0xf]
      %v1570 = vld [vmem:[%s1568 + $0x4] sm:$0xf]
      %v1573 = vunpack.c.l.b16 %v1569
      %v1574 = vunpack.c.l.b16 %v1570
      %v1575 = vpack.c.b16 %v1574, %v1573
      %1577 = vrot.lane.b32.xlu0 %v1567, 120
      %v1578 = vpop.permute.xlu0 %1577
      %v1580 = vsel %vm1385, %v1575, 0
      %v1583 = vsel %vm1389, %v1578, 0
      %1585 = vmatprep.subr.bf16.mxu0 0
      %1586 = vmatpush1.bf16.msra.mxu0 %v1583
      %1587 = vmatprep.subr.bf16.mxu0 0
      %1588 = vmatpush1.bf16.msra.mxu0 0
      %1589 = vmatprep.subr.bf16.mxu0 0
      %1590 = vmatpush1.bf16.msra.mxu0 0
      %1591 = vmatprep.subr.bf16.mxu0 0
      %1592 = vmatpush1.bf16.msra.mxu0 0
      %1593 = vmatprep.subr.bf16.mxu0 0
      %1594 = vmatpush1.bf16.msra.mxu0 0
      %1595 = vmatprep.subr.bf16.mxu0 0
      %1596 = vmatpush1.bf16.msra.mxu0 0
      %1597 = vmatprep.subr.bf16.mxu0 0
      %1598 = vmatpush1.bf16.msra.mxu0 0
      %1599 = vmatprep.subr.bf16.mxu0 0
      %1600 = vmatpush1.bf16.msra.mxu0 0
      %1601 = vmatprep.subr.bf16.mxu0 0
      %1602 = vmatpush1.bf16.msra.mxu0 0
      %1603 = vmatprep.subr.bf16.mxu0 0
      %1604 = vmatpush1.bf16.msra.mxu0 0
      %1605 = vmatprep.subr.bf16.mxu0 0
      %1606 = vmatpush1.bf16.msra.mxu0 0
      %1607 = vmatprep.subr.bf16.mxu0 0
      %1608 = vmatpush1.bf16.msra.mxu0 0
      %1609 = vmatprep.subr.bf16.mxu0 0
      %1610 = vmatpush1.bf16.msra.mxu0 0
      %1611 = vmatprep.subr.bf16.mxu0 0
      %1612 = vmatpush1.bf16.msra.mxu0 0
      %1613 = vmatprep.subr.bf16.mxu0 0
      %1614 = vmatpush1.bf16.msra.mxu0 0
      %1615 = vmatprep.subr.bf16.mxu0 0
      %1616 = vmatpush1.bf16.msra.mxu0 0
      %1617 = vmatprep.mubr.bf16.mxu0 0
      %1618 = vmatmul.mubr.bf16.gmra.mrb[0].mxu0 %v1580
      %v1619 = vpop.f32.mrb[0].mxu0
      %v1620 = vadd.f32 0.0, %v1619
      %v1621 = vpop.f32.mrb[0].mxu0
      %v1622 = vpop.f32.mrb[0].mxu0
      %v1623 = vadd.f32 0.0, %v1622
      %v1624 = vpop.f32.mrb[0].mxu0
      %1625 = vdwg.mxu0
      %v1626 = vadd.f32 %v1557, %v1620
      %v1627 = vadd.f32 %v1558, %v1623
      %s1628 = scalar_lea.vmem %s3, 32
      %v1629 = vld [vmem:[%s1628] sm:$0xf]
      %v1630 = vld [vmem:[%s1628 + $0x4] sm:$0xf]
      %v1633 = vunpack.c.l.b16 %v1629
      %v1634 = vunpack.c.l.b16 %v1630
      %v1635 = vpack.c.b16 %v1634, %v1633
      %1636 = vrot.lane.b32.xlu0 %v1353, 119
      %v1637 = vpop.permute.xlu0 %1636
      %v1639 = vsel %vm1385, %v1635, 0
      %v1642 = vsel %vm1389, %v1637, 0
      %1644 = vmatprep.subr.bf16.mxu0 0
      %1645 = vmatpush1.bf16.msra.mxu0 %v1642
      %1646 = vmatprep.subr.bf16.mxu0 0
      %1647 = vmatpush1.bf16.msra.mxu0 0
      %1648 = vmatprep.subr.bf16.mxu0 0
      %1649 = vmatpush1.bf16.msra.mxu0 0
      %1650 = vmatprep.subr.bf16.mxu0 0
      %1651 = vmatpush1.bf16.msra.mxu0 0
      %1652 = vmatprep.subr.bf16.mxu0 0
      %1653 = vmatpush1.bf16.msra.mxu0 0
      %1654 = vmatprep.subr.bf16.mxu0 0
      %1655 = vmatpush1.bf16.msra.mxu0 0
      %1656 = vmatprep.subr.bf16.mxu0 0
      %1657 = vmatpush1.bf16.msra.mxu0 0
      %1658 = vmatprep.subr.bf16.mxu0 0
      %1659 = vmatpush1.bf16.msra.mxu0 0
      %1660 = vmatprep.subr.bf16.mxu0 0
      %1661 = vmatpush1.bf16.msra.mxu0 0
      %1662 = vmatprep.subr.bf16.mxu0 0
      %1663 = vmatpush1.bf16.msra.mxu0 0
      %1664 = vmatprep.subr.bf16.mxu0 0
      %1665 = vmatpush1.bf16.msra.mxu0 0
      %1666 = vmatprep.subr.bf16.mxu0 0
      %1667 = vmatpush1.bf16.msra.mxu0 0
      %1668 = vmatprep.subr.bf16.mxu0 0
      %1669 = vmatpush1.bf16.msra.mxu0 0
      %1670 = vmatprep.subr.bf16.mxu0 0
      %1671 = vmatpush1.bf16.msra.mxu0 0
      %1672 = vmatprep.subr.bf16.mxu0 0
      %1673 = vmatpush1.bf16.msra.mxu0 0
      %1674 = vmatprep.subr.bf16.mxu0 0
      %1675 = vmatpush1.bf16.msra.mxu0 0
      %1676 = vmatprep.mubr.bf16.mxu0 0
      %1677 = vmatmul.mubr.bf16.gmra.mrb[0].mxu0 %v1639
      %v1678 = vpop.f32.mrb[0].mxu0
      %v1679 = vadd.f32 0.0, %v1678
      %v1680 = vpop.f32.mrb[0].mxu0
      %v1681 = vpop.f32.mrb[0].mxu0
      %v1682 = vadd.f32 0.0, %v1681
      %v1683 = vpop.f32.mrb[0].mxu0
      %1684 = vdwg.mxu0
      %v1685 = vadd.f32 %v1626, %v1679
      %v1686 = vadd.f32 %v1627, %v1682
      %1687 = vrot.lane.b32.xlu0 %v1494, 10
      %v1688 = vpop.permute.xlu0 %1687
      %vm1689 = vcmp.ne.s16.totalorder %v1688, 0
      %v1690 = vsel %vm1689, %v1353, 0
      %s1691 = scalar_lea.vmem %s3, 40
      %v1692 = vld [vmem:[%s1691] sm:$0xf]
      %v1693 = vld [vmem:[%s1691 + $0x4] sm:$0xf]
      %v1696 = vunpack.c.l.b16 %v1692
      %v1697 = vunpack.c.l.b16 %v1693
      %v1698 = vpack.c.b16 %v1697, %v1696
      %1700 = vrot.lane.b32.xlu0 %v1690, 118
      %v1701 = vpop.permute.xlu0 %1700
      %v1703 = vsel %vm1385, %v1698, 0
      %v1706 = vsel %vm1389, %v1701, 0
      %1708 = vmatprep.subr.bf16.mxu0 0
      %1709 = vmatpush1.bf16.msra.mxu0 %v1706
      %1710 = vmatprep.subr.bf16.mxu0 0
      %1711 = vmatpush1.bf16.msra.mxu0 0
      %1712 = vmatprep.subr.bf16.mxu0 0
      %1713 = vmatpush1.bf16.msra.mxu0 0
      %1714 = vmatprep.subr.bf16.mxu0 0
      %1715 = vmatpush1.bf16.msra.mxu0 0
      %1716 = vmatprep.subr.bf16.mxu0 0
      %1717 = vmatpush1.bf16.msra.mxu0 0
      %1718 = vmatprep.subr.bf16.mxu0 0
      %1719 = vmatpush1.bf16.msra.mxu0 0
      %1720 = vmatprep.subr.bf16.mxu0 0
      %1721 = vmatpush1.bf16.msra.mxu0 0
      %1722 = vmatprep.subr.bf16.mxu0 0
      %1723 = vmatpush1.bf16.msra.mxu0 0
      %1724 = vmatprep.subr.bf16.mxu0 0
      %1725 = vmatpush1.bf16.msra.mxu0 0
      %1726 = vmatprep.subr.bf16.mxu0 0
      %1727 = vmatpush1.bf16.msra.mxu0 0
      %1728 = vmatprep.subr.bf16.mxu0 0
      %1729 = vmatpush1.bf16.msra.mxu0 0
      %1730 = vmatprep.subr.bf16.mxu0 0
      %1731 = vmatpush1.bf16.msra.mxu0 0
      %1732 = vmatprep.subr.bf16.mxu0 0
      %1733 = vmatpush1.bf16.msra.mxu0 0
      %1734 = vmatprep.subr.bf16.mxu0 0
      %1735 = vmatpush1.bf16.msra.mxu0 0
      %1736 = vmatprep.subr.bf16.mxu0 0
      %1737 = vmatpush1.bf16.msra.mxu0 0
      %1738 = vmatprep.subr.bf16.mxu0 0
      %1739 = vmatpush1.bf16.msra.mxu0 0
      %1740 = vmatprep.mubr.bf16.mxu0 0
      %1741 = vmatmul.mubr.bf16.gmra.mrb[0].mxu0 %v1703
      %v1742 = vpop.f32.mrb[0].mxu0
      %v1743 = vadd.f32 0.0, %v1742
      %v1744 = vpop.f32.mrb[0].mxu0
      %v1745 = vpop.f32.mrb[0].mxu0
      %v1746 = vadd.f32 0.0, %v1745
      %v1747 = vpop.f32.mrb[0].mxu0
      %1748 = vdwg.mxu0
      %v1749 = vadd.f32 %v1685, %v1743
      %v1750 = vadd.f32 %v1686, %v1746
      %1751 = vrot.lane.b32.xlu0 %v1563, 16
      %v1752 = vpop.permute.xlu0 %1751
      %vm1753 = vcmp.ne.s16.totalorder %v1752, 0
      %v1754 = vsel %vm1753, %v1353, 0
      %s1755 = scalar_lea.vmem %s3, 48
      %v1756 = vld [vmem:[%s1755] sm:$0xf]
      %v1757 = vld [vmem:[%s1755 + $0x4] sm:$0xf]
      %v1760 = vunpack.c.l.b16 %v1756
      %v1761 = vunpack.c.l.b16 %v1757
      %v1762 = vpack.c.b16 %v1761, %v1760
      %1764 = vrot.lane.b32.xlu0 %v1754, 112
      %v1765 = vpop.permute.xlu0 %1764
      %v1767 = vsel %vm1385, %v1762, 0
      %v1770 = vsel %vm1389, %v1765, 0
      %1772 = vmatprep.subr.bf16.mxu0 0
      %1773 = vmatpush1.bf16.msra.mxu0 %v1770
      %1774 = vmatprep.subr.bf16.mxu0 0
      %1775 = vmatpush1.bf16.msra.mxu0 0
      %1776 = vmatprep.subr.bf16.mxu0 0
      %1777 = vmatpush1.bf16.msra.mxu0 0
      %1778 = vmatprep.subr.bf16.mxu0 0
      %1779 = vmatpush1.bf16.msra.mxu0 0
      %1780 = vmatprep.subr.bf16.mxu0 0
      %1781 = vmatpush1.bf16.msra.mxu0 0
      %1782 = vmatprep.subr.bf16.mxu0 0
      %1783 = vmatpush1.bf16.msra.mxu0 0
      %1784 = vmatprep.subr.bf16.mxu0 0
      %1785 = vmatpush1.bf16.msra.mxu0 0
      %1786 = vmatprep.subr.bf16.mxu0 0
      %1787 = vmatpush1.bf16.msra.mxu0 0
      %1788 = vmatprep.subr.bf16.mxu0 0
      %1789 = vmatpush1.bf16.msra.mxu0 0
      %1790 = vmatprep.subr.bf16.mxu0 0
      %1791 = vmatpush1.bf16.msra.mxu0 0
      %1792 = vmatprep.subr.bf16.mxu0 0
      %1793 = vmatpush1.bf16.msra.mxu0 0
      %1794 = vmatprep.subr.bf16.mxu0 0
      %1795 = vmatpush1.bf16.msra.mxu0 0
      %1796 = vmatprep.subr.bf16.mxu0 0
      %1797 = vmatpush1.bf16.msra.mxu0 0
      %1798 = vmatprep.subr.bf16.mxu0 0
      %1799 = vmatpush1.bf16.msra.mxu0 0
      %1800 = vmatprep.subr.bf16.mxu0 0
      %1801 = vmatpush1.bf16.msra.mxu0 0
      %1802 = vmatprep.subr.bf16.mxu0 0
      %1803 = vmatpush1.bf16.msra.mxu0 0
      %1804 = vmatprep.mubr.bf16.mxu0 0
      %1805 = vmatmul.mubr.bf16.gmra.mrb[0].mxu0 %v1767
      %v1806 = vpop.f32.mrb[0].mxu0
      %v1807 = vadd.f32 0.0, %v1806
      %v1808 = vpop.f32.mrb[0].mxu0
      %v1809 = vpop.f32.mrb[0].mxu0
      %v1810 = vadd.f32 0.0, %v1809
      %v1811 = vpop.f32.mrb[0].mxu0
      %1812 = vdwg.mxu0
      %v1813 = vadd.f32 %v1749, %v1807
      %v1814 = vadd.f32 %v1750, %v1810
      %s1815 = scalar_lea.vmem %s3, 56
      %v1816 = vld [vmem:[%s1815] sm:$0xf]
      %v1817 = vld [vmem:[%s1815 + $0x4] sm:$0xf]
      %v1820 = vunpack.c.l.b16 %v1816
      %v1821 = vunpack.c.l.b16 %v1817
      %v1822 = vpack.c.b16 %v1821, %v1820
      %1823 = vrot.lane.b32.xlu0 %v1353, 111
      %v1824 = vpop.permute.xlu0 %1823
      %v1826 = vsel %vm1385, %v1822, 0
      %v1829 = vsel %vm1389, %v1824, 0
      %1831 = vmatprep.subr.bf16.mxu0 0
      %1832 = vmatpush1.bf16.msra.mxu0 %v1829
      %1833 = vmatprep.subr.bf16.mxu0 0
      %1834 = vmatpush1.bf16.msra.mxu0 0
      %1835 = vmatprep.subr.bf16.mxu0 0
      %1836 = vmatpush1.bf16.msra.mxu0 0
      %1837 = vmatprep.subr.bf16.mxu0 0
      %1838 = vmatpush1.bf16.msra.mxu0 0
      %1839 = vmatprep.subr.bf16.mxu0 0
      %1840 = vmatpush1.bf16.msra.mxu0 0
      %1841 = vmatprep.subr.bf16.mxu0 0
      %1842 = vmatpush1.bf16.msra.mxu0 0
      %1843 = vmatprep.subr.bf16.mxu0 0
      %1844 = vmatpush1.bf16.msra.mxu0 0
      %1845 = vmatprep.subr.bf16.mxu0 0
      %1846 = vmatpush1.bf16.msra.mxu0 0
      %1847 = vmatprep.subr.bf16.mxu0 0
      %1848 = vmatpush1.bf16.msra.mxu0 0
      %1849 = vmatprep.subr.bf16.mxu0 0
      %1850 = vmatpush1.bf16.msra.mxu0 0
      %1851 = vmatprep.subr.bf16.mxu0 0
      %1852 = vmatpush1.bf16.msra.mxu0 0
      %1853 = vmatprep.subr.bf16.mxu0 0
      %1854 = vmatpush1.bf16.msra.mxu0 0
      %1855 = vmatprep.subr.bf16.mxu0 0
      %1856 = vmatpush1.bf16.msra.mxu0 0
      %1857 = vmatprep.subr.bf16.mxu0 0
      %1858 = vmatpush1.bf16.msra.mxu0 0
      %1859 = vmatprep.subr.bf16.mxu0 0
      %1860 = vmatpush1.bf16.msra.mxu0 0
      %1861 = vmatprep.subr.bf16.mxu0 0
      %1862 = vmatpush1.bf16.msra.mxu0 0
      %1863 = vmatprep.mubr.bf16.mxu0 0
      %1864 = vmatmul.mubr.bf16.gmra.mrb[0].mxu0 %v1826
      %v1865 = vpop.f32.mrb[0].mxu0
      %v1866 = vadd.f32 0.0, %v1865
      %v1867 = vpop.f32.mrb[0].mxu0
      %v1868 = vpop.f32.mrb[0].mxu0
      %v1869 = vadd.f32 0.0, %v1868
      %v1870 = vpop.f32.mrb[0].mxu0
      %1871 = vdwg.mxu0
      %v1872 = vadd.f32 %v1813, %v1866
      %v1873 = vadd.f32 %v1814, %v1869
      %1874 = vrot.lane.b32.xlu0 %v1494, 18
      %v1875 = vpop.permute.xlu0 %1874
      %vm1876 = vcmp.ne.s16.totalorder %v1875, 0
      %v1877 = vsel %vm1876, %v1353, 0
      %s1878 = scalar_lea.vmem %s3, 64
      %v1879 = vld [vmem:[%s1878] sm:$0xf]
      %v1880 = vld [vmem:[%s1878 + $0x4] sm:$0xf]
      %v1883 = vunpack.c.l.b16 %v1879
      %v1884 = vunpack.c.l.b16 %v1880
      %v1885 = vpack.c.b16 %v1884, %v1883
      %1887 = vrot.lane.b32.xlu0 %v1877, 110
      %v1888 = vpop.permute.xlu0 %1887
      %v1890 = vsel %vm1385, %v1885, 0
      %v1893 = vsel %vm1389, %v1888, 0
      %1895 = vmatprep.subr.bf16.mxu0 0
      %1896 = vmatpush1.bf16.msra.mxu0 %v1893
      %1897 = vmatprep.subr.bf16.mxu0 0
      %1898 = vmatpush1.bf16.msra.mxu0 0
      %1899 = vmatprep.subr.bf16.mxu0 0
      %1900 = vmatpush1.bf16.msra.mxu0 0
      %1901 = vmatprep.subr.bf16.mxu0 0
      %1902 = vmatpush1.bf16.msra.mxu0 0
      %1903 = vmatprep.subr.bf16.mxu0 0
      %1904 = vmatpush1.bf16.msra.mxu0 0
      %1905 = vmatprep.subr.bf16.mxu0 0
      %1906 = vmatpush1.bf16.msra.mxu0 0
      %1907 = vmatprep.subr.bf16.mxu0 0
      %1908 = vmatpush1.bf16.msra.mxu0 0
      %1909 = vmatprep.subr.bf16.mxu0 0
      %1910 = vmatpush1.bf16.msra.mxu0 0
      %1911 = vmatprep.subr.bf16.mxu0 0
      %1912 = vmatpush1.bf16.msra.mxu0 0
      %1913 = vmatprep.subr.bf16.mxu0 0
      %1914 = vmatpush1.bf16.msra.mxu0 0
      %1915 = vmatprep.subr.bf16.mxu0 0
      %1916 = vmatpush1.bf16.msra.mxu0 0
      %1917 = vmatprep.subr.bf16.mxu0 0
      %1918 = vmatpush1.bf16.msra.mxu0 0
      %1919 = vmatprep.subr.bf16.mxu0 0
      %1920 = vmatpush1.bf16.msra.mxu0 0
      %1921 = vmatprep.subr.bf16.mxu0 0
      %1922 = vmatpush1.bf16.msra.mxu0 0
      %1923 = vmatprep.subr.bf16.mxu0 0
      %1924 = vmatpush1.bf16.msra.mxu0 0
      %1925 = vmatprep.subr.bf16.mxu0 0
      %1926 = vmatpush1.bf16.msra.mxu0 0
      %1927 = vmatprep.mubr.bf16.mxu0 0
      %1928 = vmatmul.mubr.bf16.gmra.mrb[0].mxu0 %v1890
      %v1929 = vpop.f32.mrb[0].mxu0
      %v1930 = vadd.f32 0.0, %v1929
      %v1931 = vpop.f32.mrb[0].mxu0
      %v1932 = vpop.f32.mrb[0].mxu0
      %v1933 = vadd.f32 0.0, %v1932
      %v1934 = vpop.f32.mrb[0].mxu0
      %1935 = vdwg.mxu0
      %v1936 = vadd.f32 %v1872, %v1930
      %v1937 = vadd.f32 %v1873, %v1933
      %v1938 = vld [vmem:[%s4] sm:$0xff]
      %v1939 = vld [vmem:[%s4 + $0x8] sm:$0xff]
      %1941 = vset.pattern.permute.xlu0 0
      %1942 = vperm.xlu0 %1941, %v1938
      %v1943 = vpop.permute.xlu0 %1942
      %1946 = vset.pattern.permute.xlu0 0
      %1947 = vperm.xlu0 %1946, %v1939
      %v1948 = vpop.permute.xlu0 %1947
      %v1950 = vadd.f32 %v1936, %v1943
      %v1951 = vadd.f32 %v1937, %v1948
      %v1952 = vmax.f32 %v1950, 0.0
      %v1953 = vmax.f32 %v1951, 0.0
      %v1954 = vpack.c.bf16 %v1953, %v1952
      %v1955 = vld [vmem:[%s11] sm:$0xff]
      %v1956 = vld [vmem:[%s11 + $0x8] sm:$0xff]
      %v1957 = vld [vmem:[%s11 + $0x10] sm:$0xff]
      %v1958 = vld [vmem:[%s11 + $0x18] sm:$0xff]
      %v1959 = vld [vmem:[%s11 + $0x20] sm:$0xff]
      %v1960 = vld [vmem:[%s11 + $0x28] sm:$0xff]
      %v1961 = vld [vmem:[%s11 + $0x30] sm:$0xff]
      %v1962 = vld [vmem:[%s11 + $0x38] sm:$0xff]
      %v1971 = vunpack.c.l.b16 %v1955
      %v1972 = vunpack.c.h.b16 %v1955
      %v1973 = vunpack.c.l.b16 %v1956
      %v1974 = vunpack.c.h.b16 %v1956
      %v1975 = vunpack.c.l.b16 %v1957
      %v1976 = vunpack.c.h.b16 %v1957
      %v1977 = vunpack.c.l.b16 %v1958
      %v1978 = vunpack.c.h.b16 %v1958
      %v1979 = vunpack.c.l.b16 %v1959
      %v1980 = vunpack.c.h.b16 %v1959
      %v1981 = vunpack.c.l.b16 %v1960
      %v1982 = vunpack.c.h.b16 %v1960
      %v1983 = vunpack.c.l.b16 %v1961
      %v1984 = vunpack.c.h.b16 %v1961
      %v1985 = vunpack.c.l.b16 %v1962
      %v1986 = vunpack.c.h.b16 %v1962
      %v1987 = vpack.c.b16 %v1973, %v1971
      %v1988 = vpack.c.b16 %v1974, %v1972
      %v1989 = vpack.c.b16 %v1977, %v1975
      %v1990 = vpack.c.b16 %v1978, %v1976
      %v1991 = vpack.c.b16 %v1981, %v1979
      %v1992 = vpack.c.b16 %v1982, %v1980
      %v1993 = vpack.c.b16 %v1985, %v1983
      %v1994 = vpack.c.b16 %v1986, %v1984
      %vm2003 = vcmask 523264
      %v2005 = vsel %vm2003, %v1954, 0
      %2007 = vmatprep.subr.bf16.mxu0 %v1988
      %2008 = vmatpush1.bf16.msra.mxu0 %v1987
      %2009 = vmatprep.subr.bf16.mxu0 %v1990
      %2010 = vmatpush1.bf16.msra.mxu0 %v1989
      %2011 = vmatprep.subr.bf16.mxu0 %v1992
      %2012 = vmatpush1.bf16.msra.mxu0 %v1991
      %2013 = vmatprep.subr.bf16.mxu0 %v1994
      %2014 = vmatpush1.bf16.msra.mxu0 %v1993
      %2015 = vmatprep.subr.bf16.mxu0 0
      %2016 = vmatpush1.bf16.msra.mxu0 0
      %2017 = vmatprep.subr.bf16.mxu0 0
      %2018 = vmatpush1.bf16.msra.mxu0 0
      %2019 = vmatprep.subr.bf16.mxu0 0
      %2020 = vmatpush1.bf16.msra.mxu0 0
      %2021 = vmatprep.subr.bf16.mxu0 0
      %2022 = vmatpush1.bf16.msra.mxu0 0
      %2023 = vmatprep.subr.bf16.mxu0 0
      %2024 = vmatpush1.bf16.msra.mxu0 0
      %2025 = vmatprep.subr.bf16.mxu0 0
      %2026 = vmatpush1.bf16.msra.mxu0 0
      %2027 = vmatprep.subr.bf16.mxu0 0
      %2028 = vmatpush1.bf16.msra.mxu0 0
      %2029 = vmatprep.subr.bf16.mxu0 0
      %2030 = vmatpush1.bf16.msra.mxu0 0
      %2031 = vmatprep.subr.bf16.mxu0 0
      %2032 = vmatpush1.bf16.msra.mxu0 0
      %2033 = vmatprep.subr.bf16.mxu0 0
      %2034 = vmatpush1.bf16.msra.mxu0 0
      %2035 = vmatprep.subr.bf16.mxu0 0
      %2036 = vmatpush1.bf16.msra.mxu0 0
      %2037 = vmatprep.subr.bf16.mxu0 0
      %2038 = vmatpush1.bf16.msra.mxu0 0
      %2039 = vmatprep.mubr.bf16.mxu0 0
      %2040 = vmatmul.mubr.bf16.gmra.mrb[0].mxu0 %v2005
      %v2041 = vpop.f32.mrb[0].mxu0
      %v2042 = vadd.f32 0.0, %v2041
      %v2043 = vpop.f32.mrb[0].mxu0
      %v2044 = vadd.f32 0.0, %v2043
      %v2045 = vpop.f32.mrb[0].mxu0
      %v2046 = vadd.f32 0.0, %v2045
      %v2047 = vpop.f32.mrb[0].mxu0
      %v2048 = vadd.f32 0.0, %v2047
      %2049 = vdwg.mxu0
      %v2050 = vpack.c.bf16 %v2046, %v2042
      %v2051 = vpack.c.bf16 %v2048, %v2044
      %2054 = vrot.lane.b32.xlu0 %v2050, 17
      %v2055 = vpop.permute.xlu0 %2054
      %2056 = vrot.lane.b32.xlu0 %v2051, 17
      %v2057 = vpop.permute.xlu0 %2056
      %v2058 = vsel %vm431, %v2055, %v2057
      %v2061 = vsel %vm434, 0, %v2055
      %v2064 = vsel %vm434, %v2057, 0
      %v2066 = vsel %vm485, %v2061, 0
      %v2067 = vsel %vm486, %v2058, 0
      %v2068 = vld [vmem:[%s5] sm:$0xf]
      %s2069 = scalar_lea.vmem %s5, 4
      %v2070 = vld [vmem:[%s2069] sm:$0xf]
      %2073 = vrot.lane.b32.xlu0 %v2061, 127
      %v2074 = vpop.permute.xlu0 %2073
      %2075 = vrot.lane.b32.xlu0 %v2058, 127
      %v2076 = vpop.permute.xlu0 %2075
      %2077 = vrot.lane.b32.xlu0 %v2064, 127
      %v2078 = vpop.permute.xlu0 %2077
      %v2079 = vsel %vm500, %v2074, %v2076
      %v2080 = vsel %vm500, %v2076, %v2078
      %vm2083 = vcmask 130048
      %v2085 = vsel %vm2083, %v2070, 0
      %2087 = vmatprep.subr.bf16.mxu0 %v2080
      %2088 = vmatpush1.bf16.msra.mxu0 %v2079
      %2089 = vmatprep.subr.bf16.mxu0 0
      %2090 = vmatpush1.bf16.msra.mxu0 0
      %2091 = vmatprep.subr.bf16.mxu0 0
      %2092 = vmatpush1.bf16.msra.mxu0 0
      %2093 = vmatprep.subr.bf16.mxu0 0
      %2094 = vmatpush1.bf16.msra.mxu0 0
      %2095 = vmatprep.subr.bf16.mxu0 0
      %2096 = vmatpush1.bf16.msra.mxu0 0
      %2097 = vmatprep.subr.bf16.mxu0 0
      %2098 = vmatpush1.bf16.msra.mxu0 0
      %2099 = vmatprep.subr.bf16.mxu0 0
      %2100 = vmatpush1.bf16.msra.mxu0 0
      %2101 = vmatprep.subr.bf16.mxu0 0
      %2102 = vmatpush1.bf16.msra.mxu0 0
      %2103 = vmatprep.subr.bf16.mxu0 0
      %2104 = vmatpush1.bf16.msra.mxu0 0
      %2105 = vmatprep.subr.bf16.mxu0 0
      %2106 = vmatpush1.bf16.msra.mxu0 0
      %2107 = vmatprep.subr.bf16.mxu0 0
      %2108 = vmatpush1.bf16.msra.mxu0 0
      %2109 = vmatprep.subr.bf16.mxu0 0
      %2110 = vmatpush1.bf16.msra.mxu0 0
      %2111 = vmatprep.subr.bf16.mxu0 0
      %2112 = vmatpush1.bf16.msra.mxu0 0
      %2113 = vmatprep.subr.bf16.mxu0 0
      %2114 = vmatpush1.bf16.msra.mxu0 0
      %2115 = vmatprep.subr.bf16.mxu0 0
      %2116 = vmatpush1.bf16.msra.mxu0 0
      %2117 = vmatprep.subr.bf16.mxu0 0
      %2118 = vmatpush1.bf16.msra.mxu0 0
      %2119 = vmatprep.mubr.bf16.mxu0 0
      %2120 = vmatmul.mubr.bf16.gmra.mrb[0].mxu0 %v2085
      %v2121 = vpop.f32.mrb[0].mxu0
      %v2122 = vadd.f32 0.0, %v2121
      %v2123 = vpop.f32.mrb[0].mxu0
      %v2124 = vadd.f32 0.0, %v2123
      %v2125 = vpop.f32.mrb[0].mxu0
      %v2126 = vpop.f32.mrb[0].mxu0
      %2127 = vdwg.mxu0
      %v2129 = vsel %vm2083, %v2068, 0
      %2131 = vmatprep.subr.bf16.mxu0 %v2067
      %2132 = vmatpush1.bf16.msra.mxu0 %v2066
      %2133 = vmatprep.subr.bf16.mxu0 0
      %2134 = vmatpush1.bf16.msra.mxu0 0
      %2135 = vmatprep.subr.bf16.mxu0 0
      %2136 = vmatpush1.bf16.msra.mxu0 0
      %2137 = vmatprep.subr.bf16.mxu0 0
      %2138 = vmatpush1.bf16.msra.mxu0 0
      %2139 = vmatprep.subr.bf16.mxu0 0
      %2140 = vmatpush1.bf16.msra.mxu0 0
      %2141 = vmatprep.subr.bf16.mxu0 0
      %2142 = vmatpush1.bf16.msra.mxu0 0
      %2143 = vmatprep.subr.bf16.mxu0 0
      %2144 = vmatpush1.bf16.msra.mxu0 0
      %2145 = vmatprep.subr.bf16.mxu0 0
      %2146 = vmatpush1.bf16.msra.mxu0 0
      %2147 = vmatprep.subr.bf16.mxu0 0
      %2148 = vmatpush1.bf16.msra.mxu0 0
      %2149 = vmatprep.subr.bf16.mxu0 0
      %2150 = vmatpush1.bf16.msra.mxu0 0
      %2151 = vmatprep.subr.bf16.mxu0 0
      %2152 = vmatpush1.bf16.msra.mxu0 0
      %2153 = vmatprep.subr.bf16.mxu0 0
      %2154 = vmatpush1.bf16.msra.mxu0 0
      %2155 = vmatprep.subr.bf16.mxu0 0
      %2156 = vmatpush1.bf16.msra.mxu0 0
      %2157 = vmatprep.subr.bf16.mxu0 0
      %2158 = vmatpush1.bf16.msra.mxu0 0
      %2159 = vmatprep.subr.bf16.mxu0 0
      %2160 = vmatpush1.bf16.msra.mxu0 0
      %2161 = vmatprep.subr.bf16.mxu0 0
      %2162 = vmatpush1.bf16.msra.mxu0 0
      %2163 = vmatprep.mubr.bf16.mxu0 0
      %2164 = vmatmul.mubr.bf16.gmra.mrb[0].mxu0 %v2129
      %v2165 = vpop.f32.mrb[0].mxu0
      %v2166 = vadd.f32 %v2122, %v2165
      %v2167 = vpop.f32.mrb[0].mxu0
      %v2168 = vadd.f32 %v2124, %v2167
      %v2169 = vpop.f32.mrb[0].mxu0
      %v2170 = vpop.f32.mrb[0].mxu0
      %2171 = vdwg.mxu0
      %v2172 = vsel %vm627, %v2061, 0
      %v2173 = vsel %vm628, %v2058, 0
      %v2174 = vsel %vm629, %v2064, 0
      %s2175 = scalar_lea.vmem %s5, 8
      %v2176 = vld [vmem:[%s2175] sm:$0xf]
      %2180 = vrot.lane.b32.xlu0 %v2172, 126
      %v2181 = vpop.permute.xlu0 %2180
      %2182 = vrot.lane.b32.xlu0 %v2173, 126
      %v2183 = vpop.permute.xlu0 %2182
      %2184 = vrot.lane.b32.xlu0 %v2174, 126
      %v2185 = vpop.permute.xlu0 %2184
      %v2186 = vsel %vm644, %v2181, %v2183
      %v2187 = vsel %vm644, %v2183, %v2185
      %v2191 = vsel %vm2083, %v2176, 0
      %2193 = vmatprep.subr.bf16.mxu0 %v2187
      %2194 = vmatpush1.bf16.msra.mxu0 %v2186
      %2195 = vmatprep.subr.bf16.mxu0 0
      %2196 = vmatpush1.bf16.msra.mxu0 0
      %2197 = vmatprep.subr.bf16.mxu0 0
      %2198 = vmatpush1.bf16.msra.mxu0 0
      %2199 = vmatprep.subr.bf16.mxu0 0
      %2200 = vmatpush1.bf16.msra.mxu0 0
      %2201 = vmatprep.subr.bf16.mxu0 0
      %2202 = vmatpush1.bf16.msra.mxu0 0
      %2203 = vmatprep.subr.bf16.mxu0 0
      %2204 = vmatpush1.bf16.msra.mxu0 0
      %2205 = vmatprep.subr.bf16.mxu0 0
      %2206 = vmatpush1.bf16.msra.mxu0 0
      %2207 = vmatprep.subr.bf16.mxu0 0
      %2208 = vmatpush1.bf16.msra.mxu0 0
      %2209 = vmatprep.subr.bf16.mxu0 0
      %2210 = vmatpush1.bf16.msra.mxu0 0
      %2211 = vmatprep.subr.bf16.mxu0 0
      %2212 = vmatpush1.bf16.msra.mxu0 0
      %2213 = vmatprep.subr.bf16.mxu0 0
      %2214 = vmatpush1.bf16.msra.mxu0 0
      %2215 = vmatprep.subr.bf16.mxu0 0
      %2216 = vmatpush1.bf16.msra.mxu0 0
      %2217 = vmatprep.subr.bf16.mxu0 0
      %2218 = vmatpush1.bf16.msra.mxu0 0
      %2219 = vmatprep.subr.bf16.mxu0 0
      %2220 = vmatpush1.bf16.msra.mxu0 0
      %2221 = vmatprep.subr.bf16.mxu0 0
      %2222 = vmatpush1.bf16.msra.mxu0 0
      %2223 = vmatprep.subr.bf16.mxu0 0
      %2224 = vmatpush1.bf16.msra.mxu0 0
      %2225 = vmatprep.mubr.bf16.mxu0 0
      %2226 = vmatmul.mubr.bf16.gmra.mrb[0].mxu0 %v2191
      %v2227 = vpop.f32.mrb[0].mxu0
      %v2228 = vadd.f32 0.0, %v2227
      %v2229 = vpop.f32.mrb[0].mxu0
      %v2230 = vadd.f32 0.0, %v2229
      %v2231 = vpop.f32.mrb[0].mxu0
      %v2232 = vpop.f32.mrb[0].mxu0
      %2233 = vdwg.mxu0
      %v2234 = vadd.f32 %v2166, %v2228
      %v2235 = vadd.f32 %v2168, %v2230
      %v2236 = vsel %vm705, %v2061, 0
      %v2237 = vsel %vm706, %v2058, 0
      %v2238 = vsel %vm707, %v2064, 0
      %s2239 = scalar_lea.vmem %s5, 12
      %v2240 = vld [vmem:[%s2239] sm:$0xf]
      %2244 = vrot.lane.b32.xlu0 %v2236, 112
      %v2245 = vpop.permute.xlu0 %2244
      %2246 = vrot.lane.b32.xlu0 %v2237, 112
      %v2247 = vpop.permute.xlu0 %2246
      %2248 = vrot.lane.b32.xlu0 %v2238, 112
      %v2249 = vpop.permute.xlu0 %2248
      %v2250 = vsel %vm722, %v2245, %v2247
      %v2251 = vsel %vm722, %v2247, %v2249
      %v2255 = vsel %vm2083, %v2240, 0
      %2257 = vmatprep.subr.bf16.mxu0 %v2251
      %2258 = vmatpush1.bf16.msra.mxu0 %v2250
      %2259 = vmatprep.subr.bf16.mxu0 0
      %2260 = vmatpush1.bf16.msra.mxu0 0
      %2261 = vmatprep.subr.bf16.mxu0 0
      %2262 = vmatpush1.bf16.msra.mxu0 0
      %2263 = vmatprep.subr.bf16.mxu0 0
      %2264 = vmatpush1.bf16.msra.mxu0 0
      %2265 = vmatprep.subr.bf16.mxu0 0
      %2266 = vmatpush1.bf16.msra.mxu0 0
      %2267 = vmatprep.subr.bf16.mxu0 0
      %2268 = vmatpush1.bf16.msra.mxu0 0
      %2269 = vmatprep.subr.bf16.mxu0 0
      %2270 = vmatpush1.bf16.msra.mxu0 0
      %2271 = vmatprep.subr.bf16.mxu0 0
      %2272 = vmatpush1.bf16.msra.mxu0 0
      %2273 = vmatprep.subr.bf16.mxu0 0
      %2274 = vmatpush1.bf16.msra.mxu0 0
      %2275 = vmatprep.subr.bf16.mxu0 0
      %2276 = vmatpush1.bf16.msra.mxu0 0
      %2277 = vmatprep.subr.bf16.mxu0 0
      %2278 = vmatpush1.bf16.msra.mxu0 0
      %2279 = vmatprep.subr.bf16.mxu0 0
      %2280 = vmatpush1.bf16.msra.mxu0 0
      %2281 = vmatprep.subr.bf16.mxu0 0
      %2282 = vmatpush1.bf16.msra.mxu0 0
      %2283 = vmatprep.subr.bf16.mxu0 0
      %2284 = vmatpush1.bf16.msra.mxu0 0
      %2285 = vmatprep.subr.bf16.mxu0 0
      %2286 = vmatpush1.bf16.msra.mxu0 0
      %2287 = vmatprep.subr.bf16.mxu0 0
      %2288 = vmatpush1.bf16.msra.mxu0 0
      %2289 = vmatprep.mubr.bf16.mxu0 0
      %2290 = vmatmul.mubr.bf16.gmra.mrb[0].mxu0 %v2255
      %v2291 = vpop.f32.mrb[0].mxu0
      %v2292 = vadd.f32 0.0, %v2291
      %v2293 = vpop.f32.mrb[0].mxu0
      %v2294 = vadd.f32 0.0, %v2293
      %v2295 = vpop.f32.mrb[0].mxu0
      %v2296 = vpop.f32.mrb[0].mxu0
      %2297 = vdwg.mxu0
      %v2298 = vadd.f32 %v2234, %v2292
      %v2299 = vadd.f32 %v2235, %v2294
      %s2300 = scalar_lea.vmem %s5, 16
      %v2301 = vld [vmem:[%s2300] sm:$0xf]
      %2302 = vrot.lane.b32.xlu0 %v2061, 111
      %v2303 = vpop.permute.xlu0 %2302
      %2304 = vrot.lane.b32.xlu0 %v2058, 111
      %v2305 = vpop.permute.xlu0 %2304
      %2306 = vrot.lane.b32.xlu0 %v2064, 111
      %v2307 = vpop.permute.xlu0 %2306
      %v2308 = vsel %vm785, %v2303, %v2305
      %v2309 = vsel %vm785, %v2305, %v2307
      %v2313 = vsel %vm2083, %v2301, 0
      %2315 = vmatprep.subr.bf16.mxu0 %v2309
      %2316 = vmatpush1.bf16.msra.mxu0 %v2308
      %2317 = vmatprep.subr.bf16.mxu0 0
      %2318 = vmatpush1.bf16.msra.mxu0 0
      %2319 = vmatprep.subr.bf16.mxu0 0
      %2320 = vmatpush1.bf16.msra.mxu0 0
      %2321 = vmatprep.subr.bf16.mxu0 0
      %2322 = vmatpush1.bf16.msra.mxu0 0
      %2323 = vmatprep.subr.bf16.mxu0 0
      %2324 = vmatpush1.bf16.msra.mxu0 0
      %2325 = vmatprep.subr.bf16.mxu0 0
      %2326 = vmatpush1.bf16.msra.mxu0 0
      %2327 = vmatprep.subr.bf16.mxu0 0
      %2328 = vmatpush1.bf16.msra.mxu0 0
      %2329 = vmatprep.subr.bf16.mxu0 0
      %2330 = vmatpush1.bf16.msra.mxu0 0
      %2331 = vmatprep.subr.bf16.mxu0 0
      %2332 = vmatpush1.bf16.msra.mxu0 0
      %2333 = vmatprep.subr.bf16.mxu0 0
      %2334 = vmatpush1.bf16.msra.mxu0 0
      %2335 = vmatprep.subr.bf16.mxu0 0
      %2336 = vmatpush1.bf16.msra.mxu0 0
      %2337 = vmatprep.subr.bf16.mxu0 0
      %2338 = vmatpush1.bf16.msra.mxu0 0
      %2339 = vmatprep.subr.bf16.mxu0 0
      %2340 = vmatpush1.bf16.msra.mxu0 0
      %2341 = vmatprep.subr.bf16.mxu0 0
      %2342 = vmatpush1.bf16.msra.mxu0 0
      %2343 = vmatprep.subr.bf16.mxu0 0
      %2344 = vmatpush1.bf16.msra.mxu0 0
      %2345 = vmatprep.subr.bf16.mxu0 0
      %2346 = vmatpush1.bf16.msra.mxu0 0
      %2347 = vmatprep.mubr.bf16.mxu0 0
      %2348 = vmatmul.mubr.bf16.gmra.mrb[0].mxu0 %v2313
      %v2349 = vpop.f32.mrb[0].mxu0
      %v2350 = vadd.f32 0.0, %v2349
      %v2351 = vpop.f32.mrb[0].mxu0
      %v2352 = vadd.f32 0.0, %v2351
      %v2353 = vpop.f32.mrb[0].mxu0
      %v2354 = vpop.f32.mrb[0].mxu0
      %2355 = vdwg.mxu0
      %v2356 = vadd.f32 %v2298, %v2350
      %v2357 = vadd.f32 %v2299, %v2352
      %v2358 = vsel %vm846, %v2061, 0
      %v2359 = vsel %vm847, %v2058, 0
      %v2360 = vsel %vm848, %v2064, 0
      %s2361 = scalar_lea.vmem %s5, 20
      %v2362 = vld [vmem:[%s2361] sm:$0xf]
      %2366 = vrot.lane.b32.xlu0 %v2358, 110
      %v2367 = vpop.permute.xlu0 %2366
      %2368 = vrot.lane.b32.xlu0 %v2359, 110
      %v2369 = vpop.permute.xlu0 %2368
      %2370 = vrot.lane.b32.xlu0 %v2360, 110
      %v2371 = vpop.permute.xlu0 %2370
      %v2372 = vsel %vm863, %v2367, %v2369
      %v2373 = vsel %vm863, %v2369, %v2371
      %v2377 = vsel %vm2083, %v2362, 0
      %2379 = vmatprep.subr.bf16.mxu0 %v2373
      %2380 = vmatpush1.bf16.msra.mxu0 %v2372
      %2381 = vmatprep.subr.bf16.mxu0 0
      %2382 = vmatpush1.bf16.msra.mxu0 0
      %2383 = vmatprep.subr.bf16.mxu0 0
      %2384 = vmatpush1.bf16.msra.mxu0 0
      %2385 = vmatprep.subr.bf16.mxu0 0
      %2386 = vmatpush1.bf16.msra.mxu0 0
      %2387 = vmatprep.subr.bf16.mxu0 0
      %2388 = vmatpush1.bf16.msra.mxu0 0
      %2389 = vmatprep.subr.bf16.mxu0 0
      %2390 = vmatpush1.bf16.msra.mxu0 0
      %2391 = vmatprep.subr.bf16.mxu0 0
      %2392 = vmatpush1.bf16.msra.mxu0 0
      %2393 = vmatprep.subr.bf16.mxu0 0
      %2394 = vmatpush1.bf16.msra.mxu0 0
      %2395 = vmatprep.subr.bf16.mxu0 0
      %2396 = vmatpush1.bf16.msra.mxu0 0
      %2397 = vmatprep.subr.bf16.mxu0 0
      %2398 = vmatpush1.bf16.msra.mxu0 0
      %2399 = vmatprep.subr.bf16.mxu0 0
      %2400 = vmatpush1.bf16.msra.mxu0 0
      %2401 = vmatprep.subr.bf16.mxu0 0
      %2402 = vmatpush1.bf16.msra.mxu0 0
      %2403 = vmatprep.subr.bf16.mxu0 0
      %2404 = vmatpush1.bf16.msra.mxu0 0
      %2405 = vmatprep.subr.bf16.mxu0 0
      %2406 = vmatpush1.bf16.msra.mxu0 0
      %2407 = vmatprep.subr.bf16.mxu0 0
      %2408 = vmatpush1.bf16.msra.mxu0 0
      %2409 = vmatprep.subr.bf16.mxu0 0
      %2410 = vmatpush1.bf16.msra.mxu0 0
      %2411 = vmatprep.mubr.bf16.mxu0 0
      %2412 = vmatmul.mubr.bf16.gmra.mrb[0].mxu0 %v2377
      %v2413 = vpop.f32.mrb[0].mxu0
      %v2414 = vadd.f32 0.0, %v2413
      %v2415 = vpop.f32.mrb[0].mxu0
      %v2416 = vadd.f32 0.0, %v2415
      %v2417 = vpop.f32.mrb[0].mxu0
      %v2418 = vpop.f32.mrb[0].mxu0
      %2419 = vdwg.mxu0
      %v2420 = vadd.f32 %v2356, %v2414
      %v2421 = vadd.f32 %v2357, %v2416
      %v2422 = vsel %vm924, %v2061, 0
      %v2423 = vsel %vm925, %v2058, 0
      %v2424 = vsel %vm926, %v2064, 0
      %s2425 = scalar_lea.vmem %s5, 24
      %v2426 = vld [vmem:[%s2425] sm:$0xf]
      %2430 = vrot.lane.b32.xlu0 %v2422, 96
      %v2431 = vpop.permute.xlu0 %2430
      %2432 = vrot.lane.b32.xlu0 %v2423, 96
      %v2433 = vpop.permute.xlu0 %2432
      %2434 = vrot.lane.b32.xlu0 %v2424, 96
      %v2435 = vpop.permute.xlu0 %2434
      %v2436 = vsel %vm941, %v2431, %v2433
      %v2437 = vsel %vm941, %v2433, %v2435
      %v2441 = vsel %vm2083, %v2426, 0
      %2443 = vmatprep.subr.bf16.mxu0 %v2437
      %2444 = vmatpush1.bf16.msra.mxu0 %v2436
      %2445 = vmatprep.subr.bf16.mxu0 0
      %2446 = vmatpush1.bf16.msra.mxu0 0
      %2447 = vmatprep.subr.bf16.mxu0 0
      %2448 = vmatpush1.bf16.msra.mxu0 0
      %2449 = vmatprep.subr.bf16.mxu0 0
      %2450 = vmatpush1.bf16.msra.mxu0 0
      %2451 = vmatprep.subr.bf16.mxu0 0
      %2452 = vmatpush1.bf16.msra.mxu0 0
      %2453 = vmatprep.subr.bf16.mxu0 0
      %2454 = vmatpush1.bf16.msra.mxu0 0
      %2455 = vmatprep.subr.bf16.mxu0 0
      %2456 = vmatpush1.bf16.msra.mxu0 0
      %2457 = vmatprep.subr.bf16.mxu0 0
      %2458 = vmatpush1.bf16.msra.mxu0 0
      %2459 = vmatprep.subr.bf16.mxu0 0
      %2460 = vmatpush1.bf16.msra.mxu0 0
      %2461 = vmatprep.subr.bf16.mxu0 0
      %2462 = vmatpush1.bf16.msra.mxu0 0
      %2463 = vmatprep.subr.bf16.mxu0 0
      %2464 = vmatpush1.bf16.msra.mxu0 0
      %2465 = vmatprep.subr.bf16.mxu0 0
      %2466 = vmatpush1.bf16.msra.mxu0 0
      %2467 = vmatprep.subr.bf16.mxu0 0
      %2468 = vmatpush1.bf16.msra.mxu0 0
      %2469 = vmatprep.subr.bf16.mxu0 0
      %2470 = vmatpush1.bf16.msra.mxu0 0
      %2471 = vmatprep.subr.bf16.mxu0 0
      %2472 = vmatpush1.bf16.msra.mxu0 0
      %2473 = vmatprep.subr.bf16.mxu0 0
      %2474 = vmatpush1.bf16.msra.mxu0 0
      %2475 = vmatprep.mubr.bf16.mxu0 0
      %2476 = vmatmul.mubr.bf16.gmra.mrb[0].mxu0 %v2441
      %v2477 = vpop.f32.mrb[0].mxu0
      %v2478 = vadd.f32 0.0, %v2477
      %v2479 = vpop.f32.mrb[0].mxu0
      %v2480 = vadd.f32 0.0, %v2479
      %v2481 = vpop.f32.mrb[0].mxu0
      %v2482 = vpop.f32.mrb[0].mxu0
      %2483 = vdwg.mxu0
      %v2484 = vadd.f32 %v2420, %v2478
      %v2485 = vadd.f32 %v2421, %v2480
      %s2486 = scalar_lea.vmem %s5, 28
      %v2487 = vld [vmem:[%s2486] sm:$0xf]
      %2488 = vrot.lane.b32.xlu0 %v2061, 95
      %v2489 = vpop.permute.xlu0 %2488
      %2490 = vrot.lane.b32.xlu0 %v2058, 95
      %v2491 = vpop.permute.xlu0 %2490
      %2492 = vrot.lane.b32.xlu0 %v2064, 95
      %v2493 = vpop.permute.xlu0 %2492
      %v2494 = vsel %vm1004, %v2489, %v2491
      %v2495 = vsel %vm1004, %v2491, %v2493
      %v2499 = vsel %vm2083, %v2487, 0
      %2501 = vmatprep.subr.bf16.mxu0 %v2495
      %2502 = vmatpush1.bf16.msra.mxu0 %v2494
      %2503 = vmatprep.subr.bf16.mxu0 0
      %2504 = vmatpush1.bf16.msra.mxu0 0
      %2505 = vmatprep.subr.bf16.mxu0 0
      %2506 = vmatpush1.bf16.msra.mxu0 0
      %2507 = vmatprep.subr.bf16.mxu0 0
      %2508 = vmatpush1.bf16.msra.mxu0 0
      %2509 = vmatprep.subr.bf16.mxu0 0
      %2510 = vmatpush1.bf16.msra.mxu0 0
      %2511 = vmatprep.subr.bf16.mxu0 0
      %2512 = vmatpush1.bf16.msra.mxu0 0
      %2513 = vmatprep.subr.bf16.mxu0 0
      %2514 = vmatpush1.bf16.msra.mxu0 0
      %2515 = vmatprep.subr.bf16.mxu0 0
      %2516 = vmatpush1.bf16.msra.mxu0 0
      %2517 = vmatprep.subr.bf16.mxu0 0
      %2518 = vmatpush1.bf16.msra.mxu0 0
      %2519 = vmatprep.subr.bf16.mxu0 0
      %2520 = vmatpush1.bf16.msra.mxu0 0
      %2521 = vmatprep.subr.bf16.mxu0 0
      %2522 = vmatpush1.bf16.msra.mxu0 0
      %2523 = vmatprep.subr.bf16.mxu0 0
      %2524 = vmatpush1.bf16.msra.mxu0 0
      %2525 = vmatprep.subr.bf16.mxu0 0
      %2526 = vmatpush1.bf16.msra.mxu0 0
      %2527 = vmatprep.subr.bf16.mxu0 0
      %2528 = vmatpush1.bf16.msra.mxu0 0
      %2529 = vmatprep.subr.bf16.mxu0 0
      %2530 = vmatpush1.bf16.msra.mxu0 0
      %2531 = vmatprep.subr.bf16.mxu0 0
      %2532 = vmatpush1.bf16.msra.mxu0 0
      %2533 = vmatprep.mubr.bf16.mxu0 0
      %2534 = vmatmul.mubr.bf16.gmra.mrb[0].mxu0 %v2499
      %v2535 = vpop.f32.mrb[0].mxu0
      %v2536 = vadd.f32 0.0, %v2535
      %v2537 = vpop.f32.mrb[0].mxu0
      %v2538 = vadd.f32 0.0, %v2537
      %v2539 = vpop.f32.mrb[0].mxu0
      %v2540 = vpop.f32.mrb[0].mxu0
      %2541 = vdwg.mxu0
      %v2542 = vadd.f32 %v2484, %v2536
      %v2543 = vadd.f32 %v2485, %v2538
      %v2544 = vsel %vm1065, %v2061, 0
      %v2545 = vsel %vm1066, %v2058, 0
      %v2546 = vsel %vm1067, %v2064, 0
      %s2547 = scalar_lea.vmem %s5, 32
      %v2548 = vld [vmem:[%s2547] sm:$0xf]
      %2552 = vrot.lane.b32.xlu0 %v2544, 94
      %v2553 = vpop.permute.xlu0 %2552
      %2554 = vrot.lane.b32.xlu0 %v2545, 94
      %v2555 = vpop.permute.xlu0 %2554
      %2556 = vrot.lane.b32.xlu0 %v2546, 94
      %v2557 = vpop.permute.xlu0 %2556
      %v2558 = vsel %vm1082, %v2553, %v2555
      %v2559 = vsel %vm1082, %v2555, %v2557
      %v2563 = vsel %vm2083, %v2548, 0
      %2565 = vmatprep.subr.bf16.mxu0 %v2559
      %2566 = vmatpush1.bf16.msra.mxu0 %v2558
      %2567 = vmatprep.subr.bf16.mxu0 0
      %2568 = vmatpush1.bf16.msra.mxu0 0
      %2569 = vmatprep.subr.bf16.mxu0 0
      %2570 = vmatpush1.bf16.msra.mxu0 0
      %2571 = vmatprep.subr.bf16.mxu0 0
      %2572 = vmatpush1.bf16.msra.mxu0 0
      %2573 = vmatprep.subr.bf16.mxu0 0
      %2574 = vmatpush1.bf16.msra.mxu0 0
      %2575 = vmatprep.subr.bf16.mxu0 0
      %2576 = vmatpush1.bf16.msra.mxu0 0
      %2577 = vmatprep.subr.bf16.mxu0 0
      %2578 = vmatpush1.bf16.msra.mxu0 0
      %2579 = vmatprep.subr.bf16.mxu0 0
      %2580 = vmatpush1.bf16.msra.mxu0 0
      %2581 = vmatprep.subr.bf16.mxu0 0
      %2582 = vmatpush1.bf16.msra.mxu0 0
      %2583 = vmatprep.subr.bf16.mxu0 0
      %2584 = vmatpush1.bf16.msra.mxu0 0
      %2585 = vmatprep.subr.bf16.mxu0 0
      %2586 = vmatpush1.bf16.msra.mxu0 0
      %2587 = vmatprep.subr.bf16.mxu0 0
      %2588 = vmatpush1.bf16.msra.mxu0 0
      %2589 = vmatprep.subr.bf16.mxu0 0
      %2590 = vmatpush1.bf16.msra.mxu0 0
      %2591 = vmatprep.subr.bf16.mxu0 0
      %2592 = vmatpush1.bf16.msra.mxu0 0
      %2593 = vmatprep.subr.bf16.mxu0 0
      %2594 = vmatpush1.bf16.msra.mxu0 0
      %2595 = vmatprep.subr.bf16.mxu0 0
      %2596 = vmatpush1.bf16.msra.mxu0 0
      %2597 = vmatprep.mubr.bf16.mxu0 0
      %2598 = vmatmul.mubr.bf16.gmra.mrb[0].mxu0 %v2563
      %v2599 = vpop.f32.mrb[0].mxu0
      %v2600 = vadd.f32 0.0, %v2599
      %v2601 = vpop.f32.mrb[0].mxu0
      %v2602 = vadd.f32 0.0, %v2601
      %v2603 = vpop.f32.mrb[0].mxu0
      %v2604 = vpop.f32.mrb[0].mxu0
      %2605 = vdwg.mxu0
      %v2606 = vadd.f32 %v2542, %v2600
      %v2607 = vadd.f32 %v2543, %v2602
      %2608 = vrot.lane.b32.xlu0 %v1147, 17
      %v2609 = vpop.permute.xlu0 %2608
      %2610 = vrot.lane.b32.xlu0 %v1148, 17
      %v2611 = vpop.permute.xlu0 %2610
      %v2612 = vsel %vm431, %v2609, %v2611
      %v2615 = vsel %vm434, 0, %v2609
      %v2618 = vsel %vm434, %v2611, 0
      %v2620 = vsel %vm485, %v2615, 0
      %v2621 = vsel %vm486, %v2612, 0
      %v2622 = vld [vmem:[%s6] sm:$0xf]
      %s2623 = scalar_lea.vmem %s6, 4
      %v2624 = vld [vmem:[%s2623] sm:$0xf]
      %2627 = vrot.lane.b32.xlu0 %v2615, 127
      %v2628 = vpop.permute.xlu0 %2627
      %2629 = vrot.lane.b32.xlu0 %v2612, 127
      %v2630 = vpop.permute.xlu0 %2629
      %2631 = vrot.lane.b32.xlu0 %v2618, 127
      %v2632 = vpop.permute.xlu0 %2631
      %v2633 = vsel %vm500, %v2628, %v2630
      %v2634 = vsel %vm500, %v2630, %v2632
      %v2636 = vsel %vm1385, %v2624, 0
      %v2639 = vsel %vm1389, %v2633, 0
      %v2642 = vsel %vm1389, %v2634, 0
      %2644 = vmatprep.subr.bf16.mxu0 %v2642
      %2645 = vmatpush1.bf16.msra.mxu0 %v2639
      %2646 = vmatprep.subr.bf16.mxu0 0
      %2647 = vmatpush1.bf16.msra.mxu0 0
      %2648 = vmatprep.subr.bf16.mxu0 0
      %2649 = vmatpush1.bf16.msra.mxu0 0
      %2650 = vmatprep.subr.bf16.mxu0 0
      %2651 = vmatpush1.bf16.msra.mxu0 0
      %2652 = vmatprep.subr.bf16.mxu0 0
      %2653 = vmatpush1.bf16.msra.mxu0 0
      %2654 = vmatprep.subr.bf16.mxu0 0
      %2655 = vmatpush1.bf16.msra.mxu0 0
      %2656 = vmatprep.subr.bf16.mxu0 0
      %2657 = vmatpush1.bf16.msra.mxu0 0
      %2658 = vmatprep.subr.bf16.mxu0 0
      %2659 = vmatpush1.bf16.msra.mxu0 0
      %2660 = vmatprep.subr.bf16.mxu0 0
      %2661 = vmatpush1.bf16.msra.mxu0 0
      %2662 = vmatprep.subr.bf16.mxu0 0
      %2663 = vmatpush1.bf16.msra.mxu0 0
      %2664 = vmatprep.subr.bf16.mxu0 0
      %2665 = vmatpush1.bf16.msra.mxu0 0
      %2666 = vmatprep.subr.bf16.mxu0 0
      %2667 = vmatpush1.bf16.msra.mxu0 0
      %2668 = vmatprep.subr.bf16.mxu0 0
      %2669 = vmatpush1.bf16.msra.mxu0 0
      %2670 = vmatprep.subr.bf16.mxu0 0
      %2671 = vmatpush1.bf16.msra.mxu0 0
      %2672 = vmatprep.subr.bf16.mxu0 0
      %2673 = vmatpush1.bf16.msra.mxu0 0
      %2674 = vmatprep.subr.bf16.mxu0 0
      %2675 = vmatpush1.bf16.msra.mxu0 0
      %2676 = vmatprep.mubr.bf16.mxu0 0
      %2677 = vmatmul.mubr.bf16.gmra.mrb[0].mxu0 %v2636
      %v2678 = vpop.f32.mrb[0].mxu0
      %v2679 = vadd.f32 0.0, %v2678
      %v2680 = vpop.f32.mrb[0].mxu0
      %v2681 = vadd.f32 0.0, %v2680
      %v2682 = vpop.f32.mrb[0].mxu0
      %v2683 = vpop.f32.mrb[0].mxu0
      %2684 = vdwg.mxu0
      %v2686 = vsel %vm1385, %v2622, 0
      %v2689 = vsel %vm1389, %v2620, 0
      %v2692 = vsel %vm1389, %v2621, 0
      %2694 = vmatprep.subr.bf16.mxu0 %v2692
      %2695 = vmatpush1.bf16.msra.mxu0 %v2689
      %2696 = vmatprep.subr.bf16.mxu0 0
      %2697 = vmatpush1.bf16.msra.mxu0 0
      %2698 = vmatprep.subr.bf16.mxu0 0
      %2699 = vmatpush1.bf16.msra.mxu0 0
      %2700 = vmatprep.subr.bf16.mxu0 0
      %2701 = vmatpush1.bf16.msra.mxu0 0
      %2702 = vmatprep.subr.bf16.mxu0 0
      %2703 = vmatpush1.bf16.msra.mxu0 0
      %2704 = vmatprep.subr.bf16.mxu0 0
      %2705 = vmatpush1.bf16.msra.mxu0 0
      %2706 = vmatprep.subr.bf16.mxu0 0
      %2707 = vmatpush1.bf16.msra.mxu0 0
      %2708 = vmatprep.subr.bf16.mxu0 0
      %2709 = vmatpush1.bf16.msra.mxu0 0
      %2710 = vmatprep.subr.bf16.mxu0 0
      %2711 = vmatpush1.bf16.msra.mxu0 0
      %2712 = vmatprep.subr.bf16.mxu0 0
      %2713 = vmatpush1.bf16.msra.mxu0 0
      %2714 = vmatprep.subr.bf16.mxu0 0
      %2715 = vmatpush1.bf16.msra.mxu0 0
      %2716 = vmatprep.subr.bf16.mxu0 0
      %2717 = vmatpush1.bf16.msra.mxu0 0
      %2718 = vmatprep.subr.bf16.mxu0 0
      %2719 = vmatpush1.bf16.msra.mxu0 0
      %2720 = vmatprep.subr.bf16.mxu0 0
      %2721 = vmatpush1.bf16.msra.mxu0 0
      %2722 = vmatprep.subr.bf16.mxu0 0
      %2723 = vmatpush1.bf16.msra.mxu0 0
      %2724 = vmatprep.subr.bf16.mxu0 0
      %2725 = vmatpush1.bf16.msra.mxu0 0
      %2726 = vmatprep.mubr.bf16.mxu0 0
      %2727 = vmatmul.mubr.bf16.gmra.mrb[0].mxu0 %v2686
      %v2728 = vpop.f32.mrb[0].mxu0
      %v2729 = vadd.f32 %v2679, %v2728
      %v2730 = vpop.f32.mrb[0].mxu0
      %v2731 = vadd.f32 %v2681, %v2730
      %v2732 = vpop.f32.mrb[0].mxu0
      %v2733 = vpop.f32.mrb[0].mxu0
      %2734 = vdwg.mxu0
      %v2735 = vsel %vm627, %v2615, 0
      %v2736 = vsel %vm628, %v2612, 0
      %v2737 = vsel %vm629, %v2618, 0
      %s2738 = scalar_lea.vmem %s6, 8
      %v2739 = vld [vmem:[%s2738] sm:$0xf]
      %2743 = vrot.lane.b32.xlu0 %v2735, 126
      %v2744 = vpop.permute.xlu0 %2743
      %2745 = vrot.lane.b32.xlu0 %v2736, 126
      %v2746 = vpop.permute.xlu0 %2745
      %2747 = vrot.lane.b32.xlu0 %v2737, 126
      %v2748 = vpop.permute.xlu0 %2747
      %v2749 = vsel %vm644, %v2744, %v2746
      %v2750 = vsel %vm644, %v2746, %v2748
      %v2752 = vsel %vm1385, %v2739, 0
      %v2755 = vsel %vm1389, %v2749, 0
      %v2758 = vsel %vm1389, %v2750, 0
      %2760 = vmatprep.subr.bf16.mxu0 %v2758
      %2761 = vmatpush1.bf16.msra.mxu0 %v2755
      %2762 = vmatprep.subr.bf16.mxu0 0
      %2763 = vmatpush1.bf16.msra.mxu0 0
      %2764 = vmatprep.subr.bf16.mxu0 0
      %2765 = vmatpush1.bf16.msra.mxu0 0
      %2766 = vmatprep.subr.bf16.mxu0 0
      %2767 = vmatpush1.bf16.msra.mxu0 0
      %2768 = vmatprep.subr.bf16.mxu0 0
      %2769 = vmatpush1.bf16.msra.mxu0 0
      %2770 = vmatprep.subr.bf16.mxu0 0
      %2771 = vmatpush1.bf16.msra.mxu0 0
      %2772 = vmatprep.subr.bf16.mxu0 0
      %2773 = vmatpush1.bf16.msra.mxu0 0
      %2774 = vmatprep.subr.bf16.mxu0 0
      %2775 = vmatpush1.bf16.msra.mxu0 0
      %2776 = vmatprep.subr.bf16.mxu0 0
      %2777 = vmatpush1.bf16.msra.mxu0 0
      %2778 = vmatprep.subr.bf16.mxu0 0
      %2779 = vmatpush1.bf16.msra.mxu0 0
      %2780 = vmatprep.subr.bf16.mxu0 0
      %2781 = vmatpush1.bf16.msra.mxu0 0
      %2782 = vmatprep.subr.bf16.mxu0 0
      %2783 = vmatpush1.bf16.msra.mxu0 0
      %2784 = vmatprep.subr.bf16.mxu0 0
      %2785 = vmatpush1.bf16.msra.mxu0 0
      %2786 = vmatprep.subr.bf16.mxu0 0
      %2787 = vmatpush1.bf16.msra.mxu0 0
      %2788 = vmatprep.subr.bf16.mxu0 0
      %2789 = vmatpush1.bf16.msra.mxu0 0
      %2790 = vmatprep.subr.bf16.mxu0 0
      %2791 = vmatpush1.bf16.msra.mxu0 0
      %2792 = vmatprep.mubr.bf16.mxu0 0
      %2793 = vmatmul.mubr.bf16.gmra.mrb[0].mxu0 %v2752
      %v2794 = vpop.f32.mrb[0].mxu0
      %v2795 = vadd.f32 0.0, %v2794
      %v2796 = vpop.f32.mrb[0].mxu0
      %v2797 = vadd.f32 0.0, %v2796
      %v2798 = vpop.f32.mrb[0].mxu0
      %v2799 = vpop.f32.mrb[0].mxu0
      %2800 = vdwg.mxu0
      %v2801 = vadd.f32 %v2729, %v2795
      %v2802 = vadd.f32 %v2731, %v2797
      %v2803 = vsel %vm705, %v2615, 0
      %v2804 = vsel %vm706, %v2612, 0
      %v2805 = vsel %vm707, %v2618, 0
      %s2806 = scalar_lea.vmem %s6, 12
      %v2807 = vld [vmem:[%s2806] sm:$0xf]
      %2811 = vrot.lane.b32.xlu0 %v2803, 112
      %v2812 = vpop.permute.xlu0 %2811
      %2813 = vrot.lane.b32.xlu0 %v2804, 112
      %v2814 = vpop.permute.xlu0 %2813
      %2815 = vrot.lane.b32.xlu0 %v2805, 112
      %v2816 = vpop.permute.xlu0 %2815
      %v2817 = vsel %vm722, %v2812, %v2814
      %v2818 = vsel %vm722, %v2814, %v2816
      %v2820 = vsel %vm1385, %v2807, 0
      %v2823 = vsel %vm1389, %v2817, 0
      %v2826 = vsel %vm1389, %v2818, 0
      %2828 = vmatprep.subr.bf16.mxu0 %v2826
      %2829 = vmatpush1.bf16.msra.mxu0 %v2823
      %2830 = vmatprep.subr.bf16.mxu0 0
      %2831 = vmatpush1.bf16.msra.mxu0 0
      %2832 = vmatprep.subr.bf16.mxu0 0
      %2833 = vmatpush1.bf16.msra.mxu0 0
      %2834 = vmatprep.subr.bf16.mxu0 0
      %2835 = vmatpush1.bf16.msra.mxu0 0
      %2836 = vmatprep.subr.bf16.mxu0 0
      %2837 = vmatpush1.bf16.msra.mxu0 0
      %2838 = vmatprep.subr.bf16.mxu0 0
      %2839 = vmatpush1.bf16.msra.mxu0 0
      %2840 = vmatprep.subr.bf16.mxu0 0
      %2841 = vmatpush1.bf16.msra.mxu0 0
      %2842 = vmatprep.subr.bf16.mxu0 0
      %2843 = vmatpush1.bf16.msra.mxu0 0
      %2844 = vmatprep.subr.bf16.mxu0 0
      %2845 = vmatpush1.bf16.msra.mxu0 0
      %2846 = vmatprep.subr.bf16.mxu0 0
      %2847 = vmatpush1.bf16.msra.mxu0 0
      %2848 = vmatprep.subr.bf16.mxu0 0
      %2849 = vmatpush1.bf16.msra.mxu0 0
      %2850 = vmatprep.subr.bf16.mxu0 0
      %2851 = vmatpush1.bf16.msra.mxu0 0
      %2852 = vmatprep.subr.bf16.mxu0 0
      %2853 = vmatpush1.bf16.msra.mxu0 0
      %2854 = vmatprep.subr.bf16.mxu0 0
      %2855 = vmatpush1.bf16.msra.mxu0 0
      %2856 = vmatprep.subr.bf16.mxu0 0
      %2857 = vmatpush1.bf16.msra.mxu0 0
      %2858 = vmatprep.subr.bf16.mxu0 0
      %2859 = vmatpush1.bf16.msra.mxu0 0
      %2860 = vmatprep.mubr.bf16.mxu0 0
      %2861 = vmatmul.mubr.bf16.gmra.mrb[0].mxu0 %v2820
      %v2862 = vpop.f32.mrb[0].mxu0
      %v2863 = vadd.f32 0.0, %v2862
      %v2864 = vpop.f32.mrb[0].mxu0
      %v2865 = vadd.f32 0.0, %v2864
      %v2866 = vpop.f32.mrb[0].mxu0
      %v2867 = vpop.f32.mrb[0].mxu0
      %2868 = vdwg.mxu0
      %v2869 = vadd.f32 %v2801, %v2863
      %v2870 = vadd.f32 %v2802, %v2865
      %s2871 = scalar_lea.vmem %s6, 16
      %v2872 = vld [vmem:[%s2871] sm:$0xf]
      %2873 = vrot.lane.b32.xlu0 %v2615, 111
      %v2874 = vpop.permute.xlu0 %2873
      %2875 = vrot.lane.b32.xlu0 %v2612, 111
      %v2876 = vpop.permute.xlu0 %2875
      %2877 = vrot.lane.b32.xlu0 %v2618, 111
      %v2878 = vpop.permute.xlu0 %2877
      %v2879 = vsel %vm785, %v2874, %v2876
      %v2880 = vsel %vm785, %v2876, %v2878
      %v2882 = vsel %vm1385, %v2872, 0
      %v2885 = vsel %vm1389, %v2879, 0
      %v2888 = vsel %vm1389, %v2880, 0
      %2890 = vmatprep.subr.bf16.mxu0 %v2888
      %2891 = vmatpush1.bf16.msra.mxu0 %v2885
      %2892 = vmatprep.subr.bf16.mxu0 0
      %2893 = vmatpush1.bf16.msra.mxu0 0
      %2894 = vmatprep.subr.bf16.mxu0 0
      %2895 = vmatpush1.bf16.msra.mxu0 0
      %2896 = vmatprep.subr.bf16.mxu0 0
      %2897 = vmatpush1.bf16.msra.mxu0 0
      %2898 = vmatprep.subr.bf16.mxu0 0
      %2899 = vmatpush1.bf16.msra.mxu0 0
      %2900 = vmatprep.subr.bf16.mxu0 0
      %2901 = vmatpush1.bf16.msra.mxu0 0
      %2902 = vmatprep.subr.bf16.mxu0 0
      %2903 = vmatpush1.bf16.msra.mxu0 0
      %2904 = vmatprep.subr.bf16.mxu0 0
      %2905 = vmatpush1.bf16.msra.mxu0 0
      %2906 = vmatprep.subr.bf16.mxu0 0
      %2907 = vmatpush1.bf16.msra.mxu0 0
      %2908 = vmatprep.subr.bf16.mxu0 0
      %2909 = vmatpush1.bf16.msra.mxu0 0
      %2910 = vmatprep.subr.bf16.mxu0 0
      %2911 = vmatpush1.bf16.msra.mxu0 0
      %2912 = vmatprep.subr.bf16.mxu0 0
      %2913 = vmatpush1.bf16.msra.mxu0 0
      %2914 = vmatprep.subr.bf16.mxu0 0
      %2915 = vmatpush1.bf16.msra.mxu0 0
      %2916 = vmatprep.subr.bf16.mxu0 0
      %2917 = vmatpush1.bf16.msra.mxu0 0
      %2918 = vmatprep.subr.bf16.mxu0 0
      %2919 = vmatpush1.bf16.msra.mxu0 0
      %2920 = vmatprep.subr.bf16.mxu0 0
      %2921 = vmatpush1.bf16.msra.mxu0 0
      %2922 = vmatprep.mubr.bf16.mxu0 0
      %2923 = vmatmul.mubr.bf16.gmra.mrb[0].mxu0 %v2882
      %v2924 = vpop.f32.mrb[0].mxu0
      %v2925 = vadd.f32 0.0, %v2924
      %v2926 = vpop.f32.mrb[0].mxu0
      %v2927 = vadd.f32 0.0, %v2926
      %v2928 = vpop.f32.mrb[0].mxu0
      %v2929 = vpop.f32.mrb[0].mxu0
      %2930 = vdwg.mxu0
      %v2931 = vadd.f32 %v2869, %v2925
      %v2932 = vadd.f32 %v2870, %v2927
      %v2933 = vsel %vm846, %v2615, 0
      %v2934 = vsel %vm847, %v2612, 0
      %v2935 = vsel %vm848, %v2618, 0
      %s2936 = scalar_lea.vmem %s6, 20
      %v2937 = vld [vmem:[%s2936] sm:$0xf]
      %2941 = vrot.lane.b32.xlu0 %v2933, 110
      %v2942 = vpop.permute.xlu0 %2941
      %2943 = vrot.lane.b32.xlu0 %v2934, 110
      %v2944 = vpop.permute.xlu0 %2943
      %2945 = vrot.lane.b32.xlu0 %v2935, 110
      %v2946 = vpop.permute.xlu0 %2945
      %v2947 = vsel %vm863, %v2942, %v2944
      %v2948 = vsel %vm863, %v2944, %v2946
      %v2950 = vsel %vm1385, %v2937, 0
      %v2953 = vsel %vm1389, %v2947, 0
      %v2956 = vsel %vm1389, %v2948, 0
      %2958 = vmatprep.subr.bf16.mxu0 %v2956
      %2959 = vmatpush1.bf16.msra.mxu0 %v2953
      %2960 = vmatprep.subr.bf16.mxu0 0
      %2961 = vmatpush1.bf16.msra.mxu0 0
      %2962 = vmatprep.subr.bf16.mxu0 0
      %2963 = vmatpush1.bf16.msra.mxu0 0
      %2964 = vmatprep.subr.bf16.mxu0 0
      %2965 = vmatpush1.bf16.msra.mxu0 0
      %2966 = vmatprep.subr.bf16.mxu0 0
      %2967 = vmatpush1.bf16.msra.mxu0 0
      %2968 = vmatprep.subr.bf16.mxu0 0
      %2969 = vmatpush1.bf16.msra.mxu0 0
      %2970 = vmatprep.subr.bf16.mxu0 0
      %2971 = vmatpush1.bf16.msra.mxu0 0
      %2972 = vmatprep.subr.bf16.mxu0 0
      %2973 = vmatpush1.bf16.msra.mxu0 0
      %2974 = vmatprep.subr.bf16.mxu0 0
      %2975 = vmatpush1.bf16.msra.mxu0 0
      %2976 = vmatprep.subr.bf16.mxu0 0
      %2977 = vmatpush1.bf16.msra.mxu0 0
      %2978 = vmatprep.subr.bf16.mxu0 0
      %2979 = vmatpush1.bf16.msra.mxu0 0
      %2980 = vmatprep.subr.bf16.mxu0 0
      %2981 = vmatpush1.bf16.msra.mxu0 0
      %2982 = vmatprep.subr.bf16.mxu0 0
      %2983 = vmatpush1.bf16.msra.mxu0 0
      %2984 = vmatprep.subr.bf16.mxu0 0
      %2985 = vmatpush1.bf16.msra.mxu0 0
      %2986 = vmatprep.subr.bf16.mxu0 0
      %2987 = vmatpush1.bf16.msra.mxu0 0
      %2988 = vmatprep.subr.bf16.mxu0 0
      %2989 = vmatpush1.bf16.msra.mxu0 0
      %2990 = vmatprep.mubr.bf16.mxu0 0
      %2991 = vmatmul.mubr.bf16.gmra.mrb[0].mxu0 %v2950
      %v2992 = vpop.f32.mrb[0].mxu0
      %v2993 = vadd.f32 0.0, %v2992
      %v2994 = vpop.f32.mrb[0].mxu0
      %v2995 = vadd.f32 0.0, %v2994
      %v2996 = vpop.f32.mrb[0].mxu0
      %v2997 = vpop.f32.mrb[0].mxu0
      %2998 = vdwg.mxu0
      %v2999 = vadd.f32 %v2931, %v2993
      %v3000 = vadd.f32 %v2932, %v2995
      %v3001 = vsel %vm924, %v2615, 0
      %v3002 = vsel %vm925, %v2612, 0
      %v3003 = vsel %vm926, %v2618, 0
      %s3004 = scalar_lea.vmem %s6, 24
      %v3005 = vld [vmem:[%s3004] sm:$0xf]
      %3009 = vrot.lane.b32.xlu0 %v3001, 96
      %v3010 = vpop.permute.xlu0 %3009
      %3011 = vrot.lane.b32.xlu0 %v3002, 96
      %v3012 = vpop.permute.xlu0 %3011
      %3013 = vrot.lane.b32.xlu0 %v3003, 96
      %v3014 = vpop.permute.xlu0 %3013
      %v3015 = vsel %vm941, %v3010, %v3012
      %v3016 = vsel %vm941, %v3012, %v3014
      %v3018 = vsel %vm1385, %v3005, 0
      %v3021 = vsel %vm1389, %v3015, 0
      %v3024 = vsel %vm1389, %v3016, 0
      %3026 = vmatprep.subr.bf16.mxu0 %v3024
      %3027 = vmatpush1.bf16.msra.mxu0 %v3021
      %3028 = vmatprep.subr.bf16.mxu0 0
      %3029 = vmatpush1.bf16.msra.mxu0 0
      %3030 = vmatprep.subr.bf16.mxu0 0
      %3031 = vmatpush1.bf16.msra.mxu0 0
      %3032 = vmatprep.subr.bf16.mxu0 0
      %3033 = vmatpush1.bf16.msra.mxu0 0
      %3034 = vmatprep.subr.bf16.mxu0 0
      %3035 = vmatpush1.bf16.msra.mxu0 0
      %3036 = vmatprep.subr.bf16.mxu0 0
      %3037 = vmatpush1.bf16.msra.mxu0 0
      %3038 = vmatprep.subr.bf16.mxu0 0
      %3039 = vmatpush1.bf16.msra.mxu0 0
      %3040 = vmatprep.subr.bf16.mxu0 0
      %3041 = vmatpush1.bf16.msra.mxu0 0
      %3042 = vmatprep.subr.bf16.mxu0 0
      %3043 = vmatpush1.bf16.msra.mxu0 0
      %3044 = vmatprep.subr.bf16.mxu0 0
      %3045 = vmatpush1.bf16.msra.mxu0 0
      %3046 = vmatprep.subr.bf16.mxu0 0
      %3047 = vmatpush1.bf16.msra.mxu0 0
      %3048 = vmatprep.subr.bf16.mxu0 0
      %3049 = vmatpush1.bf16.msra.mxu0 0
      %3050 = vmatprep.subr.bf16.mxu0 0
      %3051 = vmatpush1.bf16.msra.mxu0 0
      %3052 = vmatprep.subr.bf16.mxu0 0
      %3053 = vmatpush1.bf16.msra.mxu0 0
      %3054 = vmatprep.subr.bf16.mxu0 0
      %3055 = vmatpush1.bf16.msra.mxu0 0
      %3056 = vmatprep.subr.bf16.mxu0 0
      %3057 = vmatpush1.bf16.msra.mxu0 0
      %3058 = vmatprep.mubr.bf16.mxu0 0
      %3059 = vmatmul.mubr.bf16.gmra.mrb[0].mxu0 %v3018
      %v3060 = vpop.f32.mrb[0].mxu0
      %v3061 = vadd.f32 0.0, %v3060
      %v3062 = vpop.f32.mrb[0].mxu0
      %v3063 = vadd.f32 0.0, %v3062
      %v3064 = vpop.f32.mrb[0].mxu0
      %v3065 = vpop.f32.mrb[0].mxu0
      %3066 = vdwg.mxu0
      %v3067 = vadd.f32 %v2999, %v3061
      %v3068 = vadd.f32 %v3000, %v3063
      %s3069 = scalar_lea.vmem %s6, 28
      %v3070 = vld [vmem:[%s3069] sm:$0xf]
      %3071 = vrot.lane.b32.xlu0 %v2615, 95
      %v3072 = vpop.permute.xlu0 %3071
      %3073 = vrot.lane.b32.xlu0 %v2612, 95
      %v3074 = vpop.permute.xlu0 %3073
      %3075 = vrot.lane.b32.xlu0 %v2618, 95
      %v3076 = vpop.permute.xlu0 %3075
      %v3077 = vsel %vm1004, %v3072, %v3074
      %v3078 = vsel %vm1004, %v3074, %v3076
      %v3080 = vsel %vm1385, %v3070, 0
      %v3083 = vsel %vm1389, %v3077, 0
      %v3086 = vsel %vm1389, %v3078, 0
      %3088 = vmatprep.subr.bf16.mxu0 %v3086
      %3089 = vmatpush1.bf16.msra.mxu0 %v3083
      %3090 = vmatprep.subr.bf16.mxu0 0
      %3091 = vmatpush1.bf16.msra.mxu0 0
      %3092 = vmatprep.subr.bf16.mxu0 0
      %3093 = vmatpush1.bf16.msra.mxu0 0
      %3094 = vmatprep.subr.bf16.mxu0 0
      %3095 = vmatpush1.bf16.msra.mxu0 0
      %3096 = vmatprep.subr.bf16.mxu0 0
      %3097 = vmatpush1.bf16.msra.mxu0 0
      %3098 = vmatprep.subr.bf16.mxu0 0
      %3099 = vmatpush1.bf16.msra.mxu0 0
      %3100 = vmatprep.subr.bf16.mxu0 0
      %3101 = vmatpush1.bf16.msra.mxu0 0
      %3102 = vmatprep.subr.bf16.mxu0 0
      %3103 = vmatpush1.bf16.msra.mxu0 0
      %3104 = vmatprep.subr.bf16.mxu0 0
      %3105 = vmatpush1.bf16.msra.mxu0 0
      %3106 = vmatprep.subr.bf16.mxu0 0
      %3107 = vmatpush1.bf16.msra.mxu0 0
      %3108 = vmatprep.subr.bf16.mxu0 0
      %3109 = vmatpush1.bf16.msra.mxu0 0
      %3110 = vmatprep.subr.bf16.mxu0 0
      %3111 = vmatpush1.bf16.msra.mxu0 0
      %3112 = vmatprep.subr.bf16.mxu0 0
      %3113 = vmatpush1.bf16.msra.mxu0 0
      %3114 = vmatprep.subr.bf16.mxu0 0
      %3115 = vmatpush1.bf16.msra.mxu0 0
      %3116 = vmatprep.subr.bf16.mxu0 0
      %3117 = vmatpush1.bf16.msra.mxu0 0
      %3118 = vmatprep.subr.bf16.mxu0 0
      %3119 = vmatpush1.bf16.msra.mxu0 0
      %3120 = vmatprep.mubr.bf16.mxu0 0
      %3121 = vmatmul.mubr.bf16.gmra.mrb[0].mxu0 %v3080
      %v3122 = vpop.f32.mrb[0].mxu0
      %v3123 = vadd.f32 0.0, %v3122
      %v3124 = vpop.f32.mrb[0].mxu0
      %v3125 = vadd.f32 0.0, %v3124
      %v3126 = vpop.f32.mrb[0].mxu0
      %v3127 = vpop.f32.mrb[0].mxu0
      %3128 = vdwg.mxu0
      %v3129 = vadd.f32 %v3067, %v3123
      %v3130 = vadd.f32 %v3068, %v3125
      %v3131 = vsel %vm1065, %v2615, 0
      %v3132 = vsel %vm1066, %v2612, 0
      %v3133 = vsel %vm1067, %v2618, 0
      %s3134 = scalar_lea.vmem %s6, 32
      %v3135 = vld [vmem:[%s3134] sm:$0xf]
      %3139 = vrot.lane.b32.xlu0 %v3131, 94
      %v3140 = vpop.permute.xlu0 %3139
      %3141 = vrot.lane.b32.xlu0 %v3132, 94
      %v3142 = vpop.permute.xlu0 %3141
      %3143 = vrot.lane.b32.xlu0 %v3133, 94
      %v3144 = vpop.permute.xlu0 %3143
      %v3145 = vsel %vm1082, %v3140, %v3142
      %v3146 = vsel %vm1082, %v3142, %v3144
      %v3148 = vsel %vm1385, %v3135, 0
      %v3151 = vsel %vm1389, %v3145, 0
      %v3154 = vsel %vm1389, %v3146, 0
      %3156 = vmatprep.subr.bf16.mxu0 %v3154
      %3157 = vmatpush1.bf16.msra.mxu0 %v3151
      %3158 = vmatprep.subr.bf16.mxu0 0
      %3159 = vmatpush1.bf16.msra.mxu0 0
      %3160 = vmatprep.subr.bf16.mxu0 0
      %3161 = vmatpush1.bf16.msra.mxu0 0
      %3162 = vmatprep.subr.bf16.mxu0 0
      %3163 = vmatpush1.bf16.msra.mxu0 0
      %3164 = vmatprep.subr.bf16.mxu0 0
      %3165 = vmatpush1.bf16.msra.mxu0 0
      %3166 = vmatprep.subr.bf16.mxu0 0
      %3167 = vmatpush1.bf16.msra.mxu0 0
      %3168 = vmatprep.subr.bf16.mxu0 0
      %3169 = vmatpush1.bf16.msra.mxu0 0
      %3170 = vmatprep.subr.bf16.mxu0 0
      %3171 = vmatpush1.bf16.msra.mxu0 0
      %3172 = vmatprep.subr.bf16.mxu0 0
      %3173 = vmatpush1.bf16.msra.mxu0 0
      %3174 = vmatprep.subr.bf16.mxu0 0
      %3175 = vmatpush1.bf16.msra.mxu0 0
      %3176 = vmatprep.subr.bf16.mxu0 0
      %3177 = vmatpush1.bf16.msra.mxu0 0
      %3178 = vmatprep.subr.bf16.mxu0 0
      %3179 = vmatpush1.bf16.msra.mxu0 0
      %3180 = vmatprep.subr.bf16.mxu0 0
      %3181 = vmatpush1.bf16.msra.mxu0 0
      %3182 = vmatprep.subr.bf16.mxu0 0
      %3183 = vmatpush1.bf16.msra.mxu0 0
      %3184 = vmatprep.subr.bf16.mxu0 0
      %3185 = vmatpush1.bf16.msra.mxu0 0
      %3186 = vmatprep.subr.bf16.mxu0 0
      %3187 = vmatpush1.bf16.msra.mxu0 0
      %3188 = vmatprep.mubr.bf16.mxu0 0
      %3189 = vmatmul.mubr.bf16.gmra.mrb[0].mxu0 %v3148
      %v3190 = vpop.f32.mrb[0].mxu0
      %v3191 = vadd.f32 0.0, %v3190
      %v3192 = vpop.f32.mrb[0].mxu0
      %v3193 = vadd.f32 0.0, %v3192
      %v3194 = vpop.f32.mrb[0].mxu0
      %v3195 = vpop.f32.mrb[0].mxu0
      %3196 = vdwg.mxu0
      %v3197 = vadd.f32 %v3129, %v3191
      %v3198 = vadd.f32 %v3130, %v3193
      %v3199 = vadd.f32 %v2606, %v3197
      %v3200 = vadd.f32 %v2607, %v3198
      %v3201 = vld [vmem:[%s7] sm:$0xff]
      %3203 = vset.pattern.permute.xlu0 0
      %3204 = vperm.xlu0 %3203, %v3201
      %v3205 = vpop.permute.xlu0 %3204
      %v3207 = vadd.f32 %v3199, %v3205
      %v3208 = vadd.f32 %v3200, %v3205
      %v3209 = vmax.f32 %v3207, 0.0
      %v3210 = vmax.f32 %v3208, 0.0
      %v3211 = vpack.c.bf16 %v3209, %v3209
      %v3212 = vpack.c.bf16 %v3210, %v3210
      %v3213 = vld [vmem:[%s8] sm:$0x3]
      %v3214 = vld [vmem:[%s9] sm:$0x7]
      %3216 = vset.pattern.permute.xlu0 0
      %3217 = vperm.xlu0 %3216, %v3214
      %v3218 = vpop.permute.xlu0 %3217
      %v3221 = vsel %vm1385, %v3213, 0
      %v3224 = vsel %vm1389, %v3211, 0
      %v3227 = vsel %vm1389, %v3212, 0
      %3229 = vmatprep.subr.bf16.mxu0 %v3227
      %3230 = vmatpush1.bf16.msra.mxu0 %v3224
      %3231 = vmatprep.subr.bf16.mxu0 0
      %3232 = vmatpush1.bf16.msra.mxu0 0
      %3233 = vmatprep.subr.bf16.mxu0 0
      %3234 = vmatpush1.bf16.msra.mxu0 0
      %3235 = vmatprep.subr.bf16.mxu0 0
      %3236 = vmatpush1.bf16.msra.mxu0 0
      %3237 = vmatprep.subr.bf16.mxu0 0
      %3238 = vmatpush1.bf16.msra.mxu0 0
      %3239 = vmatprep.subr.bf16.mxu0 0
      %3240 = vmatpush1.bf16.msra.mxu0 0
      %3241 = vmatprep.subr.bf16.mxu0 0
      %3242 = vmatpush1.bf16.msra.mxu0 0
      %3243 = vmatprep.subr.bf16.mxu0 0
      %3244 = vmatpush1.bf16.msra.mxu0 0
      %3245 = vmatprep.subr.bf16.mxu0 0
      %3246 = vmatpush1.bf16.msra.mxu0 0
      %3247 = vmatprep.subr.bf16.mxu0 0
      %3248 = vmatpush1.bf16.msra.mxu0 0
      %3249 = vmatprep.subr.bf16.mxu0 0
      %3250 = vmatpush1.bf16.msra.mxu0 0
      %3251 = vmatprep.subr.bf16.mxu0 0
      %3252 = vmatpush1.bf16.msra.mxu0 0
      %3253 = vmatprep.subr.bf16.mxu0 0
      %3254 = vmatpush1.bf16.msra.mxu0 0
      %3255 = vmatprep.subr.bf16.mxu0 0
      %3256 = vmatpush1.bf16.msra.mxu0 0
      %3257 = vmatprep.subr.bf16.mxu0 0
      %3258 = vmatpush1.bf16.msra.mxu0 0
      %3259 = vmatprep.subr.bf16.mxu0 0
      %3260 = vmatpush1.bf16.msra.mxu0 0
      %3261 = vmatprep.mubr.bf16.mxu0 0
      %3262 = vmatmul.mubr.bf16.gmra.mrb[0].mxu0 %v3221
      %v3263 = vpop.f32.mrb[0].mxu0
      %v3264 = vadd.f32 %v3218, %v3263
      %v3265 = vpop.f32.mrb[0].mxu0
      %v3266 = vadd.f32 %v3218, %v3265
      %v3267 = vpop.f32.mrb[0].mxu0
      %v3268 = vpop.f32.mrb[0].mxu0
      %3269 = vdwg.mxu0
      %v3272 = vcombine.low %v3264, %v3266
      %3274 = vst [vmem:[%s413] sm:$0x77] %v3272
      %p3275 = scmp.lt.s32.totalorder %s23, 1
      %s3276 = scalar_select %p3275, %s23, 1
      %s3277 = smul.addr %s3276, 2
      %s3278 = smul.addr %s3277, 4
      %s3279 = scalar_lea.vmem %s12, %s3278
      // Predicated region
      $region69: #{custom_model_forward.1} parent=67 // pred_check
        %p3280 = pneg %p298
      $region70: #{custom_model_forward.1} parent=67 // pred_check_branch
        %3282 = sbr.rel (%p3280) target = $region72
      $region71: #{custom_model_forward.1} parent=67 // pred_region
        _
      $region72: #{custom_model_forward.1} parent=67 // pred_fallthru
        _
    $region68: #{custom_model_forward.1} parent=5 // pred_fallthru
      _
    %p3283 = scmp.le.s32.totalorder 2, %s18
    // Predicated region
    $region73: #{custom_model_forward.1} parent=5 // pred_check
      %p3284 = pneg %p3283
    $region74: #{custom_model_forward.1} parent=5 // pred_check_branch
      %3286 = sbr.rel (%p3284) target = $region76
    $region75: #{custom_model_forward.1} parent=5 // pred_region
      %s3287 = ssub.s32 %s18, 2
      // Predicated region
      $region77: #{custom_model_forward.1} parent=75 // pred_check
        %p3288 = pneg %p304
      $region78: #{custom_model_forward.1} parent=75 // pred_check_branch
        %3290 = sbr.rel (%p3288) target = $region80
      $region79: #{custom_model_forward.1} parent=75 // pred_region
        %p3291 = scmp.lt.s32.totalorder %s24, 1
        %s3292 = scalar_select %p3291, %s24, 1
        %s3293 = smul.addr %s3292, 2
        %s3294 = smul.addr %s3293, 4
        %s3295 = scalar_lea.vmem %s12, %s3294
      $region80: #{custom_model_forward.1} parent=75 // pred_fallthru
        _
    $region76: #{custom_model_forward.1} parent=5 // pred_fallthru
      _
  $region6: #{custom_model_forward.1} parent=0 // loop_footer
    %s22 = sadd.s32 1, %s18
  $region7: #{custom_model_forward.1} parent=0 // loop_footer_branch
    %17 = sbr.rel target = $region3
  $region8: #{custom_model_forward.1} parent=0 // loop_exit
    _

</llo_original>
